<compile_context>
chip_gen: v7x
topology: tpu7x:2x2x1
jax: 0.10.0
libtpu: 0.0.40
codegen_flags: <defaults>
</compile_context>

<pallas_src>
import functools

import jax
import jax.numpy as jnp
from jax import lax
from jax.experimental import pallas as pl
from jax.experimental.pallas import tpu as pltpu


# ---------------------------------------------------------------------------
# Fused kernel: one grid step == one (batch, row-block) tile.
# ---------------------------------------------------------------------------
def _basic_block_kernel(x_ref, xp_ref, xn_ref, w1_ref, b1_ref, w2_ref, b2_ref,
                        o_ref, col1_ref, col2_ref, *, R, W, Cp):
    """x_ref   : (1, R, W, Cp)   centre rows of the input (storage dtype)
       xp_ref  : (1, 2, W, Cp)   two rows above the tile (clamped at image top)
       xn_ref  : (1, 2, W, Cp)   two rows below the tile (clamped at bottom)
       wX_ref  : (3, 3*Cp, Cp)   per-dy weights, K = (kx, Cin) stacked, BN folded
       bX_ref  : (1, Cp)         folded BN bias (f32)
       o_ref   : (1, R, W, Cp)   output rows (storage dtype)
       col1_ref: ((R+4)*W, 3*Cp) dx-im2col of input rows incl. 2-row halo
       col2_ref: ((R+2)*W, 3*Cp) dx-im2col of the conv1 activation (VMEM only)
    """
    t, nt = pl.program_id(1), pl.num_programs(1)
    cdt = col1_ref.dtype
    n1 = (R + 4) * W            # input rows incl. halo
    n2 = (R + 2) * W            # conv1 output rows (1-row halo for conv2)
    n3 = R * W                  # conv2 / output rows

    # Column-boundary masks for the dx = +/-1 blocks, hoisted and shared by
    # both convs (column pattern is row % W for every flattened buffer).
    ww = lax.broadcasted_iota(jnp.int32, (n1, 1), 0) % W
    mask_l = ww >= 1            # dx = -1 valid
    mask_r = ww <= W - 2        # dx = +1 valid

    def shift_rows(v, d):
        # out[r] = v[r + d], zero filled (d in {-1,+1}); the row-crossing
        # elements are killed by the column masks above.
        z = jnp.zeros((1, v.shape[1]), v.dtype)
        if d == 1:
            return jnp.concatenate([v[1:], z], axis=0)
        return jnp.concatenate([z, v[:-1]], axis=0)

    def build_col(col_ref, src, ml, mr):
        # K layout per dy row: [dx=-1 | dx=0 | dx=+1], each Cp channels wide.
        col_ref[:, Cp:2 * Cp] = src
        col_ref[:, 0:Cp] = jnp.where(ml, shift_rows(src, -1), 0)
        col_ref[:, 2 * Cp:3 * Cp] = jnp.where(mr, shift_rows(src, +1), 0)

    def conv(col_ref, w_ref, b_ref, n_out):
        # 3 lane-dense MXU passes with K = 3*Cp; the dy shifts are
        # sublane-aligned row-offset loads from the im2col scratch.
        acc = jnp.zeros((n_out, Cp), jnp.float32)
        for ky in range(3):
            acc += jnp.dot(col_ref[pl.ds(ky * W, n_out), :], w_ref[ky],
                           preferred_element_type=jnp.float32)
        return acc + b_ref[...]

    # ---- conv1: im2col of (halo + centre) input rows ----------------------
    xe = jnp.concatenate([xp_ref[0].reshape(2 * W, Cp),
                          x_ref[0].reshape(n3, Cp),
                          xn_ref[0].reshape(2 * W, Cp)], axis=0)
    build_col(col1_ref, xe, mask_l, mask_r)

    # Halo rows that fall outside the image act as conv zero padding.
    @pl.when(t == 0)
    def _():
        col1_ref[0:2 * W, :] = jnp.zeros((2 * W, 3 * Cp), cdt)

    @pl.when(t == nt - 1)
    def _():
        col1_ref[(R + 2) * W:(R + 4) * W, :] = jnp.zeros((2 * W, 3 * Cp), cdt)

    # conv1 -> BN1 (scale folded into w1) -> ReLU; cast to storage dtype once.
    h1 = jnp.maximum(conv(col1_ref, w1_ref, b1_ref, n2), 0.0).astype(cdt)

    # ---- conv2: im2col of the conv1 activation (1-row halo each side) -----
    build_col(col2_ref, h1, mask_l[:n2], mask_r[:n2])

    # conv1 rows recomputed outside the image must be zero for conv2 padding.
    @pl.when(t == 0)
    def _():
        col2_ref[0:W, :] = jnp.zeros((W, 3 * Cp), cdt)

    @pl.when(t == nt - 1)
    def _():
        col2_ref[(R + 1) * W:(R + 2) * W, :] = jnp.zeros((W, 3 * Cp), cdt)

    # conv2 -> BN2 -> residual add (f32), then store in the storage dtype.
    out = conv(col2_ref, w2_ref, b2_ref, n3)
    out = out + x_ref[0].reshape(n3, Cp).astype(jnp.float32)
    o_ref[0] = out.reshape(R, W, Cp).astype(o_ref.dtype)


def _pick_row_block(H, W, Cp, itemsize, scratch_budget=10 << 20):
    """Largest even divisor R of H whose im2col scratch fits the budget;
    prefer >= 2 row tiles so the pipeline has depth and megacore has work."""
    def scratch_bytes(r):
        return ((r + 4) + (r + 2)) * W * 3 * Cp * itemsize

    divisors = [d for d in range(2, H + 1, 2) if H % d == 0]
    if not divisors:
        return H
    fitting = [d for d in divisors if scratch_bytes(d) <= scratch_budget] or [divisors[0]]
    tiled = [d for d in fitting if H // d >= 2]
    return max(tiled) if tiled else max(fitting)


# ---------------------------------------------------------------------------
# Wrapper: NCHW in / NCHW out, like the PyTorch module.
# ---------------------------------------------------------------------------
def basic_block_forward(x_nchw, params, *, compute_dtype=jnp.bfloat16):
    N, C, H, W = x_nchw.shape
    if W % 8 != 0 or H % 2 != 0:
        raise ValueError(f"Kernel requires W % 8 == 0 and even H (got H={H}, W={W}); "
                         "pad spatially or route to the XLA conv path.")
    # TODO(synk): only stride=1 / downsample=None is implemented (the config
    # exercised by this block); stride=2 + downsample needs a strided out map.
    cdt = jnp.dtype(compute_dtype)
    Cp = max(128, -(-C // 128) * 128)       # lane-dense channel count
    # TODO(synk): at C << 128 the lane padding wastes MXU/HBM (16x at C=8);
    # small-C layers should use plain XLA conv or repack columns into lanes.

    x = jnp.transpose(x_nchw, (0, 2, 3, 1))                       # NCHW->NHWC
    x = jnp.pad(x, ((0, 0), (0, 0), (0, 0), (0, Cp - C))).astype(cdt)
    # TODO(synk): in a real network keep activations NHWC/channel-padded across
    # layers so this transpose/pad HBM round trip disappears.

    def prep(w_oihw, scale, bias):
        # OIHW -> (ky, kx, Cin, Cout), fold BN scale into the f32 weights,
        # pad channels to Cp, stack (kx, Cin) along K -> (3, 3*Cp, Cp).
        w = jnp.transpose(w_oihw, (2, 3, 1, 0)).astype(jnp.float32)
        w = w * scale[None, None, None, :]
        ci, co = w.shape[2], w.shape[3]
        w = jnp.pad(w, ((0, 0), (0, 0), (0, Cp - ci), (0, Cp - co)))
        w = w.reshape(3, 3 * Cp, Cp).astype(cdt)
        b = jnp.pad(bias, (0, Cp - co)).reshape(1, Cp).astype(jnp.float32)
        return w, b

    w1, b1 = prep(params["w1_oihw"], params["s1"], params["b1"])
    w2, b2 = prep(params["w2_oihw"], params["s2"], params["b2"])

    R = _pick_row_block(H, W, Cp, cdt.itemsize)
    T = H // R
    H2 = H // 2                                # halo blocks are 2 rows tall

    kernel = functools.partial(_basic_block_kernel, R=R, W=W, Cp=Cp)

    # Derive the VMEM budget from the actual buffers (double-buffered I/O,
    # resident weights, im2col scratch) instead of the 32 MiB scoped default;
    # cap at 64 MiB so the same limit is safe on v7x.
    io = (2 * (R * W * Cp + 2 * 2 * W * Cp) + 2 * R * W * Cp) * cdt.itemsize
    wts = 2 * 2 * 9 * Cp * Cp * cdt.itemsize + 2 * 2 * Cp * 4
    scr = ((R + 4) + (R + 2)) * W * 3 * Cp * cdt.itemsize
    vmem_limit = int(min(max(2 * (io + wts + scr), 16 << 20), 64 << 20))

    out = pl.pallas_call(
        kernel,
        out_shape=jax.ShapeDtypeStruct((N, H, W, Cp), cdt),
        grid=(N, T),
        in_specs=[
            # centre rows of the tile
            pl.BlockSpec((1, R, W, Cp), lambda n, t: (n, t, 0, 0)),
            # 2-row halo above (block index clamped; masked in-kernel at t==0)
            pl.BlockSpec((1, 2, W, Cp),
                         lambda n, t: (n, jnp.maximum(t * (R // 2) - 1, 0), 0, 0)),
            # 2-row halo below (clamped; masked in-kernel at t==T-1)
            pl.BlockSpec((1, 2, W, Cp),
                         lambda n, t: (n, jnp.minimum((t + 1) * (R // 2), H2 - 1), 0, 0)),
            pl.BlockSpec((3, 3 * Cp, Cp), lambda n, t: (0, 0, 0)),
            pl.BlockSpec((1, Cp), lambda n, t: (0, 0)),
            pl.BlockSpec((3, 3 * Cp, Cp), lambda n, t: (0, 0, 0)),
            pl.BlockSpec((1, Cp), lambda n, t: (0, 0)),
        ],
        out_specs=pl.BlockSpec((1, R, W, Cp), lambda n, t: (n, t, 0, 0)),
        scratch_shapes=[pltpu.VMEM(((R + 4) * W, 3 * Cp), cdt),
                        pltpu.VMEM(((R + 2) * W, 3 * Cp), cdt)],
        compiler_params=pltpu.CompilerParams(
            dimension_semantics=("parallel", "parallel"),
            vmem_limit_bytes=vmem_limit),
    )(x, x, x, w1, b1, w2, b2)

    out = out[..., :C]                               # drop channel padding
    return jnp.transpose(out, (0, 3, 1, 2))          # NHWC -> NCHW


# ---------------------------------------------------------------------------
# Deterministic parameter setup (BN folded into scale/bias) and pure-JAX ref.
# ---------------------------------------------------------------------------
def make_params(key, inplanes, planes):
    eps = 1e-5
    ks = jax.random.split(key, 10)

    def bn_fold(kg, kb, km, kv, c):
        gamma = 1.0 + 0.1 * jax.random.normal(kg, (c,), jnp.float32)
        beta = 0.1 * jax.random.normal(kb, (c,), jnp.float32)
        mean = 0.1 * jax.random.normal(km, (c,), jnp.float32)
        var = jnp.abs(jax.random.normal(kv, (c,), jnp.float32)) + 0.5
        scale = gamma / jnp.sqrt(var + eps)
        bias = beta - mean * scale
        return scale, bias

    w1 = 0.1 * jax.random.normal(ks[0], (planes, inplanes, 3, 3), jnp.float32)  # OIHW
    w2 = 0.1 * jax.random.normal(ks[1], (planes, planes, 3, 3), jnp.float32)
    s1, b1 = bn_fold(ks[2], ks[3], ks[4], ks[5], planes)
    s2, b2 = bn_fold(ks[6], ks[7], ks[8], ks[9], planes)

    return {"w1_oihw": w1, "w2_oihw": w2, "s1": s1, "b1": b1, "s2": s2, "b2": b2}


def reference_forward(x_nchw, params):
    def convbn(x, w_oihw, scale, bias):
        y = lax.conv_general_dilated(
            x, w_oihw, window_strides=(1, 1), padding=[(1, 1), (1, 1)],
            dimension_numbers=("NCHW", "OIHW", "NCHW"))
        return y * scale[None, :, None, None] + bias[None, :, None, None]

    out = jax.nn.relu(convbn(x_nchw, params["w1_oihw"], params["s1"], params["b1"]))
    out = convbn(out, params["w2_oihw"], params["s2"], params["b2"])
    return out + x_nchw


if __name__ == "__main__":
    # BasicBlock(inplanes=8, planes=8, stride=1, downsample=None, pad=1, dilation=1)
    N, C, H, W = 2, 8, 16, 16
    key = jax.random.PRNGKey(0)
    kx, kp = jax.random.split(key)

    x = jax.random.normal(kx, (N, C, H, W), jnp.float32)   # NCHW, like PyTorch
    params = make_params(kp, inplanes=C, planes=C)

    ref = jax.block_until_ready(reference_forward(x, params))

    fwd = jax.jit(basic_block_forward, static_argnames=("compute_dtype",))

    # Default path: bf16 storage + bf16 MXU (f32 accumulation); loose check
    # (bf16 rounding of x / weights / h1 / output only).
    out = jax.block_until_ready(fwd(x, params))
    assert out.shape == (N, C, H, W)
    err_bf16 = float(jnp.max(jnp.abs(out.astype(jnp.float32) - ref)))
    assert err_bf16 < 1.5e-1, f"bf16 max abs err = {err_bf16}"

    # f32 path: strict check against the f32 XLA reference.
    out_f32 = jax.block_until_ready(fwd(x, params, compute_dtype=jnp.float32))
    err_f32 = float(jnp.max(jnp.abs(out_f32 - ref)))
    assert jnp.allclose(out_f32, ref, atol=1e-3, rtol=1e-3), f"f32 max abs err = {err_f32}"

    print("KERNEL_OK")
</pallas_src>

<mosaic_0001>
module attributes {stable_mosaic.version = 11 : i64} {
  func.func @_basic_block_kernel(%arg0: i32, %arg1: i32, %arg2: memref<1x8x16x128xbf16, #tpu.memory_space<vmem>>, %arg3: memref<1x2x16x128xbf16, #tpu.memory_space<vmem>>, %arg4: memref<1x2x16x128xbf16, #tpu.memory_space<vmem>>, %arg5: memref<3x384x128xbf16, #tpu.memory_space<vmem>>, %arg6: memref<1x128xf32, #tpu.memory_space<vmem>>, %arg7: memref<3x384x128xbf16, #tpu.memory_space<vmem>>, %arg8: memref<1x128xf32, #tpu.memory_space<vmem>>, %arg9: memref<1x8x16x128xbf16, #tpu.memory_space<vmem>>, %arg10: memref<192x384xbf16, #tpu.memory_space<vmem>>, %arg11: memref<160x384xbf16, #tpu.memory_space<vmem>>) attributes {dimension_semantics = [#tpu.dimension_semantics<parallel>, #tpu.dimension_semantics<parallel>], iteration_bounds = array<i64: 2, 2>, scalar_prefetch = 0 : i64, scratch_operands = 2 : i64, tpu.core_type = #tpu.core_type<tc>, window_params = [{transform_indices = @transform_0, window_bounds = array<i64: 1, 8, 16, 128>}, {transform_indices = @transform_1, window_bounds = array<i64: 1, 2, 16, 128>}, {transform_indices = @transform_2, window_bounds = array<i64: 1, 2, 16, 128>}, {pipeline_mode = #tpu.pipeline_mode<synchronous>, transform_indices = @transform_3, window_bounds = array<i64: 3, 384, 128>}, {pipeline_mode = #tpu.pipeline_mode<synchronous>, transform_indices = @transform_4, window_bounds = array<i64: 1, 128>}, {pipeline_mode = #tpu.pipeline_mode<synchronous>, transform_indices = @transform_5, window_bounds = array<i64: 3, 384, 128>}, {pipeline_mode = #tpu.pipeline_mode<synchronous>, transform_indices = @transform_6, window_bounds = array<i64: 1, 128>}, {transform_indices = @transform_7, window_bounds = array<i64: 1, 8, 16, 128>}]} {
    %0 = tpu.iota {dimensions = array<i32: 0>} : vector<192x1xi32>
    %c16_i32 = arith.constant 16 : i32
    %c0_i32 = arith.constant 0 : i32
    %1 = arith.cmpi eq, %c16_i32, %c0_i32 : i32
    %c1_i32 = arith.constant 1 : i32
    %2 = arith.select %1, %c1_i32, %c16_i32 : i32
    %3 = vector.broadcast %2 : i32 to vector<192x1xi32>
    %4 = arith.remsi %0, %3 : vector<192x1xi32>
    %c0_i32_0 = arith.constant 0 : i32
    %5 = vector.broadcast %c0_i32_0 : i32 to vector<192x1xi32>
    %6 = arith.cmpi ne, %4, %5 : vector<192x1xi32>
    %c0_i32_1 = arith.constant 0 : i32
    %7 = vector.broadcast %c0_i32_1 : i32 to vector<192x1xi32>
    %8 = arith.cmpi slt, %4, %7 : vector<192x1xi32>
    %c0_i32_2 = arith.constant 0 : i32
    %9 = arith.cmpi slt, %2, %c0_i32_2 : i32
    %10 = vector.broadcast %9 : i1 to vector<192x1xi1>
    %11 = vector.broadcast %10 : vector<192x1xi1> to vector<192x1xi1>
    %12 = arith.xori %8, %11 : vector<192x1xi1>
    %13 = arith.andi %12, %6 : vector<192x1xi1>
    %14 = vector.broadcast %2 : i32 to vector<192x1xi32>
    %15 = arith.addi %4, %14 : vector<192x1xi32>
    %16 = arith.select %13, %15, %4 : vector<192x1xi1>, vector<192x1xi32>
    %c1_i32_3 = arith.constant 1 : i32
    %17 = vector.broadcast %c1_i32_3 : i32 to vector<192x1xi32>
    %18 = arith.cmpi sge, %16, %17 : vector<192x1xi32>
    %c14_i32 = arith.constant 14 : i32
    %19 = vector.broadcast %c14_i32 : i32 to vector<192x1xi32>
    %20 = arith.cmpi sle, %16, %19 : vector<192x1xi32>
    %c0 = arith.constant 0 : index
    %c0_4 = arith.constant 0 : index
    %c0_5 = arith.constant 0 : index
    %c0_6 = arith.constant 0 : index
    %21 = vector.load %arg3[%c0, %c0_4, %c0_5, %c0_6] : memref<1x2x16x128xbf16, #tpu.memory_space<vmem>>, vector<1x2x16x128xbf16>
    %22 = vector.shape_cast %21 : vector<1x2x16x128xbf16> to vector<2x16x128xbf16>
    %23 = vector.shape_cast %22 : vector<2x16x128xbf16> to vector<32x128xbf16>
    %c0_7 = arith.constant 0 : index
    %c0_8 = arith.constant 0 : index
    %c0_9 = arith.constant 0 : index
    %c0_10 = arith.constant 0 : index
    %24 = vector.load %arg2[%c0_7, %c0_8, %c0_9, %c0_10] : memref<1x8x16x128xbf16, #tpu.memory_space<vmem>>, vector<1x8x16x128xbf16>
    %25 = vector.shape_cast %24 : vector<1x8x16x128xbf16> to vector<8x16x128xbf16>
    %26 = vector.shape_cast %25 : vector<8x16x128xbf16> to vector<128x128xbf16>
    %c0_11 = arith.constant 0 : index
    %c0_12 = arith.constant 0 : index
    %c0_13 = arith.constant 0 : index
    %c0_14 = arith.constant 0 : index
    %27 = vector.load %arg4[%c0_11, %c0_12, %c0_13, %c0_14] : memref<1x2x16x128xbf16, #tpu.memory_space<vmem>>, vector<1x2x16x128xbf16>
    %28 = vector.shape_cast %27 : vector<1x2x16x128xbf16> to vector<2x16x128xbf16>
    %29 = vector.shape_cast %28 : vector<2x16x128xbf16> to vector<32x128xbf16>
    %30 = tpu.concatenate %23, %26, %29 in 0 : vector<32x128xbf16>, vector<128x128xbf16>, vector<32x128xbf16> -> vector<192x128xbf16>
    %c0_15 = arith.constant 0 : index
    %c128 = arith.constant 128 : index
    %31 = vector.load %arg10[%c0_15, %c128] : memref<192x384xbf16, #tpu.memory_space<vmem>>, vector<192x128xbf16>
    tpu.vector_store %arg10[%c0_15, %c128], %30 {strides = array<i32>} : memref<192x384xbf16, #tpu.memory_space<vmem>>, vector<192x128xbf16>,
    %cst = arith.constant 0.000000e+00 : bf16
    %32 = vector.broadcast %cst : bf16 to vector<1x128xbf16>
    %33 = vector.extract_strided_slice %30 {offsets = [0, 0], sizes = [191, 128], strides = [1, 1]} : vector<192x128xbf16> to vector<191x128xbf16>
    %34 = tpu.concatenate %32, %33 in 0 : vector<1x128xbf16>, vector<191x128xbf16> -> vector<192x128xbf16>
    %c0_i32_16 = arith.constant 0 : i32
    %35 = arith.sitofp %c0_i32_16 : i32 to bf16
    %36 = vector.shape_cast %18 : vector<192x1xi1> to vector<192x1xi1>
    %37 = vector.broadcast %36 : vector<192x1xi1> to vector<192x128xi1>
    %38 = vector.broadcast %35 : bf16 to vector<192x128xbf16>
    %39 = arith.select %37, %34, %38 : vector<192x128xi1>, vector<192x128xbf16>
    %c0_17 = arith.constant 0 : index
    %c0_18 = arith.constant 0 : index
    %40 = vector.load %arg10[%c0_17, %c0_18] : memref<192x384xbf16, #tpu.memory_space<vmem>>, vector<192x128xbf16>
    tpu.vector_store %arg10[%c0_17, %c0_18], %39 {strides = array<i32>} : memref<192x384xbf16, #tpu.memory_space<vmem>>, vector<192x128xbf16>,
    %cst_19 = arith.constant 0.000000e+00 : bf16
    %41 = vector.broadcast %cst_19 : bf16 to vector<1x128xbf16>
    %42 = vector.extract_strided_slice %30 {offsets = [1, 0], sizes = [191, 128], strides = [1, 1]} : vector<192x128xbf16> to vector<191x128xbf16>
    %43 = tpu.concatenate %42, %41 in 0 : vector<191x128xbf16>, vector<1x128xbf16> -> vector<192x128xbf16>
    %c0_i32_20 = arith.constant 0 : i32
    %44 = arith.sitofp %c0_i32_20 : i32 to bf16
    %45 = vector.shape_cast %20 : vector<192x1xi1> to vector<192x1xi1>
    %46 = vector.broadcast %45 : vector<192x1xi1> to vector<192x128xi1>
    %47 = vector.broadcast %44 : bf16 to vector<192x128xbf16>
    %48 = arith.select %46, %43, %47 : vector<192x128xi1>, vector<192x128xbf16>
    %c0_21 = arith.constant 0 : index
    %c256 = arith.constant 256 : index
    %49 = vector.load %arg10[%c0_21, %c256] : memref<192x384xbf16, #tpu.memory_space<vmem>>, vector<192x128xbf16>
    tpu.vector_store %arg10[%c0_21, %c256], %48 {strides = array<i32>} : memref<192x384xbf16, #tpu.memory_space<vmem>>, vector<192x128xbf16>,
    %c0_i32_22 = arith.constant 0 : i32
    %50 = arith.cmpi eq, %arg1, %c0_i32_22 : i32
    %51 = arith.extui %50 : i1 to i32
    %c0_i32_23 = arith.constant 0 : i32
    %52 = arith.cmpi ne, %51, %c0_i32_23 : i32
    scf.if %52 {
      %cst_87 = arith.constant 0.000000e+00 : bf16
      %134 = vector.broadcast %cst_87 : bf16 to vector<32x384xbf16>
      %c0_88 = arith.constant 0 : index
      %c0_89 = arith.constant 0 : index
      %135 = vector.load %arg10[%c0_88, %c0_89] : memref<192x384xbf16, #tpu.memory_space<vmem>>, vector<32x384xbf16>
      tpu.vector_store %arg10[%c0_88, %c0_89], %134 {strides = array<i32>} : memref<192x384xbf16, #tpu.memory_space<vmem>>, vector<32x384xbf16>,
    } else {
    }
    %c1_i32_24 = arith.constant 1 : i32
    %53 = arith.cmpi eq, %arg1, %c1_i32_24 : i32
    %54 = arith.extui %53 : i1 to i32
    %c0_i32_25 = arith.constant 0 : i32
    %55 = arith.cmpi ne, %54, %c0_i32_25 : i32
    scf.if %55 {
      %cst_87 = arith.constant 0.000000e+00 : bf16
      %134 = vector.broadcast %cst_87 : bf16 to vector<32x384xbf16>
      %c160 = arith.constant 160 : index
      %c0_88 = arith.constant 0 : index
      %135 = vector.load %arg10[%c160, %c0_88] : memref<192x384xbf16, #tpu.memory_space<vmem>>, vector<32x384xbf16>
      tpu.vector_store %arg10[%c160, %c0_88], %134 {strides = array<i32>} : memref<192x384xbf16, #tpu.memory_space<vmem>>, vector<32x384xbf16>,
    } else {
    }
    %cst_26 = arith.constant 0.000000e+00 : f32
    %56 = vector.broadcast %cst_26 : f32 to vector<160x128xf32>
    %c0_27 = arith.constant 0 : index
    %c0_28 = arith.constant 0 : index
    %57 = vector.load %arg10[%c0_27, %c0_28] : memref<192x384xbf16, #tpu.memory_space<vmem>>, vector<160x384xbf16>
    %c0_29 = arith.constant 0 : index
    %c0_30 = arith.constant 0 : index
    %c0_31 = arith.constant 0 : index
    %58 = vector.load %arg5[%c0_29, %c0_30, %c0_31] : memref<3x384x128xbf16, #tpu.memory_space<vmem>>, vector<1x384x128xbf16>
    %59 = vector.shape_cast %58 : vector<1x384x128xbf16> to vector<384x128xbf16>
    %cst_32 = arith.constant dense<0.000000e+00> : vector<160x128xf32>
    %60 = tpu.matmul %57, %59, %cst_32 {dimension_numbers = #tpu.dot_dimension_numbers<[1], [0], [0], [1], [0, 0, 1, 1], [], []>} : vector<160x384xbf16>, vector<384x128xbf16>, vector<160x128xf32> -> vector<160x128xf32>
    %61 = arith.addf %56, %60 : vector<160x128xf32>
    %c16 = arith.constant 16 : index
    %c0_33 = arith.constant 0 : index
    %62 = vector.load %arg10[%c16, %c0_33] : memref<192x384xbf16, #tpu.memory_space<vmem>>, vector<160x384xbf16>
    %c1 = arith.constant 1 : index
    %c0_34 = arith.constant 0 : index
    %c0_35 = arith.constant 0 : index
    %63 = vector.load %arg5[%c1, %c0_34, %c0_35] : memref<3x384x128xbf16, #tpu.memory_space<vmem>>, vector<1x384x128xbf16>
    %64 = vector.shape_cast %63 : vector<1x384x128xbf16> to vector<384x128xbf16>
    %cst_36 = arith.constant dense<0.000000e+00> : vector<160x128xf32>
    %65 = tpu.matmul %62, %64, %cst_36 {dimension_numbers = #tpu.dot_dimension_numbers<[1], [0], [0], [1], [0, 0, 1, 1], [], []>} : vector<160x384xbf16>, vector<384x128xbf16>, vector<160x128xf32> -> vector<160x128xf32>
    %66 = arith.addf %61, %65 : vector<160x128xf32>
    %c32 = arith.constant 32 : index
    %c0_37 = arith.constant 0 : index
    %67 = vector.load %arg10[%c32, %c0_37] : memref<192x384xbf16, #tpu.memory_space<vmem>>, vector<160x384xbf16>
    %c2 = arith.constant 2 : index
    %c0_38 = arith.constant 0 : index
    %c0_39 = arith.constant 0 : index
    %68 = vector.load %arg5[%c2, %c0_38, %c0_39] : memref<3x384x128xbf16, #tpu.memory_space<vmem>>, vector<1x384x128xbf16>
    %69 = vector.shape_cast %68 : vector<1x384x128xbf16> to vector<384x128xbf16>
    %cst_40 = arith.constant dense<0.000000e+00> : vector<160x128xf32>
    %70 = tpu.matmul %67, %69, %cst_40 {dimension_numbers = #tpu.dot_dimension_numbers<[1], [0], [0], [1], [0, 0, 1, 1], [], []>} : vector<160x384xbf16>, vector<384x128xbf16>, vector<160x128xf32> -> vector<160x128xf32>
    %71 = arith.addf %66, %70 : vector<160x128xf32>
    %c0_41 = arith.constant 0 : index
    %c0_42 = arith.constant 0 : index
    %72 = vector.load %arg6[%c0_41, %c0_42] : memref<1x128xf32, #tpu.memory_space<vmem>>, vector<1x128xf32>
    %73 = vector.broadcast %72 : vector<1x128xf32> to vector<160x128xf32>
    %74 = arith.addf %71, %73 : vector<160x128xf32>
    %cst_43 = arith.constant 0.000000e+00 : f32
    %75 = vector.broadcast %cst_43 : f32 to vector<160x128xf32>
    %76 = arith.maximumf %74, %75 : vector<160x128xf32>
    %77 = arith.truncf %76 : vector<160x128xf32> to vector<160x128xbf16>
    %78 = vector.extract_strided_slice %18 {offsets = [0, 0], sizes = [160, 1], strides = [1, 1]} : vector<192x1xi1> to vector<160x1xi1>
    %79 = vector.extract_strided_slice %20 {offsets = [0, 0], sizes = [160, 1], strides = [1, 1]} : vector<192x1xi1> to vector<160x1xi1>
    %c0_44 = arith.constant 0 : index
    %c128_45 = arith.constant 128 : index
    %80 = vector.load %arg11[%c0_44, %c128_45] : memref<160x384xbf16, #tpu.memory_space<vmem>>, vector<160x128xbf16>
    tpu.vector_store %arg11[%c0_44, %c128_45], %77 {strides = array<i32>} : memref<160x384xbf16, #tpu.memory_space<vmem>>, vector<160x128xbf16>,
    %cst_46 = arith.constant 0.000000e+00 : bf16
    %81 = vector.broadcast %cst_46 : bf16 to vector<1x128xbf16>
    %82 = vector.extract_strided_slice %77 {offsets = [0, 0], sizes = [159, 128], strides = [1, 1]} : vector<160x128xbf16> to vector<159x128xbf16>
    %83 = tpu.concatenate %81, %82 in 0 : vector<1x128xbf16>, vector<159x128xbf16> -> vector<160x128xbf16>
    %c0_i32_47 = arith.constant 0 : i32
    %84 = arith.sitofp %c0_i32_47 : i32 to bf16
    %85 = vector.shape_cast %78 : vector<160x1xi1> to vector<160x1xi1>
    %86 = vector.broadcast %85 : vector<160x1xi1> to vector<160x128xi1>
    %87 = vector.broadcast %84 : bf16 to vector<160x128xbf16>
    %88 = arith.select %86, %83, %87 : vector<160x128xi1>, vector<160x128xbf16>
    %c0_48 = arith.constant 0 : index
    %c0_49 = arith.constant 0 : index
    %89 = vector.load %arg11[%c0_48, %c0_49] : memref<160x384xbf16, #tpu.memory_space<vmem>>, vector<160x128xbf16>
    tpu.vector_store %arg11[%c0_48, %c0_49], %88 {strides = array<i32>} : memref<160x384xbf16, #tpu.memory_space<vmem>>, vector<160x128xbf16>,
    %cst_50 = arith.constant 0.000000e+00 : bf16
    %90 = vector.broadcast %cst_50 : bf16 to vector<1x128xbf16>
    %91 = vector.extract_strided_slice %77 {offsets = [1, 0], sizes = [159, 128], strides = [1, 1]} : vector<160x128xbf16> to vector<159x128xbf16>
    %92 = tpu.concatenate %91, %90 in 0 : vector<159x128xbf16>, vector<1x128xbf16> -> vector<160x128xbf16>
    %c0_i32_51 = arith.constant 0 : i32
    %93 = arith.sitofp %c0_i32_51 : i32 to bf16
    %94 = vector.shape_cast %79 : vector<160x1xi1> to vector<160x1xi1>
    %95 = vector.broadcast %94 : vector<160x1xi1> to vector<160x128xi1>
    %96 = vector.broadcast %93 : bf16 to vector<160x128xbf16>
    %97 = arith.select %95, %92, %96 : vector<160x128xi1>, vector<160x128xbf16>
    %c0_52 = arith.constant 0 : index
    %c256_53 = arith.constant 256 : index
    %98 = vector.load %arg11[%c0_52, %c256_53] : memref<160x384xbf16, #tpu.memory_space<vmem>>, vector<160x128xbf16>
    tpu.vector_store %arg11[%c0_52, %c256_53], %97 {strides = array<i32>} : memref<160x384xbf16, #tpu.memory_space<vmem>>, vector<160x128xbf16>,
    %c0_i32_54 = arith.constant 0 : i32
    %99 = arith.cmpi eq, %arg1, %c0_i32_54 : i32
    %100 = arith.extui %99 : i1 to i32
    %c0_i32_55 = arith.constant 0 : i32
    %101 = arith.cmpi ne, %100, %c0_i32_55 : i32
    scf.if %101 {
      %cst_87 = arith.constant 0.000000e+00 : bf16
      %134 = vector.broadcast %cst_87 : bf16 to vector<16x384xbf16>
      %c0_88 = arith.constant 0 : index
      %c0_89 = arith.constant 0 : index
      %135 = vector.load %arg11[%c0_88, %c0_89] : memref<160x384xbf16, #tpu.memory_space<vmem>>, vector<16x384xbf16>
      tpu.vector_store %arg11[%c0_88, %c0_89], %134 {strides = array<i32>} : memref<160x384xbf16, #tpu.memory_space<vmem>>, vector<16x384xbf16>,
    } else {
    }
    %c1_i32_56 = arith.constant 1 : i32
    %102 = arith.cmpi eq, %arg1, %c1_i32_56 : i32
    %103 = arith.extui %102 : i1 to i32
    %c0_i32_57 = arith.constant 0 : i32
    %104 = arith.cmpi ne, %103, %c0_i32_57 : i32
    scf.if %104 {
      %cst_87 = arith.constant 0.000000e+00 : bf16
      %134 = vector.broadcast %cst_87 : bf16 to vector<16x384xbf16>
      %c144 = arith.constant 144 : index
      %c0_88 = arith.constant 0 : index
      %135 = vector.load %arg11[%c144, %c0_88] : memref<160x384xbf16, #tpu.memory_space<vmem>>, vector<16x384xbf16>
      tpu.vector_store %arg11[%c144, %c0_88], %134 {strides = array<i32>} : memref<160x384xbf16, #tpu.memory_space<vmem>>, vector<16x384xbf16>,
    } else {
    }
    %cst_58 = arith.constant 0.000000e+00 : f32
    %105 = vector.broadcast %cst_58 : f32 to vector<128x128xf32>
    %c0_59 = arith.constant 0 : index
    %c0_60 = arith.constant 0 : index
    %106 = vector.load %arg11[%c0_59, %c0_60] : memref<160x384xbf16, #tpu.memory_space<vmem>>, vector<128x384xbf16>
    %c0_61 = arith.constant 0 : index
    %c0_62 = arith.constant 0 : index
    %c0_63 = arith.constant 0 : index
    %107 = vector.load %arg7[%c0_61, %c0_62, %c0_63] : memref<3x384x128xbf16, #tpu.memory_space<vmem>>, vector<1x384x128xbf16>
    %108 = vector.shape_cast %107 : vector<1x384x128xbf16> to vector<384x128xbf16>
    %cst_64 = arith.constant dense<0.000000e+00> : vector<128x128xf32>
    %109 = tpu.matmul %106, %108, %cst_64 {dimension_numbers = #tpu.dot_dimension_numbers<[1], [0], [0], [1], [0, 0, 1, 1], [], []>} : vector<128x384xbf16>, vector<384x128xbf16>, vector<128x128xf32> -> vector<128x128xf32>
    %110 = arith.addf %105, %109 : vector<128x128xf32>
    %c16_65 = arith.constant 16 : index
    %c0_66 = arith.constant 0 : index
    %111 = vector.load %arg11[%c16_65, %c0_66] : memref<160x384xbf16, #tpu.memory_space<vmem>>, vector<128x384xbf16>
    %c1_67 = arith.constant 1 : index
    %c0_68 = arith.constant 0 : index
    %c0_69 = arith.constant 0 : index
    %112 = vector.load %arg7[%c1_67, %c0_68, %c0_69] : memref<3x384x128xbf16, #tpu.memory_space<vmem>>, vector<1x384x128xbf16>
    %113 = vector.shape_cast %112 : vector<1x384x128xbf16> to vector<384x128xbf16>
    %cst_70 = arith.constant dense<0.000000e+00> : vector<128x128xf32>
    %114 = tpu.matmul %111, %113, %cst_70 {dimension_numbers = #tpu.dot_dimension_numbers<[1], [0], [0], [1], [0, 0, 1, 1], [], []>} : vector<128x384xbf16>, vector<384x128xbf16>, vector<128x128xf32> -> vector<128x128xf32>
    %115 = arith.addf %110, %114 : vector<128x128xf32>
    %c32_71 = arith.constant 32 : index
    %c0_72 = arith.constant 0 : index
    %116 = vector.load %arg11[%c32_71, %c0_72] : memref<160x384xbf16, #tpu.memory_space<vmem>>, vector<128x384xbf16>
    %c2_73 = arith.constant 2 : index
    %c0_74 = arith.constant 0 : index
    %c0_75 = arith.constant 0 : index
    %117 = vector.load %arg7[%c2_73, %c0_74, %c0_75] : memref<3x384x128xbf16, #tpu.memory_space<vmem>>, vector<1x384x128xbf16>
    %118 = vector.shape_cast %117 : vector<1x384x128xbf16> to vector<384x128xbf16>
    %cst_76 = arith.constant dense<0.000000e+00> : vector<128x128xf32>
    %119 = tpu.matmul %116, %118, %cst_76 {dimension_numbers = #tpu.dot_dimension_numbers<[1], [0], [0], [1], [0, 0, 1, 1], [], []>} : vector<128x384xbf16>, vector<384x128xbf16>, vector<128x128xf32> -> vector<128x128xf32>
    %120 = arith.addf %115, %119 : vector<128x128xf32>
    %c0_77 = arith.constant 0 : index
    %c0_78 = arith.constant 0 : index
    %121 = vector.load %arg8[%c0_77, %c0_78] : memref<1x128xf32, #tpu.memory_space<vmem>>, vector<1x128xf32>
    %122 = vector.broadcast %121 : vector<1x128xf32> to vector<128x128xf32>
    %123 = arith.addf %120, %122 : vector<128x128xf32>
    %c0_79 = arith.constant 0 : index
    %c0_80 = arith.constant 0 : index
    %c0_81 = arith.constant 0 : index
    %c0_82 = arith.constant 0 : index
    %124 = vector.load %arg2[%c0_79, %c0_80, %c0_81, %c0_82] : memref<1x8x16x128xbf16, #tpu.memory_space<vmem>>, vector<1x8x16x128xbf16>
    %125 = vector.shape_cast %124 : vector<1x8x16x128xbf16> to vector<8x16x128xbf16>
    %126 = vector.shape_cast %125 : vector<8x16x128xbf16> to vector<128x128xbf16>
    %127 = arith.extf %126 : vector<128x128xbf16> to vector<128x128xf32>
    %128 = arith.addf %123, %127 : vector<128x128xf32>
    %129 = vector.shape_cast %128 : vector<128x128xf32> to vector<8x16x128xf32>
    %130 = arith.truncf %129 : vector<8x16x128xf32> to vector<8x16x128xbf16>
    %c0_83 = arith.constant 0 : index
    %c0_84 = arith.constant 0 : index
    %c0_85 = arith.constant 0 : index
    %c0_86 = arith.constant 0 : index
    %131 = vector.load %arg9[%c0_83, %c0_84, %c0_85, %c0_86] : memref<1x8x16x128xbf16, #tpu.memory_space<vmem>>, vector<1x8x16x128xbf16>
    %132 = vector.shape_cast %131 : vector<1x8x16x128xbf16> to vector<8x16x128xbf16>
    %133 = vector.shape_cast %130 : vector<8x16x128xbf16> to vector<1x8x16x128xbf16>
    tpu.vector_store %arg9[%c0_83, %c0_84, %c0_85, %c0_86], %133 {strides = array<i32>} : memref<1x8x16x128xbf16, #tpu.memory_space<vmem>>, vector<1x8x16x128xbf16>,
    return
  }
  func.func @transform_0(%arg0: i32, %arg1: i32) -> (i32, i32, i32, i32) {
    %c0_i32 = arith.constant 0 : i32
    %c0_i32_0 = arith.constant 0 : i32
    %c0_i32_1 = arith.constant 0 : i32
    return %arg0, %arg1, %c0_i32, %c0_i32_0 : i32, i32, i32, i32
  }
  func.func @transform_1(%arg0: i32, %arg1: i32) -> (i32, i32, i32, i32) {
    %c4_i32 = arith.constant 4 : i32
    %0 = arith.muli %arg1, %c4_i32 : i32
    %c1_i32 = arith.constant 1 : i32
    %1 = arith.subi %0, %c1_i32 : i32
    %c0_i32 = arith.constant 0 : i32
    %2 = arith.maxsi %1, %c0_i32 : i32
    %c0_i32_0 = arith.constant 0 : i32
    %c0_i32_1 = arith.constant 0 : i32
    %c0_i32_2 = arith.constant 0 : i32
    return %arg0, %2, %c0_i32_0, %c0_i32_1 : i32, i32, i32, i32
  }
  func.func @transform_2(%arg0: i32, %arg1: i32) -> (i32, i32, i32, i32) {
    %c1_i32 = arith.constant 1 : i32
    %0 = arith.addi %arg1, %c1_i32 : i32
    %c4_i32 = arith.constant 4 : i32
    %1 = arith.muli %0, %c4_i32 : i32
    %c7_i32 = arith.constant 7 : i32
    %2 = arith.minsi %1, %c7_i32 : i32
    %c0_i32 = arith.constant 0 : i32
    %c0_i32_0 = arith.constant 0 : i32
    %c0_i32_1 = arith.constant 0 : i32
    return %arg0, %2, %c0_i32, %c0_i32_0 : i32, i32, i32, i32
  }
  func.func @transform_3(%arg0: i32, %arg1: i32) -> (i32, i32, i32) {
    %c0_i32 = arith.constant 0 : i32
    %c0_i32_0 = arith.constant 0 : i32
    %c0_i32_1 = arith.constant 0 : i32
    %c0_i32_2 = arith.constant 0 : i32
    return %c0_i32, %c0_i32_0, %c0_i32_1 : i32, i32, i32
  }
  func.func @transform_4(%arg0: i32, %arg1: i32) -> (i32, i32) {
    %c0_i32 = arith.constant 0 : i32
    %c0_i32_0 = arith.constant 0 : i32
    %c0_i32_1 = arith.constant 0 : i32
    return %c0_i32, %c0_i32_0 : i32, i32
  }
  func.func @transform_5(%arg0: i32, %arg1: i32) -> (i32, i32, i32) {
    %c0_i32 = arith.constant 0 : i32
    %c0_i32_0 = arith.constant 0 : i32
    %c0_i32_1 = arith.constant 0 : i32
    %c0_i32_2 = arith.constant 0 : i32
    return %c0_i32, %c0_i32_0, %c0_i32_1 : i32, i32, i32
  }
  func.func @transform_6(%arg0: i32, %arg1: i32) -> (i32, i32) {
    %c0_i32 = arith.constant 0 : i32
    %c0_i32_0 = arith.constant 0 : i32
    %c0_i32_1 = arith.constant 0 : i32
    return %c0_i32, %c0_i32_0 : i32, i32
  }
  func.func @transform_7(%arg0: i32, %arg1: i32) -> (i32, i32, i32, i32) {
    %c0_i32 = arith.constant 0 : i32
    %c0_i32_0 = arith.constant 0 : i32
    %c0_i32_1 = arith.constant 0 : i32
    return %arg0, %arg1, %c0_i32, %c0_i32_0 : i32, i32, i32, i32
  }
}

</mosaic_0001>

<llo_original>
// kernel: basic_block_forward.1
$region0: #{basic_block_forward.1}
  #allocation0 [shape = 'u32[]', space=smem, size = 0x4, offset = 0x4, fixed_abs, tag = 'smem constant byte address 0x4 - core index']
  #allocation1 [shape = 'u32[144,128]{1,0:T(1,128)}', space=vmem, size = 0x12000, scoped, tag = 'internal scratch']
  #allocation2 [shape = 'bf16[192,384]{1,0:T(16,128)(2,1)}', space=vmem, size = 0x24000, scoped, tag = 'scratch operand']
  #allocation3 [shape = 'bf16[160,384]{1,0:T(16,128)(2,1)}', space=vmem, size = 0x1e000, scoped, tag = 'scratch operand']
  %s0 = inlined_call_operand.vmem [shape: bf16[2,16,16,128], index: 0, kind: input, shape index: {}, may-alias: {0,1,2}]
  %s1 = inlined_call_operand.vmem [shape: bf16[2,16,16,128], index: 1, kind: input, shape index: {}, may-alias: {0,1,2}]
  %s2 = inlined_call_operand.vmem [shape: bf16[2,16,16,128], index: 2, kind: input, shape index: {}, may-alias: {0,1,2}]
  %s3 = inlined_call_operand.vmem [shape: bf16[3,384,128], index: 3, kind: input, shape index: {}]
  %s4 = inlined_call_operand.vmem [shape: f32[1,128], index: 4, kind: input, shape index: {}]
  %s5 = inlined_call_operand.vmem [shape: bf16[3,384,128], index: 5, kind: input, shape index: {}]
  %s6 = inlined_call_operand.vmem [shape: f32[1,128], index: 6, kind: input, shape index: {}]
  %s7 = inlined_call_operand.vmem [shape: bf16[2,16,16,128], index: 7, kind: output, shape index: {}]
  %s8 = sld [smem:[#allocation0]]
  $region77: #{basic_block_forward.1} parent=0
    _
  %s10 = ssub.s32 1, %s8
  %s11 = scalar_select 0, %s10, %s8
  loop: start=0, step=1, limit=6
  $region2: #{basic_block_forward.1} parent=0 // loop_pre_header
    _
  $region3: #{basic_block_forward.1} parent=0 // loop_header
    %s13 = sphi 0, %s17
    %p14 = scmp.ge.s32.totalorder %s13, 6
    %s20 = sphi 0, %s32
    %s21 = sphi 0, %s28
    %s22 = sphi 0, %s20
    %s23 = sphi 0, %s21
    %s24 = sphi 0, %s22
    %s25 = sphi 0, %s23
    %s37 = sphi 0, %s39
    %s40 = sphi 0, %s37
    %s41 = sphi 0, %s40
    %s57 = sphi 0, %s41
    %s73 = sphi 0, %s75
    %s76 = sphi 0, %s73
    %s77 = sphi 0, %s76
    %s93 = sphi 0, %s77
    %s109 = sphi 0, %s111
    %s112 = sphi 0, %s109
    %s113 = sphi 0, %s112
    %s129 = sphi 0, %s113
    %s133 = sphi 0, %s133
    %s135 = sphi 0, %s133
    %s136 = sphi 0, %s135
    %s150 = sphi 0, %s136
    %s154 = sphi 0, %s154
    %s156 = sphi 0, %s154
    %s157 = sphi 0, %s156
    %s171 = sphi 0, %s157
    %s175 = sphi 0, %s175
    %s177 = sphi 0, %s175
    %s178 = sphi 0, %s177
    %s192 = sphi 0, %s178
    %s196 = sphi 0, %s196
    %s198 = sphi 0, %s196
    %s199 = sphi 0, %s198
    %s213 = sphi 0, %s199
    %s221 = sphi 0, %s223
    %s224 = sphi 0, %s221
    %s225 = sphi 0, %s224
    %s241 = sphi 0, %s225
  $region4: #{basic_block_forward.1} parent=0 // loop_header_branch
    %16 = sbr.rel (%p14) target = $region8
  $region5: #{basic_block_forward.1} parent=0 // loop_body
    %s18 = ssub.s32 %s13, 1
    %s19 = ssub.s32 %s13, 2
    %s26 = sadd.s32 1, %s21
    %p27 = scmp.ge.s32.totalorder %s26, 2
    %s28 = scalar_select %p27, 0, %s26
    %s29 = sadd.s32 1, %s20
    %s30 = scalar_select %p27, %s29, %s20
    %p31 = scmp.ge.s32.totalorder %s30, 2
    %s32 = scalar_select %p31, 0, %s30
    %s33 = ssub.s32 %s20, %s32
    %s34 = ssub.s32 %s21, %s28
    %s35 = sor.u32 %s33, %s34
    %p36 = scmp.eq.s32.totalorder %s35, 0
    %s38 = sadd.s32 %s37, 1
    %s39 = scalar_select %p36, %s37, %s38
    %p42 = pneg %p36
    %p43 = scmp.eq.s32.totalorder %s13, 3
    %p44 = por %p42, %p43
    %p45 = scmp.ne.s32.totalorder %s37, %s40
    %p46 = scmp.eq.s32.totalorder %s13, 0
    %p47 = por %p45, %p46
    %p48 = scmp.ne.s32.totalorder %s37, %s40
    %p49 = scmp.eq.s32.totalorder %s18, 3
    %p50 = por %p48, %p49
    %p51 = scmp.ne.s32.totalorder %s40, %s41
    %p52 = scmp.eq.s32.totalorder %s18, 0
    %p53 = por %p51, %p52
    %p54 = scmp.ne.s32.totalorder %s40, %s41
    %p55 = scmp.eq.s32.totalorder %s19, 3
    %p56 = por %p54, %p55
    %p58 = scmp.ne.s32.totalorder %s41, %s57
    %p59 = scmp.eq.s32.totalorder %s19, 0
    %p60 = por %p58, %p59
    %s61 = smul.u32 %s21, 4
    %s62 = ssub.s32 %s61, 1
    %p63 = scmp.gt.s32.totalorder %s62, 0
    %s64 = scalar_select %p63, %s62, 0
    %s65 = smul.u32 %s28, 4
    %s66 = ssub.s32 %s65, 1
    %p67 = scmp.gt.s32.totalorder %s66, 0
    %s68 = scalar_select %p67, %s66, 0
    %s69 = ssub.s32 %s20, %s32
    %s70 = ssub.s32 %s64, %s68
    %s71 = sor.u32 %s69, %s70
    %p72 = scmp.eq.s32.totalorder %s71, 0
    %s74 = sadd.s32 %s73, 1
    %s75 = scalar_select %p72, %s73, %s74
    %p78 = pneg %p72
    %p79 = scmp.eq.s32.totalorder %s13, 3
    %p80 = por %p78, %p79
    %p81 = scmp.ne.s32.totalorder %s73, %s76
    %p82 = scmp.eq.s32.totalorder %s13, 0
    %p83 = por %p81, %p82
    %p84 = scmp.ne.s32.totalorder %s73, %s76
    %p85 = scmp.eq.s32.totalorder %s18, 3
    %p86 = por %p84, %p85
    %p87 = scmp.ne.s32.totalorder %s76, %s77
    %p88 = scmp.eq.s32.totalorder %s18, 0
    %p89 = por %p87, %p88
    %p90 = scmp.ne.s32.totalorder %s76, %s77
    %p91 = scmp.eq.s32.totalorder %s19, 3
    %p92 = por %p90, %p91
    %p94 = scmp.ne.s32.totalorder %s77, %s93
    %p95 = scmp.eq.s32.totalorder %s19, 0
    %p96 = por %p94, %p95
    %s97 = sadd.s32 %s21, 1
    %s98 = smul.u32 %s97, 4
    %p99 = scmp.lt.s32.totalorder %s98, 7
    %s100 = scalar_select %p99, %s98, 7
    %s101 = sadd.s32 %s28, 1
    %s102 = smul.u32 %s101, 4
    %p103 = scmp.lt.s32.totalorder %s102, 7
    %s104 = scalar_select %p103, %s102, 7
    %s105 = ssub.s32 %s20, %s32
    %s106 = ssub.s32 %s100, %s104
    %s107 = sor.u32 %s105, %s106
    %p108 = scmp.eq.s32.totalorder %s107, 0
    %s110 = sadd.s32 %s109, 1
    %s111 = scalar_select %p108, %s109, %s110
    %p114 = pneg %p108
    %p115 = scmp.eq.s32.totalorder %s13, 3
    %p116 = por %p114, %p115
    %p117 = scmp.ne.s32.totalorder %s109, %s112
    %p118 = scmp.eq.s32.totalorder %s13, 0
    %p119 = por %p117, %p118
    %p120 = scmp.ne.s32.totalorder %s109, %s112
    %p121 = scmp.eq.s32.totalorder %s18, 3
    %p122 = por %p120, %p121
    %p123 = scmp.ne.s32.totalorder %s112, %s113
    %p124 = scmp.eq.s32.totalorder %s18, 0
    %p125 = por %p123, %p124
    %p126 = scmp.ne.s32.totalorder %s112, %s113
    %p127 = scmp.eq.s32.totalorder %s19, 3
    %p128 = por %p126, %p127
    %p130 = scmp.ne.s32.totalorder %s113, %s129
    %p131 = scmp.eq.s32.totalorder %s19, 0
    %p132 = por %p130, %p131
    %s134 = sadd.s32 %s133, 1
    %p137 = scmp.eq.s32.totalorder %s13, 3
    %p138 = scmp.ne.s32.totalorder %s133, %s135
    %p139 = scmp.eq.s32.totalorder %s13, 0
    %p140 = por %p138, %p139
    %p141 = scmp.ne.s32.totalorder %s133, %s135
    %p142 = scmp.eq.s32.totalorder %s18, 3
    %p143 = por %p141, %p142
    %p144 = scmp.ne.s32.totalorder %s135, %s136
    %p145 = scmp.eq.s32.totalorder %s18, 0
    %p146 = por %p144, %p145
    %p147 = scmp.ne.s32.totalorder %s135, %s136
    %p148 = scmp.eq.s32.totalorder %s19, 3
    %p149 = por %p147, %p148
    %p151 = scmp.ne.s32.totalorder %s136, %s150
    %p152 = scmp.eq.s32.totalorder %s19, 0
    %p153 = por %p151, %p152
    %s155 = sadd.s32 %s154, 1
    %p158 = scmp.eq.s32.totalorder %s13, 3
    %p159 = scmp.ne.s32.totalorder %s154, %s156
    %p160 = scmp.eq.s32.totalorder %s13, 0
    %p161 = por %p159, %p160
    %p162 = scmp.ne.s32.totalorder %s154, %s156
    %p163 = scmp.eq.s32.totalorder %s18, 3
    %p164 = por %p162, %p163
    %p165 = scmp.ne.s32.totalorder %s156, %s157
    %p166 = scmp.eq.s32.totalorder %s18, 0
    %p167 = por %p165, %p166
    %p168 = scmp.ne.s32.totalorder %s156, %s157
    %p169 = scmp.eq.s32.totalorder %s19, 3
    %p170 = por %p168, %p169
    %p172 = scmp.ne.s32.totalorder %s157, %s171
    %p173 = scmp.eq.s32.totalorder %s19, 0
    %p174 = por %p172, %p173
    %s176 = sadd.s32 %s175, 1
    %p179 = scmp.eq.s32.totalorder %s13, 3
    %p180 = scmp.ne.s32.totalorder %s175, %s177
    %p181 = scmp.eq.s32.totalorder %s13, 0
    %p182 = por %p180, %p181
    %p183 = scmp.ne.s32.totalorder %s175, %s177
    %p184 = scmp.eq.s32.totalorder %s18, 3
    %p185 = por %p183, %p184
    %p186 = scmp.ne.s32.totalorder %s177, %s178
    %p187 = scmp.eq.s32.totalorder %s18, 0
    %p188 = por %p186, %p187
    %p189 = scmp.ne.s32.totalorder %s177, %s178
    %p190 = scmp.eq.s32.totalorder %s19, 3
    %p191 = por %p189, %p190
    %p193 = scmp.ne.s32.totalorder %s178, %s192
    %p194 = scmp.eq.s32.totalorder %s19, 0
    %p195 = por %p193, %p194
    %s197 = sadd.s32 %s196, 1
    %p200 = scmp.eq.s32.totalorder %s13, 3
    %p201 = scmp.ne.s32.totalorder %s196, %s198
    %p202 = scmp.eq.s32.totalorder %s13, 0
    %p203 = por %p201, %p202
    %p204 = scmp.ne.s32.totalorder %s196, %s198
    %p205 = scmp.eq.s32.totalorder %s18, 3
    %p206 = por %p204, %p205
    %p207 = scmp.ne.s32.totalorder %s198, %s199
    %p208 = scmp.eq.s32.totalorder %s18, 0
    %p209 = por %p207, %p208
    %p210 = scmp.ne.s32.totalorder %s198, %s199
    %p211 = scmp.eq.s32.totalorder %s19, 3
    %p212 = por %p210, %p211
    %p214 = scmp.ne.s32.totalorder %s199, %s213
    %p215 = scmp.eq.s32.totalorder %s19, 0
    %p216 = por %p214, %p215
    %s217 = ssub.s32 %s20, %s32
    %s218 = ssub.s32 %s21, %s28
    %s219 = sor.u32 %s217, %s218
    %p220 = scmp.eq.s32.totalorder %s219, 0
    %s222 = sadd.s32 %s221, 1
    %s223 = scalar_select %p220, %s221, %s222
    %p226 = pneg %p220
    %p227 = scmp.eq.s32.totalorder %s13, 3
    %p228 = por %p226, %p227
    %p229 = scmp.ne.s32.totalorder %s221, %s224
    %p230 = scmp.eq.s32.totalorder %s13, 0
    %p231 = por %p229, %p230
    %p232 = scmp.ne.s32.totalorder %s221, %s224
    %p233 = scmp.eq.s32.totalorder %s18, 3
    %p234 = por %p232, %p233
    %p235 = scmp.ne.s32.totalorder %s224, %s225
    %p236 = scmp.eq.s32.totalorder %s18, 0
    %p237 = por %p235, %p236
    %p238 = scmp.ne.s32.totalorder %s224, %s225
    %p239 = scmp.eq.s32.totalorder %s19, 3
    %p240 = por %p238, %p239
    %p242 = scmp.ne.s32.totalorder %s225, %s241
    %p243 = scmp.eq.s32.totalorder %s19, 0
    %p244 = por %p242, %p243
    %p245 = scmp.le.s32.totalorder 1, %s13
    %p246 = scmp.lt.s32.totalorder %s13, 5
    %p247 = pnand %p245, %p246
    %p248 = pneg %p247
    // Predicated region
    $region9: #{basic_block_forward.1} parent=5 // pred_check
      _
    $region10: #{basic_block_forward.1} parent=5 // pred_check_branch
      %250 = sbr.rel (%p247) target = $region12
    $region11: #{basic_block_forward.1} parent=5 // pred_region
      %s251 = ssub.s32 %s13, 1
      // Predicated region
      $region13: #{basic_block_forward.1} parent=11 // pred_check
        %p252 = pneg %p146
      $region14: #{basic_block_forward.1} parent=11 // pred_check_branch
        %254 = sbr.rel (%p252) target = $region16
      $region15: #{basic_block_forward.1} parent=11 // pred_region
        _
      $region16: #{basic_block_forward.1} parent=11 // pred_fallthru
        _
      // Predicated region
      $region17: #{basic_block_forward.1} parent=11 // pred_check
        %p255 = pneg %p167
      $region18: #{basic_block_forward.1} parent=11 // pred_check_branch
        %257 = sbr.rel (%p255) target = $region20
      $region19: #{basic_block_forward.1} parent=11 // pred_region
        _
      $region20: #{basic_block_forward.1} parent=11 // pred_fallthru
        _
      // Predicated region
      $region21: #{basic_block_forward.1} parent=11 // pred_check
        %p258 = pneg %p188
      $region22: #{basic_block_forward.1} parent=11 // pred_check_branch
        %260 = sbr.rel (%p258) target = $region24
      $region23: #{basic_block_forward.1} parent=11 // pred_region
        _
      $region24: #{basic_block_forward.1} parent=11 // pred_fallthru
        _
      // Predicated region
      $region25: #{basic_block_forward.1} parent=11 // pred_check
        %p261 = pneg %p209
      $region26: #{basic_block_forward.1} parent=11 // pred_check_branch
        %263 = sbr.rel (%p261) target = $region28
      $region27: #{basic_block_forward.1} parent=11 // pred_region
        _
      $region28: #{basic_block_forward.1} parent=11 // pred_fallthru
        _
    $region12: #{basic_block_forward.1} parent=5 // pred_fallthru
      _
    %p264 = scmp.lt.s32.totalorder %s13, 4
    // Predicated region
    $region29: #{basic_block_forward.1} parent=5 // pred_check
      %p265 = pneg %p264
    $region30: #{basic_block_forward.1} parent=5 // pred_check_branch
      %267 = sbr.rel (%p265) target = $region32
    $region31: #{basic_block_forward.1} parent=5 // pred_region
      // Predicated region
      $region33: #{basic_block_forward.1} parent=31 // pred_check
        %p268 = pneg %p47
      $region34: #{basic_block_forward.1} parent=31 // pred_check_branch
        %270 = sbr.rel (%p268) target = $region36
      $region35: #{basic_block_forward.1} parent=31 // pred_region
        %s271 = smul.u32 8, %s21
        %p272 = scmp.lt.s32.totalorder %s20, 1
        %s273 = scalar_select %p272, %s20, 1
        %p274 = scmp.lt.s32.totalorder %s271, 15
        %s275 = scalar_select %p274, %s271, 15
        %s276 = smul.addr %s275, 2
        %s277 = smul.addr %s273, 32
        %s278 = sadd.s32 %s276, %s277
        %s279 = smul.addr %s278, 4
        %s280 = scalar_lea.vmem %s0, %s279
        %s281 = smul.u32 8, %s21
      $region36: #{basic_block_forward.1} parent=31 // pred_fallthru
        _
      // Predicated region
      $region37: #{basic_block_forward.1} parent=31 // pred_check
        %p282 = pneg %p83
      $region38: #{basic_block_forward.1} parent=31 // pred_check_branch
        %284 = sbr.rel (%p282) target = $region40
      $region39: #{basic_block_forward.1} parent=31 // pred_region
        %s285 = smul.u32 %s21, 4
        %s286 = ssub.s32 %s285, 1
        %p287 = scmp.gt.s32.totalorder %s286, 0
        %s288 = scalar_select %p287, %s286, 0
        %s289 = smul.u32 2, %s288
        %p290 = scmp.lt.s32.totalorder %s20, 1
        %s291 = scalar_select %p290, %s20, 1
        %p292 = scmp.lt.s32.totalorder %s289, 15
        %s293 = scalar_select %p292, %s289, 15
        %s294 = smul.addr %s293, 2
        %s295 = smul.addr %s291, 32
        %s296 = sadd.s32 %s294, %s295
        %s297 = smul.addr %s296, 4
        %s298 = scalar_lea.vmem %s1, %s297
        %s299 = smul.u32 %s21, 4
        %s300 = ssub.s32 %s299, 1
        %p301 = scmp.gt.s32.totalorder %s300, 0
        %s302 = scalar_select %p301, %s300, 0
        %s303 = smul.u32 2, %s302
      $region40: #{basic_block_forward.1} parent=31 // pred_fallthru
        _
      // Predicated region
      $region41: #{basic_block_forward.1} parent=31 // pred_check
        %p304 = pneg %p119
      $region42: #{basic_block_forward.1} parent=31 // pred_check_branch
        %306 = sbr.rel (%p304) target = $region44
      $region43: #{basic_block_forward.1} parent=31 // pred_region
        %s307 = sadd.s32 %s21, 1
        %s308 = smul.u32 %s307, 4
        %p309 = scmp.lt.s32.totalorder %s308, 7
        %s310 = scalar_select %p309, %s308, 7
        %s311 = smul.u32 2, %s310
        %p312 = scmp.lt.s32.totalorder %s20, 1
        %s313 = scalar_select %p312, %s20, 1
        %p314 = scmp.lt.s32.totalorder %s311, 15
        %s315 = scalar_select %p314, %s311, 15
        %s316 = smul.addr %s315, 2
        %s317 = smul.addr %s313, 32
        %s318 = sadd.s32 %s316, %s317
        %s319 = smul.addr %s318, 4
        %s320 = scalar_lea.vmem %s2, %s319
        %s321 = sadd.s32 %s21, 1
        %s322 = smul.u32 %s321, 4
        %p323 = scmp.lt.s32.totalorder %s322, 7
        %s324 = scalar_select %p323, %s322, 7
        %s325 = smul.u32 2, %s324
      $region44: #{basic_block_forward.1} parent=31 // pred_fallthru
        _
    $region32: #{basic_block_forward.1} parent=5 // pred_fallthru
      _
    %p326 = scmp.le.s32.totalorder 1, %s13
    %p327 = scmp.lt.s32.totalorder %s13, 5
    %p328 = pnand %p326, %p327
    %p329 = pneg %p328
    // Predicated region
    $region45: #{basic_block_forward.1} parent=5 // pred_check
      _
    $region46: #{basic_block_forward.1} parent=5 // pred_check_branch
      %331 = sbr.rel (%p328) target = $region48
    $region47: #{basic_block_forward.1} parent=5 // pred_region
      %s332 = ssub.s32 %s13, 1
      %s333 = smul.u32 8, %s23
      %p334 = scmp.lt.s32.totalorder %s22, 1
      %s335 = scalar_select %p334, %s22, 1
      %p336 = scmp.lt.s32.totalorder %s333, 15
      %s337 = scalar_select %p336, %s333, 15
      %s338 = smul.addr %s337, 2
      %s339 = smul.addr %s335, 32
      %s340 = sadd.s32 %s338, %s339
      %s341 = smul.addr %s340, 4
      %s342 = scalar_lea.vmem %s0, %s341
      %p343 = pneg %p53
      %p344 = pneg %p50
      %s345 = smul.u32 %s23, 4
      %s346 = ssub.s32 %s345, 1
      %p347 = scmp.gt.s32.totalorder %s346, 0
      %s348 = scalar_select %p347, %s346, 0
      %s349 = smul.u32 2, %s348
      %p350 = scmp.lt.s32.totalorder %s22, 1
      %s351 = scalar_select %p350, %s22, 1
      %p352 = scmp.lt.s32.totalorder %s349, 15
      %s353 = scalar_select %p352, %s349, 15
      %s354 = smul.addr %s353, 2
      %s355 = smul.addr %s351, 32
      %s356 = sadd.s32 %s354, %s355
      %s357 = smul.addr %s356, 4
      %s358 = scalar_lea.vmem %s1, %s357
      %p359 = pneg %p89
      %p360 = pneg %p86
      %s361 = sadd.s32 %s23, 1
      %s362 = smul.u32 %s361, 4
      %p363 = scmp.lt.s32.totalorder %s362, 7
      %s364 = scalar_select %p363, %s362, 7
      %s365 = smul.u32 2, %s364
      %p366 = scmp.lt.s32.totalorder %s22, 1
      %s367 = scalar_select %p366, %s22, 1
      %p368 = scmp.lt.s32.totalorder %s365, 15
      %s369 = scalar_select %p368, %s365, 15
      %s370 = smul.addr %s369, 2
      %s371 = smul.addr %s367, 32
      %s372 = sadd.s32 %s370, %s371
      %s373 = smul.addr %s372, 4
      %s374 = scalar_lea.vmem %s2, %s373
      %p375 = pneg %p125
      %p376 = pneg %p122
      %p377 = pneg %p146
      %p378 = pneg %p143
      %p379 = pneg %p167
      %p380 = pneg %p164
      %p381 = pneg %p188
      %p382 = pneg %p185
      %p383 = pneg %p209
      %p384 = pneg %p206
      %p385 = pneg %p237
      %p386 = pneg %p234
      %s387 = smul.u32 8, %s23
      %p388 = scmp.lt.s32.totalorder %s22, 1
      %s389 = scalar_select %p388, %s22, 1
      %p390 = scmp.lt.s32.totalorder %s387, 15
      %s391 = scalar_select %p390, %s387, 15
      %s392 = smul.addr %s391, 2
      %s393 = smul.addr %s389, 32
      %s394 = sadd.s32 %s392, %s393
      %s395 = smul.addr %s394, 4
      %s396 = scalar_lea.vmem %s7, %s395
      %s397 = smul.u32 8, %s23
      %p398 = scmp.lt.s32.totalorder %s22, 1
      %s399 = scalar_select %p398, %s22, 1
      %p400 = scmp.lt.s32.totalorder %s397, 15
      %s401 = scalar_select %p400, %s397, 15
      %s402 = smul.addr %s401, 2
      %s403 = smul.addr %s399, 32
      %s404 = sadd.s32 %s402, %s403
      %s405 = smul.addr %s404, 4
      %s406 = scalar_lea.vmem %s0, %s405
      %s407 = smul.u32 8, %s23
      %s408 = smul.u32 %s23, 4
      %s409 = ssub.s32 %s408, 1
      %p410 = scmp.gt.s32.totalorder %s409, 0
      %s411 = scalar_select %p410, %s409, 0
      %s412 = smul.u32 2, %s411
      %p413 = scmp.lt.s32.totalorder %s22, 1
      %s414 = scalar_select %p413, %s22, 1
      %p415 = scmp.lt.s32.totalorder %s412, 15
      %s416 = scalar_select %p415, %s412, 15
      %s417 = smul.addr %s416, 2
      %s418 = smul.addr %s414, 32
      %s419 = sadd.s32 %s417, %s418
      %s420 = smul.addr %s419, 4
      %s421 = scalar_lea.vmem %s1, %s420
      %s422 = smul.u32 %s23, 4
      %s423 = ssub.s32 %s422, 1
      %p424 = scmp.gt.s32.totalorder %s423, 0
      %s425 = scalar_select %p424, %s423, 0
      %s426 = smul.u32 2, %s425
      %s427 = sadd.s32 %s23, 1
      %s428 = smul.u32 %s427, 4
      %p429 = scmp.lt.s32.totalorder %s428, 7
      %s430 = scalar_select %p429, %s428, 7
      %s431 = smul.u32 2, %s430
      %p432 = scmp.lt.s32.totalorder %s22, 1
      %s433 = scalar_select %p432, %s22, 1
      %p434 = scmp.lt.s32.totalorder %s431, 15
      %s435 = scalar_select %p434, %s431, 15
      %s436 = smul.addr %s435, 2
      %s437 = smul.addr %s433, 32
      %s438 = sadd.s32 %s436, %s437
      %s439 = smul.addr %s438, 4
      %s440 = scalar_lea.vmem %s2, %s439
      %s441 = sadd.s32 %s23, 1
      %s442 = smul.u32 %s441, 4
      %p443 = scmp.lt.s32.totalorder %s442, 7
      %s444 = scalar_select %p443, %s442, 7
      %s445 = smul.u32 2, %s444
      %s446 = smul.u32 8, %s23
      %p447 = scmp.lt.s32.totalorder %s22, 1
      %s448 = scalar_select %p447, %s22, 1
      %p449 = scmp.lt.s32.totalorder %s446, 15
      %s450 = scalar_select %p449, %s446, 15
      %s451 = smul.addr %s450, 2
      %s452 = smul.addr %s448, 32
      %s453 = sadd.s32 %s451, %s452
      %s454 = smul.addr %s453, 4
      %s455 = scalar_lea.vmem %s7, %s454
      %s456 = smul.u32 8, %s23
      %v460 = vlaneseq
      %v461 = vshrl.u32 %v460, 7
      %v462 = vadd.s32 %v461, 8
      %v463 = vadd.s32 %v461, 16
      %v464 = vadd.s32 %v461, 24
      %v465 = vadd.s32 %v461, 32
      %v466 = vadd.s32 %v461, 40
      %v467 = vadd.s32 %v461, 48
      %v468 = vadd.s32 %v461, 56
      %v469 = vadd.s32 %v461, 64
      %v470 = vadd.s32 %v461, 72
      %v471 = vadd.s32 %v461, 80
      %v472 = vadd.s32 %v461, 88
      %v473 = vadd.s32 %v461, 96
      %v474 = vadd.s32 %v461, 104
      %v475 = vadd.s32 %v461, 112
      %v476 = vadd.s32 %v461, 120
      %v477 = vadd.s32 %v461, 128
      %v478 = vadd.s32 %v461, 136
      %v479 = vadd.s32 %v461, 144
      %v480 = vadd.s32 %v461, 152
      %v481 = vadd.s32 %v461, 160
      %v482 = vadd.s32 %v461, 168
      %v483 = vadd.s32 %v461, 176
      %v484 = vadd.s32 %v461, 184
      %vm485 = vcmp.lt.s32.totalorder %v461, 0
      %v486 = vsub.s32 0, %v461
      %v487 = vsel %vm485, %v486, %v461
      %v488 = vshrl.u32 %v487, 4
      %v489 = vand.u32 %v487, 15
      %v490 = vsub.s32 0, %v489
      %v491 = vsel %vm485, %v490, %v489
      %vm492 = vcmp.lt.s32.totalorder %v462, 0
      %v493 = vsub.s32 0, %v462
      %v494 = vsel %vm492, %v493, %v462
      %v495 = vshrl.u32 %v494, 4
      %v496 = vand.u32 %v494, 15
      %v497 = vsub.s32 0, %v496
      %v498 = vsel %vm492, %v497, %v496
      %vm499 = vcmp.lt.s32.totalorder %v463, 0
      %v500 = vsub.s32 0, %v463
      %v501 = vsel %vm499, %v500, %v463
      %v502 = vshrl.u32 %v501, 4
      %v503 = vand.u32 %v501, 15
      %v504 = vsub.s32 0, %v503
      %v505 = vsel %vm499, %v504, %v503
      %vm506 = vcmp.lt.s32.totalorder %v464, 0
      %v507 = vsub.s32 0, %v464
      %v508 = vsel %vm506, %v507, %v464
      %v509 = vshrl.u32 %v508, 4
      %v510 = vand.u32 %v508, 15
      %v511 = vsub.s32 0, %v510
      %v512 = vsel %vm506, %v511, %v510
      %vm513 = vcmp.lt.s32.totalorder %v465, 0
      %v514 = vsub.s32 0, %v465
      %v515 = vsel %vm513, %v514, %v465
      %v516 = vshrl.u32 %v515, 4
      %v517 = vand.u32 %v515, 15
      %v518 = vsub.s32 0, %v517
      %v519 = vsel %vm513, %v518, %v517
      %vm520 = vcmp.lt.s32.totalorder %v466, 0
      %v521 = vsub.s32 0, %v466
      %v522 = vsel %vm520, %v521, %v466
      %v523 = vshrl.u32 %v522, 4
      %v524 = vand.u32 %v522, 15
      %v525 = vsub.s32 0, %v524
      %v526 = vsel %vm520, %v525, %v524
      %vm527 = vcmp.lt.s32.totalorder %v467, 0
      %v528 = vsub.s32 0, %v467
      %v529 = vsel %vm527, %v528, %v467
      %v530 = vshrl.u32 %v529, 4
      %v531 = vand.u32 %v529, 15
      %v532 = vsub.s32 0, %v531
      %v533 = vsel %vm527, %v532, %v531
      %vm534 = vcmp.lt.s32.totalorder %v468, 0
      %v535 = vsub.s32 0, %v468
      %v536 = vsel %vm534, %v535, %v468
      %v537 = vshrl.u32 %v536, 4
      %v538 = vand.u32 %v536, 15
      %v539 = vsub.s32 0, %v538
      %v540 = vsel %vm534, %v539, %v538
      %vm541 = vcmp.lt.s32.totalorder %v469, 0
      %v542 = vsub.s32 0, %v469
      %v543 = vsel %vm541, %v542, %v469
      %v544 = vshrl.u32 %v543, 4
      %v545 = vand.u32 %v543, 15
      %v546 = vsub.s32 0, %v545
      %v547 = vsel %vm541, %v546, %v545
      %vm548 = vcmp.lt.s32.totalorder %v470, 0
      %v549 = vsub.s32 0, %v470
      %v550 = vsel %vm548, %v549, %v470
      %v551 = vshrl.u32 %v550, 4
      %v552 = vand.u32 %v550, 15
      %v553 = vsub.s32 0, %v552
      %v554 = vsel %vm548, %v553, %v552
      %vm555 = vcmp.lt.s32.totalorder %v471, 0
      %v556 = vsub.s32 0, %v471
      %v557 = vsel %vm555, %v556, %v471
      %v558 = vshrl.u32 %v557, 4
      %v559 = vand.u32 %v557, 15
      %v560 = vsub.s32 0, %v559
      %v561 = vsel %vm555, %v560, %v559
      %vm562 = vcmp.lt.s32.totalorder %v472, 0
      %v563 = vsub.s32 0, %v472
      %v564 = vsel %vm562, %v563, %v472
      %v565 = vshrl.u32 %v564, 4
      %v566 = vand.u32 %v564, 15
      %v567 = vsub.s32 0, %v566
      %v568 = vsel %vm562, %v567, %v566
      %vm569 = vcmp.lt.s32.totalorder %v473, 0
      %v570 = vsub.s32 0, %v473
      %v571 = vsel %vm569, %v570, %v473
      %v572 = vshrl.u32 %v571, 4
      %v573 = vand.u32 %v571, 15
      %v574 = vsub.s32 0, %v573
      %v575 = vsel %vm569, %v574, %v573
      %vm576 = vcmp.lt.s32.totalorder %v474, 0
      %v577 = vsub.s32 0, %v474
      %v578 = vsel %vm576, %v577, %v474
      %v579 = vshrl.u32 %v578, 4
      %v580 = vand.u32 %v578, 15
      %v581 = vsub.s32 0, %v580
      %v582 = vsel %vm576, %v581, %v580
      %vm583 = vcmp.lt.s32.totalorder %v475, 0
      %v584 = vsub.s32 0, %v475
      %v585 = vsel %vm583, %v584, %v475
      %v586 = vshrl.u32 %v585, 4
      %v587 = vand.u32 %v585, 15
      %v588 = vsub.s32 0, %v587
      %v589 = vsel %vm583, %v588, %v587
      %vm590 = vcmp.lt.s32.totalorder %v476, 0
      %v591 = vsub.s32 0, %v476
      %v592 = vsel %vm590, %v591, %v476
      %v593 = vshrl.u32 %v592, 4
      %v594 = vand.u32 %v592, 15
      %v595 = vsub.s32 0, %v594
      %v596 = vsel %vm590, %v595, %v594
      %vm597 = vcmp.lt.s32.totalorder %v477, 0
      %v598 = vsub.s32 0, %v477
      %v599 = vsel %vm597, %v598, %v477
      %v600 = vshrl.u32 %v599, 4
      %v601 = vand.u32 %v599, 15
      %v602 = vsub.s32 0, %v601
      %v603 = vsel %vm597, %v602, %v601
      %vm604 = vcmp.lt.s32.totalorder %v478, 0
      %v605 = vsub.s32 0, %v478
      %v606 = vsel %vm604, %v605, %v478
      %v607 = vshrl.u32 %v606, 4
      %v608 = vand.u32 %v606, 15
      %v609 = vsub.s32 0, %v608
      %v610 = vsel %vm604, %v609, %v608
      %vm611 = vcmp.lt.s32.totalorder %v479, 0
      %v612 = vsub.s32 0, %v479
      %v613 = vsel %vm611, %v612, %v479
      %v614 = vshrl.u32 %v613, 4
      %v615 = vand.u32 %v613, 15
      %v616 = vsub.s32 0, %v615
      %v617 = vsel %vm611, %v616, %v615
      %vm618 = vcmp.lt.s32.totalorder %v480, 0
      %v619 = vsub.s32 0, %v480
      %v620 = vsel %vm618, %v619, %v480
      %v621 = vshrl.u32 %v620, 4
      %v622 = vand.u32 %v620, 15
      %v623 = vsub.s32 0, %v622
      %v624 = vsel %vm618, %v623, %v622
      %vm625 = vcmp.lt.s32.totalorder %v481, 0
      %v626 = vsub.s32 0, %v481
      %v627 = vsel %vm625, %v626, %v481
      %v628 = vshrl.u32 %v627, 4
      %v629 = vand.u32 %v627, 15
      %v630 = vsub.s32 0, %v629
      %v631 = vsel %vm625, %v630, %v629
      %vm632 = vcmp.lt.s32.totalorder %v482, 0
      %v633 = vsub.s32 0, %v482
      %v634 = vsel %vm632, %v633, %v482
      %v635 = vshrl.u32 %v634, 4
      %v636 = vand.u32 %v634, 15
      %v637 = vsub.s32 0, %v636
      %v638 = vsel %vm632, %v637, %v636
      %vm639 = vcmp.lt.s32.totalorder %v483, 0
      %v640 = vsub.s32 0, %v483
      %v641 = vsel %vm639, %v640, %v483
      %v642 = vshrl.u32 %v641, 4
      %v643 = vand.u32 %v641, 15
      %v644 = vsub.s32 0, %v643
      %v645 = vsel %vm639, %v644, %v643
      %vm646 = vcmp.lt.s32.totalorder %v484, 0
      %v647 = vsub.s32 0, %v484
      %v648 = vsel %vm646, %v647, %v484
      %v649 = vshrl.u32 %v648, 4
      %v650 = vand.u32 %v648, 15
      %v651 = vsub.s32 0, %v650
      %v652 = vsel %vm646, %v651, %v650
      %vm653 = vcmp.ne.s32.totalorder %v491, 0
      %vm654 = vcmp.ne.s32.totalorder %v498, 0
      %vm655 = vcmp.ne.s32.totalorder %v505, 0
      %vm656 = vcmp.ne.s32.totalorder %v512, 0
      %vm657 = vcmp.ne.s32.totalorder %v519, 0
      %vm658 = vcmp.ne.s32.totalorder %v526, 0
      %vm659 = vcmp.ne.s32.totalorder %v533, 0
      %vm660 = vcmp.ne.s32.totalorder %v540, 0
      %vm661 = vcmp.ne.s32.totalorder %v547, 0
      %vm662 = vcmp.ne.s32.totalorder %v554, 0
      %vm663 = vcmp.ne.s32.totalorder %v561, 0
      %vm664 = vcmp.ne.s32.totalorder %v568, 0
      %vm665 = vcmp.ne.s32.totalorder %v575, 0
      %vm666 = vcmp.ne.s32.totalorder %v582, 0
      %vm667 = vcmp.ne.s32.totalorder %v589, 0
      %vm668 = vcmp.ne.s32.totalorder %v596, 0
      %vm669 = vcmp.ne.s32.totalorder %v603, 0
      %vm670 = vcmp.ne.s32.totalorder %v610, 0
      %vm671 = vcmp.ne.s32.totalorder %v617, 0
      %vm672 = vcmp.ne.s32.totalorder %v624, 0
      %vm673 = vcmp.ne.s32.totalorder %v631, 0
      %vm674 = vcmp.ne.s32.totalorder %v638, 0
      %vm675 = vcmp.ne.s32.totalorder %v645, 0
      %vm676 = vcmp.ne.s32.totalorder %v652, 0
      %vm677 = vcmp.lt.s32.totalorder %v491, 0
      %vm678 = vcmp.lt.s32.totalorder %v498, 0
      %vm679 = vcmp.lt.s32.totalorder %v505, 0
      %vm680 = vcmp.lt.s32.totalorder %v512, 0
      %vm681 = vcmp.lt.s32.totalorder %v519, 0
      %vm682 = vcmp.lt.s32.totalorder %v526, 0
      %vm683 = vcmp.lt.s32.totalorder %v533, 0
      %vm684 = vcmp.lt.s32.totalorder %v540, 0
      %vm685 = vcmp.lt.s32.totalorder %v547, 0
      %vm686 = vcmp.lt.s32.totalorder %v554, 0
      %vm687 = vcmp.lt.s32.totalorder %v561, 0
      %vm688 = vcmp.lt.s32.totalorder %v568, 0
      %vm689 = vcmp.lt.s32.totalorder %v575, 0
      %vm690 = vcmp.lt.s32.totalorder %v582, 0
      %vm691 = vcmp.lt.s32.totalorder %v589, 0
      %vm692 = vcmp.lt.s32.totalorder %v596, 0
      %vm693 = vcmp.lt.s32.totalorder %v603, 0
      %vm694 = vcmp.lt.s32.totalorder %v610, 0
      %vm695 = vcmp.lt.s32.totalorder %v617, 0
      %vm696 = vcmp.lt.s32.totalorder %v624, 0
      %vm697 = vcmp.lt.s32.totalorder %v631, 0
      %vm698 = vcmp.lt.s32.totalorder %v638, 0
      %vm699 = vcmp.lt.s32.totalorder %v645, 0
      %vm700 = vcmp.lt.s32.totalorder %v652, 0
      %vm701 = vmand %vm677, %vm653
      %vm702 = vmand %vm678, %vm654
      %vm703 = vmand %vm679, %vm655
      %vm704 = vmand %vm680, %vm656
      %vm705 = vmand %vm681, %vm657
      %vm706 = vmand %vm682, %vm658
      %vm707 = vmand %vm683, %vm659
      %vm708 = vmand %vm684, %vm660
      %vm709 = vmand %vm685, %vm661
      %vm710 = vmand %vm686, %vm662
      %vm711 = vmand %vm687, %vm663
      %vm712 = vmand %vm688, %vm664
      %vm713 = vmand %vm689, %vm665
      %vm714 = vmand %vm690, %vm666
      %vm715 = vmand %vm691, %vm667
      %vm716 = vmand %vm692, %vm668
      %vm717 = vmand %vm693, %vm669
      %vm718 = vmand %vm694, %vm670
      %vm719 = vmand %vm695, %vm671
      %vm720 = vmand %vm696, %vm672
      %vm721 = vmand %vm697, %vm673
      %vm722 = vmand %vm698, %vm674
      %vm723 = vmand %vm699, %vm675
      %vm724 = vmand %vm700, %vm676
      %v725 = vadd.s32 %v491, 16
      %v726 = vadd.s32 %v498, 16
      %v727 = vadd.s32 %v505, 16
      %v728 = vadd.s32 %v512, 16
      %v729 = vadd.s32 %v519, 16
      %v730 = vadd.s32 %v526, 16
      %v731 = vadd.s32 %v533, 16
      %v732 = vadd.s32 %v540, 16
      %v733 = vadd.s32 %v547, 16
      %v734 = vadd.s32 %v554, 16
      %v735 = vadd.s32 %v561, 16
      %v736 = vadd.s32 %v568, 16
      %v737 = vadd.s32 %v575, 16
      %v738 = vadd.s32 %v582, 16
      %v739 = vadd.s32 %v589, 16
      %v740 = vadd.s32 %v596, 16
      %v741 = vadd.s32 %v603, 16
      %v742 = vadd.s32 %v610, 16
      %v743 = vadd.s32 %v617, 16
      %v744 = vadd.s32 %v624, 16
      %v745 = vadd.s32 %v631, 16
      %v746 = vadd.s32 %v638, 16
      %v747 = vadd.s32 %v645, 16
      %v748 = vadd.s32 %v652, 16
      %v749 = vsel %vm701, %v725, %v491
      %v750 = vsel %vm702, %v726, %v498
      %v751 = vsel %vm703, %v727, %v505
      %v752 = vsel %vm704, %v728, %v512
      %v753 = vsel %vm705, %v729, %v519
      %v754 = vsel %vm706, %v730, %v526
      %v755 = vsel %vm707, %v731, %v533
      %v756 = vsel %vm708, %v732, %v540
      %v757 = vsel %vm709, %v733, %v547
      %v758 = vsel %vm710, %v734, %v554
      %v759 = vsel %vm711, %v735, %v561
      %v760 = vsel %vm712, %v736, %v568
      %v761 = vsel %vm713, %v737, %v575
      %v762 = vsel %vm714, %v738, %v582
      %v763 = vsel %vm715, %v739, %v589
      %v764 = vsel %vm716, %v740, %v596
      %v765 = vsel %vm717, %v741, %v603
      %v766 = vsel %vm718, %v742, %v610
      %v767 = vsel %vm719, %v743, %v617
      %v768 = vsel %vm720, %v744, %v624
      %v769 = vsel %vm721, %v745, %v631
      %v770 = vsel %vm722, %v746, %v638
      %v771 = vsel %vm723, %v747, %v645
      %v772 = vsel %vm724, %v748, %v652
      %vm773 = vcmp.ge.s32.totalorder %v749, 1
      %vm774 = vcmp.ge.s32.totalorder %v750, 1
      %vm775 = vcmp.ge.s32.totalorder %v751, 1
      %vm776 = vcmp.ge.s32.totalorder %v752, 1
      %vm777 = vcmp.ge.s32.totalorder %v753, 1
      %vm778 = vcmp.ge.s32.totalorder %v754, 1
      %vm779 = vcmp.ge.s32.totalorder %v755, 1
      %vm780 = vcmp.ge.s32.totalorder %v756, 1
      %vm781 = vcmp.ge.s32.totalorder %v757, 1
      %vm782 = vcmp.ge.s32.totalorder %v758, 1
      %vm783 = vcmp.ge.s32.totalorder %v759, 1
      %vm784 = vcmp.ge.s32.totalorder %v760, 1
      %vm785 = vcmp.ge.s32.totalorder %v761, 1
      %vm786 = vcmp.ge.s32.totalorder %v762, 1
      %vm787 = vcmp.ge.s32.totalorder %v763, 1
      %vm788 = vcmp.ge.s32.totalorder %v764, 1
      %vm789 = vcmp.ge.s32.totalorder %v765, 1
      %vm790 = vcmp.ge.s32.totalorder %v766, 1
      %vm791 = vcmp.ge.s32.totalorder %v767, 1
      %vm792 = vcmp.ge.s32.totalorder %v768, 1
      %vm793 = vcmp.ge.s32.totalorder %v769, 1
      %vm794 = vcmp.ge.s32.totalorder %v770, 1
      %vm795 = vcmp.ge.s32.totalorder %v771, 1
      %vm796 = vcmp.ge.s32.totalorder %v772, 1
      %vm797 = vcmp.le.s32.totalorder %v749, 14
      %vm798 = vcmp.le.s32.totalorder %v750, 14
      %vm799 = vcmp.le.s32.totalorder %v751, 14
      %vm800 = vcmp.le.s32.totalorder %v752, 14
      %vm801 = vcmp.le.s32.totalorder %v753, 14
      %vm802 = vcmp.le.s32.totalorder %v754, 14
      %vm803 = vcmp.le.s32.totalorder %v755, 14
      %vm804 = vcmp.le.s32.totalorder %v756, 14
      %vm805 = vcmp.le.s32.totalorder %v757, 14
      %vm806 = vcmp.le.s32.totalorder %v758, 14
      %vm807 = vcmp.le.s32.totalorder %v759, 14
      %vm808 = vcmp.le.s32.totalorder %v760, 14
      %vm809 = vcmp.le.s32.totalorder %v761, 14
      %vm810 = vcmp.le.s32.totalorder %v762, 14
      %vm811 = vcmp.le.s32.totalorder %v763, 14
      %vm812 = vcmp.le.s32.totalorder %v764, 14
      %vm813 = vcmp.le.s32.totalorder %v765, 14
      %vm814 = vcmp.le.s32.totalorder %v766, 14
      %vm815 = vcmp.le.s32.totalorder %v767, 14
      %vm816 = vcmp.le.s32.totalorder %v768, 14
      %vm817 = vcmp.le.s32.totalorder %v769, 14
      %vm818 = vcmp.le.s32.totalorder %v770, 14
      %vm819 = vcmp.le.s32.totalorder %v771, 14
      %vm820 = vcmp.le.s32.totalorder %v772, 14
      %v821 = vld [vmem:[%s421] sm:$0xf]
      %v822 = vld [vmem:[%s421 + $0x4] sm:$0xf]
      %v823 = vld [vmem:[%s421 + $0x8] sm:$0xf]
      %v824 = vld [vmem:[%s421 + $0xc] sm:$0xf]
      %v825 = vld [vmem:[%s406] sm:$0xf]
      %v826 = vld [vmem:[%s406 + $0x4] sm:$0xf]
      %v827 = vld [vmem:[%s406 + $0x8] sm:$0xf]
      %v828 = vld [vmem:[%s406 + $0xc] sm:$0xf]
      %v829 = vld [vmem:[%s406 + $0x10] sm:$0xf]
      %v830 = vld [vmem:[%s406 + $0x14] sm:$0xf]
      %v831 = vld [vmem:[%s406 + $0x18] sm:$0xf]
      %v832 = vld [vmem:[%s406 + $0x1c] sm:$0xf]
      %v833 = vld [vmem:[%s406 + $0x20] sm:$0xf]
      %v834 = vld [vmem:[%s406 + $0x24] sm:$0xf]
      %v835 = vld [vmem:[%s406 + $0x28] sm:$0xf]
      %v836 = vld [vmem:[%s406 + $0x2c] sm:$0xf]
      %v837 = vld [vmem:[%s406 + $0x30] sm:$0xf]
      %v838 = vld [vmem:[%s406 + $0x34] sm:$0xf]
      %v839 = vld [vmem:[%s406 + $0x38] sm:$0xf]
      %v840 = vld [vmem:[%s406 + $0x3c] sm:$0xf]
      %v841 = vld [vmem:[%s440] sm:$0xf]
      %v842 = vld [vmem:[%s440 + $0x4] sm:$0xf]
      %v843 = vld [vmem:[%s440 + $0x8] sm:$0xf]
      %v844 = vld [vmem:[%s440 + $0xc] sm:$0xf]
      %v849 = vunpack.c.l.b16 %v821
      %v850 = vunpack.c.l.b16 %v822
      %v851 = vunpack.c.l.b16 %v823
      %v852 = vunpack.c.l.b16 %v824
      %v853 = vpack.c.b16 %v850, %v849
      %v854 = vpack.c.b16 %v852, %v851
      %v873 = vunpack.c.l.b16 %v825
      %v874 = vunpack.c.l.b16 %v826
      %v875 = vunpack.c.l.b16 %v827
      %v876 = vunpack.c.l.b16 %v828
      %v877 = vunpack.c.l.b16 %v829
      %v878 = vunpack.c.l.b16 %v830
      %v879 = vunpack.c.l.b16 %v831
      %v880 = vunpack.c.l.b16 %v832
      %v881 = vunpack.c.l.b16 %v833
      %v882 = vunpack.c.l.b16 %v834
      %v883 = vunpack.c.l.b16 %v835
      %v884 = vunpack.c.l.b16 %v836
      %v885 = vunpack.c.l.b16 %v837
      %v886 = vunpack.c.l.b16 %v838
      %v887 = vunpack.c.l.b16 %v839
      %v888 = vunpack.c.l.b16 %v840
      %v889 = vpack.c.b16 %v874, %v873
      %v890 = vpack.c.b16 %v876, %v875
      %v891 = vpack.c.b16 %v878, %v877
      %v892 = vpack.c.b16 %v880, %v879
      %v893 = vpack.c.b16 %v882, %v881
      %v894 = vpack.c.b16 %v884, %v883
      %v895 = vpack.c.b16 %v886, %v885
      %v896 = vpack.c.b16 %v888, %v887
      %v909 = vunpack.c.l.b16 %v841
      %v910 = vunpack.c.l.b16 %v842
      %v911 = vunpack.c.l.b16 %v843
      %v912 = vunpack.c.l.b16 %v844
      %v913 = vpack.c.b16 %v910, %v909
      %v914 = vpack.c.b16 %v912, %v911
      %917 = vst [vmem:[#allocation2 + $0x8] sm:$0xff] %v853
      %918 = vst [vmem:[#allocation2 + $0x20] sm:$0xff] %v854
      %919 = vst [vmem:[#allocation2 + $0x38] sm:$0xff] %v889
      %920 = vst [vmem:[#allocation2 + $0x50] sm:$0xff] %v890
      %921 = vst [vmem:[#allocation2 + $0x68] sm:$0xff] %v891
      %922 = vst [vmem:[#allocation2 + $0x80] sm:$0xff] %v892
      %923 = vst [vmem:[#allocation2 + $0x98] sm:$0xff] %v893
      %924 = vst [vmem:[#allocation2 + $0xb0] sm:$0xff] %v894
      %925 = vst [vmem:[#allocation2 + $0xc8] sm:$0xff] %v895
      %926 = vst [vmem:[#allocation2 + $0xe0] sm:$0xff] %v896
      %927 = vst [vmem:[#allocation2 + $0xf8] sm:$0xff] %v913
      %928 = vst [vmem:[#allocation2 + $0x110] sm:$0xff] %v914
      %vm929 = vsmask.f32 256
      %v931 = vshrl.u32 %v853, 16
      %v933 = vrot.slane %v931, 7
      %v934 = vshll.u32 %v853, 16
      %v936 = vor.u32 %v933, %v934
      %v938 = vshrl.u32 %v854, 16
      %v940 = vrot.slane %v938, 7
      %v941 = vshll.u32 %v854, 16
      %v943 = vor.u32 %v940, %v941
      %v944 = vsel %vm929, %v933, %v943
      %v946 = vshrl.u32 %v889, 16
      %v948 = vrot.slane %v946, 7
      %v949 = vshll.u32 %v889, 16
      %v951 = vor.u32 %v948, %v949
      %v952 = vsel %vm929, %v940, %v951
      %v954 = vshrl.u32 %v890, 16
      %v956 = vrot.slane %v954, 7
      %v957 = vshll.u32 %v890, 16
      %v959 = vor.u32 %v956, %v957
      %v960 = vsel %vm929, %v948, %v959
      %v962 = vshrl.u32 %v891, 16
      %v964 = vrot.slane %v962, 7
      %v965 = vshll.u32 %v891, 16
      %v967 = vor.u32 %v964, %v965
      %v968 = vsel %vm929, %v956, %v967
      %v970 = vshrl.u32 %v892, 16
      %v972 = vrot.slane %v970, 7
      %v973 = vshll.u32 %v892, 16
      %v975 = vor.u32 %v972, %v973
      %v976 = vsel %vm929, %v964, %v975
      %v978 = vshrl.u32 %v893, 16
      %v980 = vrot.slane %v978, 7
      %v981 = vshll.u32 %v893, 16
      %v983 = vor.u32 %v980, %v981
      %v984 = vsel %vm929, %v972, %v983
      %v986 = vshrl.u32 %v894, 16
      %v988 = vrot.slane %v986, 7
      %v989 = vshll.u32 %v894, 16
      %v991 = vor.u32 %v988, %v989
      %v992 = vsel %vm929, %v980, %v991
      %v994 = vshrl.u32 %v895, 16
      %v996 = vrot.slane %v994, 7
      %v997 = vshll.u32 %v895, 16
      %v999 = vor.u32 %v996, %v997
      %v1000 = vsel %vm929, %v988, %v999
      %v1002 = vshrl.u32 %v896, 16
      %v1004 = vrot.slane %v1002, 7
      %v1005 = vshll.u32 %v896, 16
      %v1007 = vor.u32 %v1004, %v1005
      %v1008 = vsel %vm929, %v996, %v1007
      %v1010 = vshrl.u32 %v913, 16
      %v1012 = vrot.slane %v1010, 7
      %v1013 = vshll.u32 %v913, 16
      %v1015 = vor.u32 %v1012, %v1013
      %v1016 = vsel %vm929, %v1004, %v1015
      %v1018 = vshrl.u32 %v914, 16
      %v1020 = vrot.slane %v1018, 7
      %v1021 = vshll.u32 %v914, 16
      %v1023 = vor.u32 %v1020, %v1021
      %v1024 = vsel %vm929, %v1012, %v1023
      %vm1037 = vcmask 1040384
      %vm1038 = vmand %vm1037, %vm929
      %v1039 = vsel %vm1038, 0, %v936
      %v1040 = vsel %vm773, 1, 0
      %v1041 = vsel %vm774, 1, 0
      %v1042 = vsel %vm775, 1, 0
      %v1043 = vsel %vm776, 1, 0
      %v1044 = vsel %vm777, 1, 0
      %v1045 = vsel %vm778, 1, 0
      %v1046 = vsel %vm779, 1, 0
      %v1047 = vsel %vm780, 1, 0
      %v1048 = vsel %vm781, 1, 0
      %v1049 = vsel %vm782, 1, 0
      %v1050 = vsel %vm783, 1, 0
      %v1051 = vsel %vm784, 1, 0
      %v1052 = vsel %vm785, 1, 0
      %v1053 = vsel %vm786, 1, 0
      %v1054 = vsel %vm787, 1, 0
      %v1055 = vsel %vm788, 1, 0
      %v1056 = vsel %vm789, 1, 0
      %v1057 = vsel %vm790, 1, 0
      %v1058 = vsel %vm791, 1, 0
      %v1059 = vsel %vm792, 1, 0
      %v1060 = vsel %vm793, 1, 0
      %v1061 = vsel %vm794, 1, 0
      %v1062 = vsel %vm795, 1, 0
      %v1063 = vsel %vm796, 1, 0
      %vm1064 = vcmp.eq.s32.totalorder %v1040, 1
      %vm1065 = vcmp.eq.s32.totalorder %v1041, 1
      %vm1066 = vcmp.eq.s32.totalorder %v1042, 1
      %vm1067 = vcmp.eq.s32.totalorder %v1043, 1
      %vm1068 = vcmp.eq.s32.totalorder %v1044, 1
      %vm1069 = vcmp.eq.s32.totalorder %v1045, 1
      %vm1070 = vcmp.eq.s32.totalorder %v1046, 1
      %vm1071 = vcmp.eq.s32.totalorder %v1047, 1
      %vm1072 = vcmp.eq.s32.totalorder %v1048, 1
      %vm1073 = vcmp.eq.s32.totalorder %v1049, 1
      %vm1074 = vcmp.eq.s32.totalorder %v1050, 1
      %vm1075 = vcmp.eq.s32.totalorder %v1051, 1
      %vm1076 = vcmp.eq.s32.totalorder %v1052, 1
      %vm1077 = vcmp.eq.s32.totalorder %v1053, 1
      %vm1078 = vcmp.eq.s32.totalorder %v1054, 1
      %vm1079 = vcmp.eq.s32.totalorder %v1055, 1
      %vm1080 = vcmp.eq.s32.totalorder %v1056, 1
      %vm1081 = vcmp.eq.s32.totalorder %v1057, 1
      %vm1082 = vcmp.eq.s32.totalorder %v1058, 1
      %vm1083 = vcmp.eq.s32.totalorder %v1059, 1
      %vm1084 = vcmp.eq.s32.totalorder %v1060, 1
      %vm1085 = vcmp.eq.s32.totalorder %v1061, 1
      %vm1086 = vcmp.eq.s32.totalorder %v1062, 1
      %vm1087 = vcmp.eq.s32.totalorder %v1063, 1
      %vm1088 = vmpackc.low %vm1064, %vm1064
      %vm1089 = vmpackc.low %vm1065, %vm1065
      %vm1090 = vmpackc.low %vm1066, %vm1066
      %vm1091 = vmpackc.low %vm1067, %vm1067
      %vm1092 = vmpackc.low %vm1068, %vm1068
      %vm1093 = vmpackc.low %vm1069, %vm1069
      %vm1094 = vmpackc.low %vm1070, %vm1070
      %vm1095 = vmpackc.low %vm1071, %vm1071
      %vm1096 = vmpackc.low %vm1072, %vm1072
      %vm1097 = vmpackc.low %vm1073, %vm1073
      %vm1098 = vmpackc.low %vm1074, %vm1074
      %vm1099 = vmpackc.low %vm1075, %vm1075
      %vm1100 = vmpackc.low %vm1076, %vm1076
      %vm1101 = vmpackc.low %vm1077, %vm1077
      %vm1102 = vmpackc.low %vm1078, %vm1078
      %vm1103 = vmpackc.low %vm1079, %vm1079
      %vm1104 = vmpackc.low %vm1080, %vm1080
      %vm1105 = vmpackc.low %vm1081, %vm1081
      %vm1106 = vmpackc.low %vm1082, %vm1082
      %vm1107 = vmpackc.low %vm1083, %vm1083
      %vm1108 = vmpackc.low %vm1084, %vm1084
      %vm1109 = vmpackc.low %vm1085, %vm1085
      %vm1110 = vmpackc.low %vm1086, %vm1086
      %vm1111 = vmpackc.low %vm1087, %vm1087
      %v1112 = vsel %vm1088, 65537, 0
      %v1113 = vsel %vm1089, 65537, 0
      %v1114 = vsel %vm1090, 65537, 0
      %v1115 = vsel %vm1091, 65537, 0
      %v1116 = vsel %vm1092, 65537, 0
      %v1117 = vsel %vm1093, 65537, 0
      %v1118 = vsel %vm1094, 65537, 0
      %v1119 = vsel %vm1095, 65537, 0
      %v1120 = vsel %vm1096, 65537, 0
      %v1121 = vsel %vm1097, 65537, 0
      %v1122 = vsel %vm1098, 65537, 0
      %v1123 = vsel %vm1099, 65537, 0
      %v1124 = vsel %vm1100, 65537, 0
      %v1125 = vsel %vm1101, 65537, 0
      %v1126 = vsel %vm1102, 65537, 0
      %v1127 = vsel %vm1103, 65537, 0
      %v1128 = vsel %vm1104, 65537, 0
      %v1129 = vsel %vm1105, 65537, 0
      %v1130 = vsel %vm1106, 65537, 0
      %v1131 = vsel %vm1107, 65537, 0
      %v1132 = vsel %vm1108, 65537, 0
      %v1133 = vsel %vm1109, 65537, 0
      %v1134 = vsel %vm1110, 65537, 0
      %v1135 = vsel %vm1111, 65537, 0
      %v1136 = vunpack.c.l.b16 %v1112
      %v1137 = vunpack.c.l.b16 %v1113
      %v1138 = vunpack.c.l.b16 %v1114
      %v1139 = vunpack.c.l.b16 %v1115
      %v1140 = vunpack.c.l.b16 %v1116
      %v1141 = vunpack.c.l.b16 %v1117
      %v1142 = vunpack.c.l.b16 %v1118
      %v1143 = vunpack.c.l.b16 %v1119
      %v1144 = vunpack.c.l.b16 %v1120
      %v1145 = vunpack.c.l.b16 %v1121
      %v1146 = vunpack.c.l.b16 %v1122
      %v1147 = vunpack.c.l.b16 %v1123
      %v1148 = vunpack.c.l.b16 %v1124
      %v1149 = vunpack.c.l.b16 %v1125
      %v1150 = vunpack.c.l.b16 %v1126
      %v1151 = vunpack.c.l.b16 %v1127
      %v1152 = vunpack.c.l.b16 %v1128
      %v1153 = vunpack.c.l.b16 %v1129
      %v1154 = vunpack.c.l.b16 %v1130
      %v1155 = vunpack.c.l.b16 %v1131
      %v1156 = vunpack.c.l.b16 %v1132
      %v1157 = vunpack.c.l.b16 %v1133
      %v1158 = vunpack.c.l.b16 %v1134
      %v1159 = vunpack.c.l.b16 %v1135
      %v1160 = vpack.c.b16 %v1137, %v1136
      %v1161 = vpack.c.b16 %v1139, %v1138
      %v1162 = vpack.c.b16 %v1141, %v1140
      %v1163 = vpack.c.b16 %v1143, %v1142
      %v1164 = vpack.c.b16 %v1145, %v1144
      %v1165 = vpack.c.b16 %v1147, %v1146
      %v1166 = vpack.c.b16 %v1149, %v1148
      %v1167 = vpack.c.b16 %v1151, %v1150
      %v1168 = vpack.c.b16 %v1153, %v1152
      %v1169 = vpack.c.b16 %v1155, %v1154
      %v1170 = vpack.c.b16 %v1157, %v1156
      %v1171 = vpack.c.b16 %v1159, %v1158
      %vm1172 = vcmp.ne.s16.totalorder %v1160, 0
      %vm1173 = vcmp.ne.s16.totalorder %v1161, 0
      %vm1174 = vcmp.ne.s16.totalorder %v1162, 0
      %vm1175 = vcmp.ne.s16.totalorder %v1163, 0
      %vm1176 = vcmp.ne.s16.totalorder %v1164, 0
      %vm1177 = vcmp.ne.s16.totalorder %v1165, 0
      %vm1178 = vcmp.ne.s16.totalorder %v1166, 0
      %vm1179 = vcmp.ne.s16.totalorder %v1167, 0
      %vm1180 = vcmp.ne.s16.totalorder %v1168, 0
      %vm1181 = vcmp.ne.s16.totalorder %v1169, 0
      %vm1182 = vcmp.ne.s16.totalorder %v1170, 0
      %vm1183 = vcmp.ne.s16.totalorder %v1171, 0
      %v1184 = vsel %vm1172, %v1039, 0
      %v1185 = vsel %vm1173, %v944, 0
      %v1186 = vsel %vm1174, %v952, 0
      %v1187 = vsel %vm1175, %v960, 0
      %v1188 = vsel %vm1176, %v968, 0
      %v1189 = vsel %vm1177, %v976, 0
      %v1190 = vsel %vm1178, %v984, 0
      %v1191 = vsel %vm1179, %v992, 0
      %v1192 = vsel %vm1180, %v1000, 0
      %v1193 = vsel %vm1181, %v1008, 0
      %v1194 = vsel %vm1182, %v1016, 0
      %v1195 = vsel %vm1183, %v1024, 0
      %1196 = vst [vmem:[#allocation2] sm:$0xff] %v1184
      %1197 = vst [vmem:[#allocation2 + $0x18] sm:$0xff] %v1185
      %1198 = vst [vmem:[#allocation2 + $0x30] sm:$0xff] %v1186
      %1199 = vst [vmem:[#allocation2 + $0x48] sm:$0xff] %v1187
      %1200 = vst [vmem:[#allocation2 + $0x60] sm:$0xff] %v1188
      %1201 = vst [vmem:[#allocation2 + $0x78] sm:$0xff] %v1189
      %1202 = vst [vmem:[#allocation2 + $0x90] sm:$0xff] %v1190
      %1203 = vst [vmem:[#allocation2 + $0xa8] sm:$0xff] %v1191
      %1204 = vst [vmem:[#allocation2 + $0xc0] sm:$0xff] %v1192
      %1205 = vst [vmem:[#allocation2 + $0xd8] sm:$0xff] %v1193
      %1206 = vst [vmem:[#allocation2 + $0xf0] sm:$0xff] %v1194
      %1207 = vst [vmem:[#allocation2 + $0x108] sm:$0xff] %v1195
      %vm1208 = vsmask.f32 7424
      %v1209 = vrot.slane %v934, 1
      %v1210 = vor.u32 %v931, %v1209
      %v1211 = vrot.slane %v941, 1
      %v1212 = vsel %vm1208, %v1210, %v1211
      %v1213 = vor.u32 %v938, %v1211
      %v1214 = vrot.slane %v949, 1
      %v1215 = vsel %vm1208, %v1213, %v1214
      %v1216 = vor.u32 %v946, %v1214
      %v1217 = vrot.slane %v957, 1
      %v1218 = vsel %vm1208, %v1216, %v1217
      %v1219 = vor.u32 %v954, %v1217
      %v1220 = vrot.slane %v965, 1
      %v1221 = vsel %vm1208, %v1219, %v1220
      %v1222 = vor.u32 %v962, %v1220
      %v1223 = vrot.slane %v973, 1
      %v1224 = vsel %vm1208, %v1222, %v1223
      %v1225 = vor.u32 %v970, %v1223
      %v1226 = vrot.slane %v981, 1
      %v1227 = vsel %vm1208, %v1225, %v1226
      %v1228 = vor.u32 %v978, %v1226
      %v1229 = vrot.slane %v989, 1
      %v1230 = vsel %vm1208, %v1228, %v1229
      %v1231 = vor.u32 %v986, %v1229
      %v1232 = vrot.slane %v997, 1
      %v1233 = vsel %vm1208, %v1231, %v1232
      %v1234 = vor.u32 %v994, %v1232
      %v1235 = vrot.slane %v1005, 1
      %v1236 = vsel %vm1208, %v1234, %v1235
      %v1237 = vor.u32 %v1002, %v1235
      %v1238 = vrot.slane %v1013, 1
      %v1239 = vsel %vm1208, %v1237, %v1238
      %v1240 = vor.u32 %v1010, %v1238
      %v1241 = vrot.slane %v1021, 1
      %v1242 = vsel %vm1208, %v1240, %v1241
      %v1243 = vor.u32 %v1018, %v1241
      %vm1256 = vcmask 1047552
      %vm1257 = vmand %vm1256, %vm1208
      %v1258 = vsel %vm1257, %v1243, 0
      %v1259 = vsel %vm797, 1, 0
      %v1260 = vsel %vm798, 1, 0
      %v1261 = vsel %vm799, 1, 0
      %v1262 = vsel %vm800, 1, 0
      %v1263 = vsel %vm801, 1, 0
      %v1264 = vsel %vm802, 1, 0
      %v1265 = vsel %vm803, 1, 0
      %v1266 = vsel %vm804, 1, 0
      %v1267 = vsel %vm805, 1, 0
      %v1268 = vsel %vm806, 1, 0
      %v1269 = vsel %vm807, 1, 0
      %v1270 = vsel %vm808, 1, 0
      %v1271 = vsel %vm809, 1, 0
      %v1272 = vsel %vm810, 1, 0
      %v1273 = vsel %vm811, 1, 0
      %v1274 = vsel %vm812, 1, 0
      %v1275 = vsel %vm813, 1, 0
      %v1276 = vsel %vm814, 1, 0
      %v1277 = vsel %vm815, 1, 0
      %v1278 = vsel %vm816, 1, 0
      %v1279 = vsel %vm817, 1, 0
      %v1280 = vsel %vm818, 1, 0
      %v1281 = vsel %vm819, 1, 0
      %v1282 = vsel %vm820, 1, 0
      %vm1283 = vcmp.eq.s32.totalorder %v1259, 1
      %vm1284 = vcmp.eq.s32.totalorder %v1260, 1
      %vm1285 = vcmp.eq.s32.totalorder %v1261, 1
      %vm1286 = vcmp.eq.s32.totalorder %v1262, 1
      %vm1287 = vcmp.eq.s32.totalorder %v1263, 1
      %vm1288 = vcmp.eq.s32.totalorder %v1264, 1
      %vm1289 = vcmp.eq.s32.totalorder %v1265, 1
      %vm1290 = vcmp.eq.s32.totalorder %v1266, 1
      %vm1291 = vcmp.eq.s32.totalorder %v1267, 1
      %vm1292 = vcmp.eq.s32.totalorder %v1268, 1
      %vm1293 = vcmp.eq.s32.totalorder %v1269, 1
      %vm1294 = vcmp.eq.s32.totalorder %v1270, 1
      %vm1295 = vcmp.eq.s32.totalorder %v1271, 1
      %vm1296 = vcmp.eq.s32.totalorder %v1272, 1
      %vm1297 = vcmp.eq.s32.totalorder %v1273, 1
      %vm1298 = vcmp.eq.s32.totalorder %v1274, 1
      %vm1299 = vcmp.eq.s32.totalorder %v1275, 1
      %vm1300 = vcmp.eq.s32.totalorder %v1276, 1
      %vm1301 = vcmp.eq.s32.totalorder %v1277, 1
      %vm1302 = vcmp.eq.s32.totalorder %v1278, 1
      %vm1303 = vcmp.eq.s32.totalorder %v1279, 1
      %vm1304 = vcmp.eq.s32.totalorder %v1280, 1
      %vm1305 = vcmp.eq.s32.totalorder %v1281, 1
      %vm1306 = vcmp.eq.s32.totalorder %v1282, 1
      %vm1307 = vmpackc.low %vm1283, %vm1283
      %vm1308 = vmpackc.low %vm1284, %vm1284
      %vm1309 = vmpackc.low %vm1285, %vm1285
      %vm1310 = vmpackc.low %vm1286, %vm1286
      %vm1311 = vmpackc.low %vm1287, %vm1287
      %vm1312 = vmpackc.low %vm1288, %vm1288
      %vm1313 = vmpackc.low %vm1289, %vm1289
      %vm1314 = vmpackc.low %vm1290, %vm1290
      %vm1315 = vmpackc.low %vm1291, %vm1291
      %vm1316 = vmpackc.low %vm1292, %vm1292
      %vm1317 = vmpackc.low %vm1293, %vm1293
      %vm1318 = vmpackc.low %vm1294, %vm1294
      %vm1319 = vmpackc.low %vm1295, %vm1295
      %vm1320 = vmpackc.low %vm1296, %vm1296
      %vm1321 = vmpackc.low %vm1297, %vm1297
      %vm1322 = vmpackc.low %vm1298, %vm1298
      %vm1323 = vmpackc.low %vm1299, %vm1299
      %vm1324 = vmpackc.low %vm1300, %vm1300
      %vm1325 = vmpackc.low %vm1301, %vm1301
      %vm1326 = vmpackc.low %vm1302, %vm1302
      %vm1327 = vmpackc.low %vm1303, %vm1303
      %vm1328 = vmpackc.low %vm1304, %vm1304
      %vm1329 = vmpackc.low %vm1305, %vm1305
      %vm1330 = vmpackc.low %vm1306, %vm1306
      %v1331 = vsel %vm1307, 65537, 0
      %v1332 = vsel %vm1308, 65537, 0
      %v1333 = vsel %vm1309, 65537, 0
      %v1334 = vsel %vm1310, 65537, 0
      %v1335 = vsel %vm1311, 65537, 0
      %v1336 = vsel %vm1312, 65537, 0
      %v1337 = vsel %vm1313, 65537, 0
      %v1338 = vsel %vm1314, 65537, 0
      %v1339 = vsel %vm1315, 65537, 0
      %v1340 = vsel %vm1316, 65537, 0
      %v1341 = vsel %vm1317, 65537, 0
      %v1342 = vsel %vm1318, 65537, 0
      %v1343 = vsel %vm1319, 65537, 0
      %v1344 = vsel %vm1320, 65537, 0
      %v1345 = vsel %vm1321, 65537, 0
      %v1346 = vsel %vm1322, 65537, 0
      %v1347 = vsel %vm1323, 65537, 0
      %v1348 = vsel %vm1324, 65537, 0
      %v1349 = vsel %vm1325, 65537, 0
      %v1350 = vsel %vm1326, 65537, 0
      %v1351 = vsel %vm1327, 65537, 0
      %v1352 = vsel %vm1328, 65537, 0
      %v1353 = vsel %vm1329, 65537, 0
      %v1354 = vsel %vm1330, 65537, 0
      %v1355 = vunpack.c.l.b16 %v1331
      %v1356 = vunpack.c.l.b16 %v1332
      %v1357 = vunpack.c.l.b16 %v1333
      %v1358 = vunpack.c.l.b16 %v1334
      %v1359 = vunpack.c.l.b16 %v1335
      %v1360 = vunpack.c.l.b16 %v1336
      %v1361 = vunpack.c.l.b16 %v1337
      %v1362 = vunpack.c.l.b16 %v1338
      %v1363 = vunpack.c.l.b16 %v1339
      %v1364 = vunpack.c.l.b16 %v1340
      %v1365 = vunpack.c.l.b16 %v1341
      %v1366 = vunpack.c.l.b16 %v1342
      %v1367 = vunpack.c.l.b16 %v1343
      %v1368 = vunpack.c.l.b16 %v1344
      %v1369 = vunpack.c.l.b16 %v1345
      %v1370 = vunpack.c.l.b16 %v1346
      %v1371 = vunpack.c.l.b16 %v1347
      %v1372 = vunpack.c.l.b16 %v1348
      %v1373 = vunpack.c.l.b16 %v1349
      %v1374 = vunpack.c.l.b16 %v1350
      %v1375 = vunpack.c.l.b16 %v1351
      %v1376 = vunpack.c.l.b16 %v1352
      %v1377 = vunpack.c.l.b16 %v1353
      %v1378 = vunpack.c.l.b16 %v1354
      %v1379 = vpack.c.b16 %v1356, %v1355
      %v1380 = vpack.c.b16 %v1358, %v1357
      %v1381 = vpack.c.b16 %v1360, %v1359
      %v1382 = vpack.c.b16 %v1362, %v1361
      %v1383 = vpack.c.b16 %v1364, %v1363
      %v1384 = vpack.c.b16 %v1366, %v1365
      %v1385 = vpack.c.b16 %v1368, %v1367
      %v1386 = vpack.c.b16 %v1370, %v1369
      %v1387 = vpack.c.b16 %v1372, %v1371
      %v1388 = vpack.c.b16 %v1374, %v1373
      %v1389 = vpack.c.b16 %v1376, %v1375
      %v1390 = vpack.c.b16 %v1378, %v1377
      %vm1391 = vcmp.ne.s16.totalorder %v1379, 0
      %vm1392 = vcmp.ne.s16.totalorder %v1380, 0
      %vm1393 = vcmp.ne.s16.totalorder %v1381, 0
      %vm1394 = vcmp.ne.s16.totalorder %v1382, 0
      %vm1395 = vcmp.ne.s16.totalorder %v1383, 0
      %vm1396 = vcmp.ne.s16.totalorder %v1384, 0
      %vm1397 = vcmp.ne.s16.totalorder %v1385, 0
      %vm1398 = vcmp.ne.s16.totalorder %v1386, 0
      %vm1399 = vcmp.ne.s16.totalorder %v1387, 0
      %vm1400 = vcmp.ne.s16.totalorder %v1388, 0
      %vm1401 = vcmp.ne.s16.totalorder %v1389, 0
      %vm1402 = vcmp.ne.s16.totalorder %v1390, 0
      %v1403 = vsel %vm1391, %v1212, 0
      %v1404 = vsel %vm1392, %v1215, 0
      %v1405 = vsel %vm1393, %v1218, 0
      %v1406 = vsel %vm1394, %v1221, 0
      %v1407 = vsel %vm1395, %v1224, 0
      %v1408 = vsel %vm1396, %v1227, 0
      %v1409 = vsel %vm1397, %v1230, 0
      %v1410 = vsel %vm1398, %v1233, 0
      %v1411 = vsel %vm1399, %v1236, 0
      %v1412 = vsel %vm1400, %v1239, 0
      %v1413 = vsel %vm1401, %v1242, 0
      %v1414 = vsel %vm1402, %v1258, 0
      %1415 = vst [vmem:[#allocation2 + $0x10] sm:$0xff] %v1403
      %1416 = vst [vmem:[#allocation2 + $0x28] sm:$0xff] %v1404
      %1417 = vst [vmem:[#allocation2 + $0x40] sm:$0xff] %v1405
      %1418 = vst [vmem:[#allocation2 + $0x58] sm:$0xff] %v1406
      %1419 = vst [vmem:[#allocation2 + $0x70] sm:$0xff] %v1407
      %1420 = vst [vmem:[#allocation2 + $0x88] sm:$0xff] %v1408
      %1421 = vst [vmem:[#allocation2 + $0xa0] sm:$0xff] %v1409
      %1422 = vst [vmem:[#allocation2 + $0xb8] sm:$0xff] %v1410
      %1423 = vst [vmem:[#allocation2 + $0xd0] sm:$0xff] %v1411
      %1424 = vst [vmem:[#allocation2 + $0xe8] sm:$0xff] %v1412
      %1425 = vst [vmem:[#allocation2 + $0x100] sm:$0xff] %v1413
      %1426 = vst [vmem:[#allocation2 + $0x118] sm:$0xff] %v1414
      %p1427 = scmp.eq.s32.totalorder %s23, 0
      // Predicated region
      $region49: #{basic_block_forward.1} parent=47 // pred_check
        %p1428 = pneg %p1427
      $region50: #{basic_block_forward.1} parent=47 // pred_check_branch
        %1430 = sbr.rel (%p1428) target = $region52
      $region51: #{basic_block_forward.1} parent=47 // pred_region
        %1431 = vst [vmem:[#allocation2] sm:$0xff] 0
        %1432 = vst [vmem:[#allocation2 + $0x8] sm:$0xff] 0
        %1433 = vst [vmem:[#allocation2 + $0x10] sm:$0xff] 0
        %1434 = vst [vmem:[#allocation2 + $0x18] sm:$0xff] 0
        %1435 = vst [vmem:[#allocation2 + $0x20] sm:$0xff] 0
        %1436 = vst [vmem:[#allocation2 + $0x28] sm:$0xff] 0
      $region52: #{basic_block_forward.1} parent=47 // pred_fallthru
        _
      %p1437 = scmp.eq.s32.totalorder %s23, 1
      // Predicated region
      $region53: #{basic_block_forward.1} parent=47 // pred_check
        %p1438 = pneg %p1437
      $region54: #{basic_block_forward.1} parent=47 // pred_check_branch
        %1440 = sbr.rel (%p1438) target = $region56
      $region55: #{basic_block_forward.1} parent=47 // pred_region
        %1441 = vst [vmem:[#allocation2 + $0xf0] sm:$0xff] 0
        %1442 = vst [vmem:[#allocation2 + $0xf8] sm:$0xff] 0
        %1443 = vst [vmem:[#allocation2 + $0x100] sm:$0xff] 0
        %1444 = vst [vmem:[#allocation2 + $0x108] sm:$0xff] 0
        %1445 = vst [vmem:[#allocation2 + $0x110] sm:$0xff] 0
        %1446 = vst [vmem:[#allocation2 + $0x118] sm:$0xff] 0
      $region56: #{basic_block_forward.1} parent=47 // pred_fallthru
        _
      %v1447 = vld [vmem:[#allocation2] sm:$0xff]
      %v1448 = vld [vmem:[#allocation2 + $0x8] sm:$0xff]
      %v1449 = vld [vmem:[#allocation2 + $0x10] sm:$0xff]
      %v1450 = vld [vmem:[#allocation2 + $0x18] sm:$0xff]
      %v1451 = vld [vmem:[#allocation2 + $0x20] sm:$0xff]
      %v1452 = vld [vmem:[#allocation2 + $0x28] sm:$0xff]
      %v1453 = vld [vmem:[#allocation2 + $0x30] sm:$0xff]
      %v1454 = vld [vmem:[#allocation2 + $0x38] sm:$0xff]
      %v1455 = vld [vmem:[#allocation2 + $0x40] sm:$0xff]
      %v1456 = vld [vmem:[#allocation2 + $0x48] sm:$0xff]
      %v1457 = vld [vmem:[#allocation2 + $0x50] sm:$0xff]
      %v1458 = vld [vmem:[#allocation2 + $0x58] sm:$0xff]
      %v1459 = vld [vmem:[#allocation2 + $0x60] sm:$0xff]
      %v1460 = vld [vmem:[#allocation2 + $0x68] sm:$0xff]
      %v1461 = vld [vmem:[#allocation2 + $0x70] sm:$0xff]
      %v1462 = vld [vmem:[#allocation2 + $0x78] sm:$0xff]
      %v1463 = vld [vmem:[#allocation2 + $0x80] sm:$0xff]
      %v1464 = vld [vmem:[#allocation2 + $0x88] sm:$0xff]
      %v1465 = vld [vmem:[#allocation2 + $0x90] sm:$0xff]
      %v1466 = vld [vmem:[#allocation2 + $0x98] sm:$0xff]
      %v1467 = vld [vmem:[#allocation2 + $0xa0] sm:$0xff]
      %v1468 = vld [vmem:[#allocation2 + $0xa8] sm:$0xff]
      %v1469 = vld [vmem:[#allocation2 + $0xb0] sm:$0xff]
      %v1470 = vld [vmem:[#allocation2 + $0xb8] sm:$0xff]
      %v1471 = vld [vmem:[#allocation2 + $0xc0] sm:$0xff]
      %v1472 = vld [vmem:[#allocation2 + $0xc8] sm:$0xff]
      %v1473 = vld [vmem:[#allocation2 + $0xd0] sm:$0xff]
      %v1474 = vld [vmem:[#allocation2 + $0xd8] sm:$0xff]
      %v1475 = vld [vmem:[#allocation2 + $0xe0] sm:$0xff]
      %v1476 = vld [vmem:[#allocation2 + $0xe8] sm:$0xff]
      %v1477 = vld [vmem:[%s3] sm:$0xf]
      %v1478 = vld [vmem:[%s3 + $0x4] sm:$0xf]
      %v1479 = vld [vmem:[%s3 + $0x8] sm:$0xf]
      %v1480 = vld [vmem:[%s3 + $0xc] sm:$0xf]
      %v1481 = vld [vmem:[%s3 + $0x10] sm:$0xf]
      %v1482 = vld [vmem:[%s3 + $0x14] sm:$0xf]
      %v1483 = vld [vmem:[%s3 + $0x18] sm:$0xf]
      %v1484 = vld [vmem:[%s3 + $0x1c] sm:$0xf]
      %v1485 = vld [vmem:[%s3 + $0x20] sm:$0xf]
      %v1486 = vld [vmem:[%s3 + $0x24] sm:$0xf]
      %v1487 = vld [vmem:[%s3 + $0x28] sm:$0xf]
      %v1488 = vld [vmem:[%s3 + $0x2c] sm:$0xf]
      %v1489 = vld [vmem:[%s3 + $0x30] sm:$0xf]
      %v1490 = vld [vmem:[%s3 + $0x34] sm:$0xf]
      %v1491 = vld [vmem:[%s3 + $0x38] sm:$0xf]
      %v1492 = vld [vmem:[%s3 + $0x3c] sm:$0xf]
      %v1493 = vld [vmem:[%s3 + $0x40] sm:$0xf]
      %v1494 = vld [vmem:[%s3 + $0x44] sm:$0xf]
      %v1495 = vld [vmem:[%s3 + $0x48] sm:$0xf]
      %v1496 = vld [vmem:[%s3 + $0x4c] sm:$0xf]
      %v1497 = vld [vmem:[%s3 + $0x50] sm:$0xf]
      %v1498 = vld [vmem:[%s3 + $0x54] sm:$0xf]
      %v1499 = vld [vmem:[%s3 + $0x58] sm:$0xf]
      %v1500 = vld [vmem:[%s3 + $0x5c] sm:$0xf]
      %v1501 = vld [vmem:[%s3 + $0x60] sm:$0xf]
      %v1502 = vld [vmem:[%s3 + $0x64] sm:$0xf]
      %v1503 = vld [vmem:[%s3 + $0x68] sm:$0xf]
      %v1504 = vld [vmem:[%s3 + $0x6c] sm:$0xf]
      %v1505 = vld [vmem:[%s3 + $0x70] sm:$0xf]
      %v1506 = vld [vmem:[%s3 + $0x74] sm:$0xf]
      %v1507 = vld [vmem:[%s3 + $0x78] sm:$0xf]
      %v1508 = vld [vmem:[%s3 + $0x7c] sm:$0xf]
      %v1509 = vld [vmem:[%s3 + $0x80] sm:$0xf]
      %v1510 = vld [vmem:[%s3 + $0x84] sm:$0xf]
      %v1511 = vld [vmem:[%s3 + $0x88] sm:$0xf]
      %v1512 = vld [vmem:[%s3 + $0x8c] sm:$0xf]
      %v1513 = vld [vmem:[%s3 + $0x90] sm:$0xf]
      %v1514 = vld [vmem:[%s3 + $0x94] sm:$0xf]
      %v1515 = vld [vmem:[%s3 + $0x98] sm:$0xf]
      %v1516 = vld [vmem:[%s3 + $0x9c] sm:$0xf]
      %v1517 = vld [vmem:[%s3 + $0xa0] sm:$0xf]
      %v1518 = vld [vmem:[%s3 + $0xa4] sm:$0xf]
      %v1519 = vld [vmem:[%s3 + $0xa8] sm:$0xf]
      %v1520 = vld [vmem:[%s3 + $0xac] sm:$0xf]
      %v1521 = vld [vmem:[%s3 + $0xb0] sm:$0xf]
      %v1522 = vld [vmem:[%s3 + $0xb4] sm:$0xf]
      %v1523 = vld [vmem:[%s3 + $0xb8] sm:$0xf]
      %v1524 = vld [vmem:[%s3 + $0xbc] sm:$0xf]
      %v1525 = vld [vmem:[#allocation2 + $0xf0] sm:$0xff]
      %v1526 = vld [vmem:[#allocation2 + $0xf8] sm:$0xff]
      %v1527 = vld [vmem:[#allocation2 + $0x100] sm:$0xff]
      %s1528 = scalar_lea.vmem %s3, 192
      %v1529 = vld [vmem:[%s1528] sm:$0xf]
      %v1530 = vld [vmem:[%s1528 + $0x4] sm:$0xf]
      %v1531 = vld [vmem:[%s1528 + $0x8] sm:$0xf]
      %v1532 = vld [vmem:[%s1528 + $0xc] sm:$0xf]
      %v1533 = vld [vmem:[%s1528 + $0x10] sm:$0xf]
      %v1534 = vld [vmem:[%s1528 + $0x14] sm:$0xf]
      %v1535 = vld [vmem:[%s1528 + $0x18] sm:$0xf]
      %v1536 = vld [vmem:[%s1528 + $0x1c] sm:$0xf]
      %v1537 = vld [vmem:[%s1528 + $0x20] sm:$0xf]
      %v1538 = vld [vmem:[%s1528 + $0x24] sm:$0xf]
      %v1539 = vld [vmem:[%s1528 + $0x28] sm:$0xf]
      %v1540 = vld [vmem:[%s1528 + $0x2c] sm:$0xf]
      %v1541 = vld [vmem:[%s1528 + $0x30] sm:$0xf]
      %v1542 = vld [vmem:[%s1528 + $0x34] sm:$0xf]
      %v1543 = vld [vmem:[%s1528 + $0x38] sm:$0xf]
      %v1544 = vld [vmem:[%s1528 + $0x3c] sm:$0xf]
      %v1545 = vld [vmem:[%s1528 + $0x40] sm:$0xf]
      %v1546 = vld [vmem:[%s1528 + $0x44] sm:$0xf]
      %v1547 = vld [vmem:[%s1528 + $0x48] sm:$0xf]
      %v1548 = vld [vmem:[%s1528 + $0x4c] sm:$0xf]
      %v1549 = vld [vmem:[%s1528 + $0x50] sm:$0xf]
      %v1550 = vld [vmem:[%s1528 + $0x54] sm:$0xf]
      %v1551 = vld [vmem:[%s1528 + $0x58] sm:$0xf]
      %v1552 = vld [vmem:[%s1528 + $0x5c] sm:$0xf]
      %v1553 = vld [vmem:[%s1528 + $0x60] sm:$0xf]
      %v1554 = vld [vmem:[%s1528 + $0x64] sm:$0xf]
      %v1555 = vld [vmem:[%s1528 + $0x68] sm:$0xf]
      %v1556 = vld [vmem:[%s1528 + $0x6c] sm:$0xf]
      %v1557 = vld [vmem:[%s1528 + $0x70] sm:$0xf]
      %v1558 = vld [vmem:[%s1528 + $0x74] sm:$0xf]
      %v1559 = vld [vmem:[%s1528 + $0x78] sm:$0xf]
      %v1560 = vld [vmem:[%s1528 + $0x7c] sm:$0xf]
      %v1561 = vld [vmem:[%s1528 + $0x80] sm:$0xf]
      %v1562 = vld [vmem:[%s1528 + $0x84] sm:$0xf]
      %v1563 = vld [vmem:[%s1528 + $0x88] sm:$0xf]
      %v1564 = vld [vmem:[%s1528 + $0x8c] sm:$0xf]
      %v1565 = vld [vmem:[%s1528 + $0x90] sm:$0xf]
      %v1566 = vld [vmem:[%s1528 + $0x94] sm:$0xf]
      %v1567 = vld [vmem:[%s1528 + $0x98] sm:$0xf]
      %v1568 = vld [vmem:[%s1528 + $0x9c] sm:$0xf]
      %v1569 = vld [vmem:[%s1528 + $0xa0] sm:$0xf]
      %v1570 = vld [vmem:[%s1528 + $0xa4] sm:$0xf]
      %v1571 = vld [vmem:[%s1528 + $0xa8] sm:$0xf]
      %v1572 = vld [vmem:[%s1528 + $0xac] sm:$0xf]
      %v1573 = vld [vmem:[%s1528 + $0xb0] sm:$0xf]
      %v1574 = vld [vmem:[%s1528 + $0xb4] sm:$0xf]
      %v1575 = vld [vmem:[%s1528 + $0xb8] sm:$0xf]
      %v1576 = vld [vmem:[%s1528 + $0xbc] sm:$0xf]
      %v1625 = vunpack.c.l.b16 %v1529
      %v1626 = vunpack.c.l.b16 %v1530
      %v1627 = vunpack.c.l.b16 %v1531
      %v1628 = vunpack.c.l.b16 %v1532
      %v1629 = vunpack.c.l.b16 %v1533
      %v1630 = vunpack.c.l.b16 %v1534
      %v1631 = vunpack.c.l.b16 %v1535
      %v1632 = vunpack.c.l.b16 %v1536
      %v1633 = vunpack.c.l.b16 %v1537
      %v1634 = vunpack.c.l.b16 %v1538
      %v1635 = vunpack.c.l.b16 %v1539
      %v1636 = vunpack.c.l.b16 %v1540
      %v1637 = vunpack.c.l.b16 %v1541
      %v1638 = vunpack.c.l.b16 %v1542
      %v1639 = vunpack.c.l.b16 %v1543
      %v1640 = vunpack.c.l.b16 %v1544
      %v1641 = vunpack.c.l.b16 %v1545
      %v1642 = vunpack.c.l.b16 %v1546
      %v1643 = vunpack.c.l.b16 %v1547
      %v1644 = vunpack.c.l.b16 %v1548
      %v1645 = vunpack.c.l.b16 %v1549
      %v1646 = vunpack.c.l.b16 %v1550
      %v1647 = vunpack.c.l.b16 %v1551
      %v1648 = vunpack.c.l.b16 %v1552
      %v1649 = vunpack.c.l.b16 %v1553
      %v1650 = vunpack.c.l.b16 %v1554
      %v1651 = vunpack.c.l.b16 %v1555
      %v1652 = vunpack.c.l.b16 %v1556
      %v1653 = vunpack.c.l.b16 %v1557
      %v1654 = vunpack.c.l.b16 %v1558
      %v1655 = vunpack.c.l.b16 %v1559
      %v1656 = vunpack.c.l.b16 %v1560
      %v1657 = vunpack.c.l.b16 %v1561
      %v1658 = vunpack.c.l.b16 %v1562
      %v1659 = vunpack.c.l.b16 %v1563
      %v1660 = vunpack.c.l.b16 %v1564
      %v1661 = vunpack.c.l.b16 %v1565
      %v1662 = vunpack.c.l.b16 %v1566
      %v1663 = vunpack.c.l.b16 %v1567
      %v1664 = vunpack.c.l.b16 %v1568
      %v1665 = vunpack.c.l.b16 %v1569
      %v1666 = vunpack.c.l.b16 %v1570
      %v1667 = vunpack.c.l.b16 %v1571
      %v1668 = vunpack.c.l.b16 %v1572
      %v1669 = vunpack.c.l.b16 %v1573
      %v1670 = vunpack.c.l.b16 %v1574
      %v1671 = vunpack.c.l.b16 %v1575
      %v1672 = vunpack.c.l.b16 %v1576
      %v1673 = vpack.c.b16 %v1626, %v1625
      %v1674 = vpack.c.b16 %v1628, %v1627
      %v1675 = vpack.c.b16 %v1630, %v1629
      %v1676 = vpack.c.b16 %v1632, %v1631
      %v1677 = vpack.c.b16 %v1634, %v1633
      %v1678 = vpack.c.b16 %v1636, %v1635
      %v1679 = vpack.c.b16 %v1638, %v1637
      %v1680 = vpack.c.b16 %v1640, %v1639
      %v1681 = vpack.c.b16 %v1642, %v1641
      %v1682 = vpack.c.b16 %v1644, %v1643
      %v1683 = vpack.c.b16 %v1646, %v1645
      %v1684 = vpack.c.b16 %v1648, %v1647
      %v1685 = vpack.c.b16 %v1650, %v1649
      %v1686 = vpack.c.b16 %v1652, %v1651
      %v1687 = vpack.c.b16 %v1654, %v1653
      %v1688 = vpack.c.b16 %v1656, %v1655
      %v1689 = vpack.c.b16 %v1658, %v1657
      %v1690 = vpack.c.b16 %v1660, %v1659
      %v1691 = vpack.c.b16 %v1662, %v1661
      %v1692 = vpack.c.b16 %v1664, %v1663
      %v1693 = vpack.c.b16 %v1666, %v1665
      %v1694 = vpack.c.b16 %v1668, %v1667
      %v1695 = vpack.c.b16 %v1670, %v1669
      %v1696 = vpack.c.b16 %v1672, %v1671
      %1721 = vmatprep.subr.bf16.mxu0 0
      %1722 = vmatpush1.bf16.msra.mxu0 %v1673
      %1723 = vmatprep.subr.bf16.mxu0 0
      %1724 = vmatpush1.bf16.msra.mxu0 %v1674
      %1725 = vmatprep.subr.bf16.mxu0 0
      %1726 = vmatpush1.bf16.msra.mxu0 %v1675
      %1727 = vmatprep.subr.bf16.mxu0 0
      %1728 = vmatpush1.bf16.msra.mxu0 %v1676
      %1729 = vmatprep.subr.bf16.mxu0 0
      %1730 = vmatpush1.bf16.msra.mxu0 %v1677
      %1731 = vmatprep.subr.bf16.mxu0 0
      %1732 = vmatpush1.bf16.msra.mxu0 %v1678
      %1733 = vmatprep.subr.bf16.mxu0 0
      %1734 = vmatpush1.bf16.msra.mxu0 %v1679
      %1735 = vmatprep.subr.bf16.mxu0 0
      %1736 = vmatpush1.bf16.msra.mxu0 %v1680
      %1737 = vmatprep.subr.bf16.mxu0 0
      %1738 = vmatpush1.bf16.msra.mxu0 %v1681
      %1739 = vmatprep.subr.bf16.mxu0 0
      %1740 = vmatpush1.bf16.msra.mxu0 %v1682
      %1741 = vmatprep.subr.bf16.mxu0 0
      %1742 = vmatpush1.bf16.msra.mxu0 %v1683
      %1743 = vmatprep.subr.bf16.mxu0 0
      %1744 = vmatpush1.bf16.msra.mxu0 %v1684
      %1745 = vmatprep.subr.bf16.mxu0 0
      %1746 = vmatpush1.bf16.msra.mxu0 %v1685
      %1747 = vmatprep.subr.bf16.mxu0 0
      %1748 = vmatpush1.bf16.msra.mxu0 %v1686
      %1749 = vmatprep.subr.bf16.mxu0 0
      %1750 = vmatpush1.bf16.msra.mxu0 %v1687
      %1751 = vmatprep.subr.bf16.mxu0 0
      %1752 = vmatpush1.bf16.msra.mxu0 %v1688
      %1753 = vmatprep.mubr.bf16.mxu0 %v1451
      %1754 = vmatmul.mubr.bf16.gmra.mrb[0].mxu0 %v1450
      %v1755 = vpop.f32.mrb[0].mxu0
      %v1756 = vadd.f32 0.0, %v1755
      %v1757 = vpop.f32.mrb[0].mxu0
      %v1758 = vpop.f32.mrb[0].mxu0
      %v1759 = vadd.f32 0.0, %v1758
      %v1760 = vpop.f32.mrb[0].mxu0
      %1761 = vmatprep.mubr.bf16.mxu0 %v1454
      %1762 = vmatmul.mubr.bf16.gmra.mrb[0].mxu0 %v1453
      %v1763 = vpop.f32.mrb[0].mxu0
      %v1764 = vadd.f32 0.0, %v1763
      %v1765 = vpop.f32.mrb[0].mxu0
      %v1766 = vpop.f32.mrb[0].mxu0
      %v1767 = vadd.f32 0.0, %v1766
      %v1768 = vpop.f32.mrb[0].mxu0
      %1769 = vmatprep.mubr.bf16.mxu0 %v1457
      %1770 = vmatmul.mubr.bf16.gmra.mrb[0].mxu0 %v1456
      %v1771 = vpop.f32.mrb[0].mxu0
      %v1772 = vadd.f32 0.0, %v1771
      %v1773 = vpop.f32.mrb[0].mxu0
      %v1774 = vpop.f32.mrb[0].mxu0
      %v1775 = vadd.f32 0.0, %v1774
      %v1776 = vpop.f32.mrb[0].mxu0
      %1777 = vmatprep.mubr.bf16.mxu0 %v1460
      %1778 = vmatmul.mubr.bf16.gmra.mrb[0].mxu0 %v1459
      %v1779 = vpop.f32.mrb[0].mxu0
      %v1780 = vadd.f32 0.0, %v1779
      %v1781 = vpop.f32.mrb[0].mxu0
      %v1782 = vpop.f32.mrb[0].mxu0
      %v1783 = vadd.f32 0.0, %v1782
      %v1784 = vpop.f32.mrb[0].mxu0
      %1785 = vmatprep.mubr.bf16.mxu0 %v1463
      %1786 = vmatmul.mubr.bf16.gmra.mrb[0].mxu0 %v1462
      %v1787 = vpop.f32.mrb[0].mxu0
      %v1788 = vadd.f32 0.0, %v1787
      %v1789 = vpop.f32.mrb[0].mxu0
      %v1790 = vpop.f32.mrb[0].mxu0
      %v1791 = vadd.f32 0.0, %v1790
      %v1792 = vpop.f32.mrb[0].mxu0
      %1793 = vmatprep.mubr.bf16.mxu0 %v1466
      %1794 = vmatmul.mubr.bf16.gmra.mrb[0].mxu0 %v1465
      %v1795 = vpop.f32.mrb[0].mxu0
      %v1796 = vadd.f32 0.0, %v1795
      %v1797 = vpop.f32.mrb[0].mxu0
      %v1798 = vpop.f32.mrb[0].mxu0
      %v1799 = vadd.f32 0.0, %v1798
      %v1800 = vpop.f32.mrb[0].mxu0
      %1801 = vmatprep.mubr.bf16.mxu0 %v1469
      %1802 = vmatmul.mubr.bf16.gmra.mrb[0].mxu0 %v1468
      %v1803 = vpop.f32.mrb[0].mxu0
      %v1804 = vadd.f32 0.0, %v1803
      %v1805 = vpop.f32.mrb[0].mxu0
      %v1806 = vpop.f32.mrb[0].mxu0
      %v1807 = vadd.f32 0.0, %v1806
      %v1808 = vpop.f32.mrb[0].mxu0
      %1809 = vmatprep.mubr.bf16.mxu0 %v1472
      %1810 = vmatmul.mubr.bf16.gmra.mrb[0].mxu0 %v1471
      %v1811 = vpop.f32.mrb[0].mxu0
      %v1812 = vadd.f32 0.0, %v1811
      %v1813 = vpop.f32.mrb[0].mxu0
      %v1814 = vpop.f32.mrb[0].mxu0
      %v1815 = vadd.f32 0.0, %v1814
      %v1816 = vpop.f32.mrb[0].mxu0
      %1817 = vmatprep.mubr.bf16.mxu0 %v1475
      %1818 = vmatmul.mubr.bf16.gmra.mrb[0].mxu0 %v1474
      %v1819 = vpop.f32.mrb[0].mxu0
      %v1820 = vadd.f32 0.0, %v1819
      %v1821 = vpop.f32.mrb[0].mxu0
      %v1822 = vpop.f32.mrb[0].mxu0
      %v1823 = vadd.f32 0.0, %v1822
      %v1824 = vpop.f32.mrb[0].mxu0
      %1825 = vmatprep.mubr.bf16.mxu0 %v1526
      %1826 = vmatmul.mubr.bf16.gmra.mrb[0].mxu0 %v1525
      %v1827 = vpop.f32.mrb[0].mxu0
      %v1828 = vadd.f32 0.0, %v1827
      %v1829 = vpop.f32.mrb[0].mxu0
      %v1830 = vpop.f32.mrb[0].mxu0
      %v1831 = vadd.f32 0.0, %v1830
      %v1832 = vpop.f32.mrb[0].mxu0
      %1833 = vdwg.mxu0
      %1834 = vmatprep.subr.bf16.mxu0 0
      %1835 = vmatpush1.bf16.msra.mxu0 %v1689
      %1836 = vmatprep.subr.bf16.mxu0 0
      %1837 = vmatpush1.bf16.msra.mxu0 %v1690
      %1838 = vmatprep.subr.bf16.mxu0 0
      %1839 = vmatpush1.bf16.msra.mxu0 %v1691
      %1840 = vmatprep.subr.bf16.mxu0 0
      %1841 = vmatpush1.bf16.msra.mxu0 %v1692
      %1842 = vmatprep.subr.bf16.mxu0 0
      %1843 = vmatpush1.bf16.msra.mxu0 %v1693
      %1844 = vmatprep.subr.bf16.mxu0 0
      %1845 = vmatpush1.bf16.msra.mxu0 %v1694
      %1846 = vmatprep.subr.bf16.mxu0 0
      %1847 = vmatpush1.bf16.msra.mxu0 %v1695
      %1848 = vmatprep.subr.bf16.mxu0 0
      %1849 = vmatpush1.bf16.msra.mxu0 %v1696
      %1850 = vmatprep.subr.bf16.mxu0 0
      %1851 = vmatpush1.bf16.msra.mxu0 0
      %1852 = vmatprep.subr.bf16.mxu0 0
      %1853 = vmatpush1.bf16.msra.mxu0 0
      %1854 = vmatprep.subr.bf16.mxu0 0
      %1855 = vmatpush1.bf16.msra.mxu0 0
      %1856 = vmatprep.subr.bf16.mxu0 0
      %1857 = vmatpush1.bf16.msra.mxu0 0
      %1858 = vmatprep.subr.bf16.mxu0 0
      %1859 = vmatpush1.bf16.msra.mxu0 0
      %1860 = vmatprep.subr.bf16.mxu0 0
      %1861 = vmatpush1.bf16.msra.mxu0 0
      %1862 = vmatprep.subr.bf16.mxu0 0
      %1863 = vmatpush1.bf16.msra.mxu0 0
      %1864 = vmatprep.subr.bf16.mxu0 0
      %1865 = vmatpush1.bf16.msra.mxu0 0
      %1866 = vmatprep.mubr.bf16.mxu0 0
      %1867 = vmatmul.mubr.bf16.gmra.mrb[0].mxu0 %v1452
      %v1868 = vpop.f32.mrb[0].mxu0
      %v1869 = vadd.f32 %v1756, %v1868
      %v1870 = vpop.f32.mrb[0].mxu0
      %v1871 = vpop.f32.mrb[0].mxu0
      %v1872 = vadd.f32 %v1759, %v1871
      %v1873 = vpop.f32.mrb[0].mxu0
      %1874 = vmatprep.mubr.bf16.mxu0 0
      %1875 = vmatmul.mubr.bf16.gmra.mrb[0].mxu0 %v1455
      %v1876 = vpop.f32.mrb[0].mxu0
      %v1877 = vadd.f32 %v1764, %v1876
      %v1878 = vpop.f32.mrb[0].mxu0
      %v1879 = vpop.f32.mrb[0].mxu0
      %v1880 = vadd.f32 %v1767, %v1879
      %v1881 = vpop.f32.mrb[0].mxu0
      %1882 = vmatprep.mubr.bf16.mxu0 0
      %1883 = vmatmul.mubr.bf16.gmra.mrb[0].mxu0 %v1458
      %v1884 = vpop.f32.mrb[0].mxu0
      %v1885 = vadd.f32 %v1772, %v1884
      %v1886 = vpop.f32.mrb[0].mxu0
      %v1887 = vpop.f32.mrb[0].mxu0
      %v1888 = vadd.f32 %v1775, %v1887
      %v1889 = vpop.f32.mrb[0].mxu0
      %1890 = vmatprep.mubr.bf16.mxu0 0
      %1891 = vmatmul.mubr.bf16.gmra.mrb[0].mxu0 %v1461
      %v1892 = vpop.f32.mrb[0].mxu0
      %v1893 = vadd.f32 %v1780, %v1892
      %v1894 = vpop.f32.mrb[0].mxu0
      %v1895 = vpop.f32.mrb[0].mxu0
      %v1896 = vadd.f32 %v1783, %v1895
      %v1897 = vpop.f32.mrb[0].mxu0
      %1898 = vmatprep.mubr.bf16.mxu0 0
      %1899 = vmatmul.mubr.bf16.gmra.mrb[0].mxu0 %v1464
      %v1900 = vpop.f32.mrb[0].mxu0
      %v1901 = vadd.f32 %v1788, %v1900
      %v1902 = vpop.f32.mrb[0].mxu0
      %v1903 = vpop.f32.mrb[0].mxu0
      %v1904 = vadd.f32 %v1791, %v1903
      %v1905 = vpop.f32.mrb[0].mxu0
      %1906 = vmatprep.mubr.bf16.mxu0 0
      %1907 = vmatmul.mubr.bf16.gmra.mrb[0].mxu0 %v1467
      %v1908 = vpop.f32.mrb[0].mxu0
      %v1909 = vadd.f32 %v1796, %v1908
      %v1910 = vpop.f32.mrb[0].mxu0
      %v1911 = vpop.f32.mrb[0].mxu0
      %v1912 = vadd.f32 %v1799, %v1911
      %v1913 = vpop.f32.mrb[0].mxu0
      %1914 = vmatprep.mubr.bf16.mxu0 0
      %1915 = vmatmul.mubr.bf16.gmra.mrb[0].mxu0 %v1470
      %v1916 = vpop.f32.mrb[0].mxu0
      %v1917 = vadd.f32 %v1804, %v1916
      %v1918 = vpop.f32.mrb[0].mxu0
      %v1919 = vpop.f32.mrb[0].mxu0
      %v1920 = vadd.f32 %v1807, %v1919
      %v1921 = vpop.f32.mrb[0].mxu0
      %1922 = vmatprep.mubr.bf16.mxu0 0
      %1923 = vmatmul.mubr.bf16.gmra.mrb[0].mxu0 %v1473
      %v1924 = vpop.f32.mrb[0].mxu0
      %v1925 = vadd.f32 %v1812, %v1924
      %v1926 = vpop.f32.mrb[0].mxu0
      %v1927 = vpop.f32.mrb[0].mxu0
      %v1928 = vadd.f32 %v1815, %v1927
      %v1929 = vpop.f32.mrb[0].mxu0
      %1930 = vmatprep.mubr.bf16.mxu0 0
      %1931 = vmatmul.mubr.bf16.gmra.mrb[0].mxu0 %v1476
      %v1932 = vpop.f32.mrb[0].mxu0
      %v1933 = vadd.f32 %v1820, %v1932
      %v1934 = vpop.f32.mrb[0].mxu0
      %v1935 = vpop.f32.mrb[0].mxu0
      %v1936 = vadd.f32 %v1823, %v1935
      %v1937 = vpop.f32.mrb[0].mxu0
      %1938 = vmatprep.mubr.bf16.mxu0 0
      %1939 = vmatmul.mubr.bf16.gmra.mrb[0].mxu0 %v1527
      %v1940 = vpop.f32.mrb[0].mxu0
      %v1941 = vadd.f32 %v1828, %v1940
      %v1942 = vpop.f32.mrb[0].mxu0
      %v1943 = vpop.f32.mrb[0].mxu0
      %v1944 = vadd.f32 %v1831, %v1943
      %v1945 = vpop.f32.mrb[0].mxu0
      %1946 = vdwg.mxu0
      %v1995 = vunpack.c.l.b16 %v1477
      %v1996 = vunpack.c.l.b16 %v1478
      %v1997 = vunpack.c.l.b16 %v1479
      %v1998 = vunpack.c.l.b16 %v1480
      %v1999 = vunpack.c.l.b16 %v1481
      %v2000 = vunpack.c.l.b16 %v1482
      %v2001 = vunpack.c.l.b16 %v1483
      %v2002 = vunpack.c.l.b16 %v1484
      %v2003 = vunpack.c.l.b16 %v1485
      %v2004 = vunpack.c.l.b16 %v1486
      %v2005 = vunpack.c.l.b16 %v1487
      %v2006 = vunpack.c.l.b16 %v1488
      %v2007 = vunpack.c.l.b16 %v1489
      %v2008 = vunpack.c.l.b16 %v1490
      %v2009 = vunpack.c.l.b16 %v1491
      %v2010 = vunpack.c.l.b16 %v1492
      %v2011 = vunpack.c.l.b16 %v1493
      %v2012 = vunpack.c.l.b16 %v1494
      %v2013 = vunpack.c.l.b16 %v1495
      %v2014 = vunpack.c.l.b16 %v1496
      %v2015 = vunpack.c.l.b16 %v1497
      %v2016 = vunpack.c.l.b16 %v1498
      %v2017 = vunpack.c.l.b16 %v1499
      %v2018 = vunpack.c.l.b16 %v1500
      %v2019 = vunpack.c.l.b16 %v1501
      %v2020 = vunpack.c.l.b16 %v1502
      %v2021 = vunpack.c.l.b16 %v1503
      %v2022 = vunpack.c.l.b16 %v1504
      %v2023 = vunpack.c.l.b16 %v1505
      %v2024 = vunpack.c.l.b16 %v1506
      %v2025 = vunpack.c.l.b16 %v1507
      %v2026 = vunpack.c.l.b16 %v1508
      %v2027 = vunpack.c.l.b16 %v1509
      %v2028 = vunpack.c.l.b16 %v1510
      %v2029 = vunpack.c.l.b16 %v1511
      %v2030 = vunpack.c.l.b16 %v1512
      %v2031 = vunpack.c.l.b16 %v1513
      %v2032 = vunpack.c.l.b16 %v1514
      %v2033 = vunpack.c.l.b16 %v1515
      %v2034 = vunpack.c.l.b16 %v1516
      %v2035 = vunpack.c.l.b16 %v1517
      %v2036 = vunpack.c.l.b16 %v1518
      %v2037 = vunpack.c.l.b16 %v1519
      %v2038 = vunpack.c.l.b16 %v1520
      %v2039 = vunpack.c.l.b16 %v1521
      %v2040 = vunpack.c.l.b16 %v1522
      %v2041 = vunpack.c.l.b16 %v1523
      %v2042 = vunpack.c.l.b16 %v1524
      %v2043 = vpack.c.b16 %v1996, %v1995
      %v2044 = vpack.c.b16 %v1998, %v1997
      %v2045 = vpack.c.b16 %v2000, %v1999
      %v2046 = vpack.c.b16 %v2002, %v2001
      %v2047 = vpack.c.b16 %v2004, %v2003
      %v2048 = vpack.c.b16 %v2006, %v2005
      %v2049 = vpack.c.b16 %v2008, %v2007
      %v2050 = vpack.c.b16 %v2010, %v2009
      %v2051 = vpack.c.b16 %v2012, %v2011
      %v2052 = vpack.c.b16 %v2014, %v2013
      %v2053 = vpack.c.b16 %v2016, %v2015
      %v2054 = vpack.c.b16 %v2018, %v2017
      %v2055 = vpack.c.b16 %v2020, %v2019
      %v2056 = vpack.c.b16 %v2022, %v2021
      %v2057 = vpack.c.b16 %v2024, %v2023
      %v2058 = vpack.c.b16 %v2026, %v2025
      %v2059 = vpack.c.b16 %v2028, %v2027
      %v2060 = vpack.c.b16 %v2030, %v2029
      %v2061 = vpack.c.b16 %v2032, %v2031
      %v2062 = vpack.c.b16 %v2034, %v2033
      %v2063 = vpack.c.b16 %v2036, %v2035
      %v2064 = vpack.c.b16 %v2038, %v2037
      %v2065 = vpack.c.b16 %v2040, %v2039
      %v2066 = vpack.c.b16 %v2042, %v2041
      %2091 = vmatprep.subr.bf16.mxu0 0
      %2092 = vmatpush1.bf16.msra.mxu0 %v2043
      %2093 = vmatprep.subr.bf16.mxu0 0
      %2094 = vmatpush1.bf16.msra.mxu0 %v2044
      %2095 = vmatprep.subr.bf16.mxu0 0
      %2096 = vmatpush1.bf16.msra.mxu0 %v2045
      %2097 = vmatprep.subr.bf16.mxu0 0
      %2098 = vmatpush1.bf16.msra.mxu0 %v2046
      %2099 = vmatprep.subr.bf16.mxu0 0
      %2100 = vmatpush1.bf16.msra.mxu0 %v2047
      %2101 = vmatprep.subr.bf16.mxu0 0
      %2102 = vmatpush1.bf16.msra.mxu0 %v2048
      %2103 = vmatprep.subr.bf16.mxu0 0
      %2104 = vmatpush1.bf16.msra.mxu0 %v2049
      %2105 = vmatprep.subr.bf16.mxu0 0
      %2106 = vmatpush1.bf16.msra.mxu0 %v2050
      %2107 = vmatprep.subr.bf16.mxu0 0
      %2108 = vmatpush1.bf16.msra.mxu0 %v2051
      %2109 = vmatprep.subr.bf16.mxu0 0
      %2110 = vmatpush1.bf16.msra.mxu0 %v2052
      %2111 = vmatprep.subr.bf16.mxu0 0
      %2112 = vmatpush1.bf16.msra.mxu0 %v2053
      %2113 = vmatprep.subr.bf16.mxu0 0
      %2114 = vmatpush1.bf16.msra.mxu0 %v2054
      %2115 = vmatprep.subr.bf16.mxu0 0
      %2116 = vmatpush1.bf16.msra.mxu0 %v2055
      %2117 = vmatprep.subr.bf16.mxu0 0
      %2118 = vmatpush1.bf16.msra.mxu0 %v2056
      %2119 = vmatprep.subr.bf16.mxu0 0
      %2120 = vmatpush1.bf16.msra.mxu0 %v2057
      %2121 = vmatprep.subr.bf16.mxu0 0
      %2122 = vmatpush1.bf16.msra.mxu0 %v2058
      %2123 = vmatprep.mubr.bf16.mxu0 %v1448
      %2124 = vmatmul.mubr.bf16.gmra.mrb[0].mxu0 %v1447
      %v2125 = vpop.f32.mrb[0].mxu0
      %v2126 = vadd.f32 %v1869, %v2125
      %v2127 = vpop.f32.mrb[0].mxu0
      %v2128 = vpop.f32.mrb[0].mxu0
      %v2129 = vadd.f32 %v1872, %v2128
      %v2130 = vpop.f32.mrb[0].mxu0
      %2131 = vmatprep.mubr.bf16.mxu0 %v1451
      %2132 = vmatmul.mubr.bf16.gmra.mrb[0].mxu0 %v1450
      %v2133 = vpop.f32.mrb[0].mxu0
      %v2134 = vadd.f32 %v1877, %v2133
      %v2135 = vpop.f32.mrb[0].mxu0
      %v2136 = vpop.f32.mrb[0].mxu0
      %v2137 = vadd.f32 %v1880, %v2136
      %v2138 = vpop.f32.mrb[0].mxu0
      %2139 = vmatprep.mubr.bf16.mxu0 %v1454
      %2140 = vmatmul.mubr.bf16.gmra.mrb[0].mxu0 %v1453
      %v2141 = vpop.f32.mrb[0].mxu0
      %v2142 = vadd.f32 %v1885, %v2141
      %v2143 = vpop.f32.mrb[0].mxu0
      %v2144 = vpop.f32.mrb[0].mxu0
      %v2145 = vadd.f32 %v1888, %v2144
      %v2146 = vpop.f32.mrb[0].mxu0
      %2147 = vmatprep.mubr.bf16.mxu0 %v1457
      %2148 = vmatmul.mubr.bf16.gmra.mrb[0].mxu0 %v1456
      %v2149 = vpop.f32.mrb[0].mxu0
      %v2150 = vadd.f32 %v1893, %v2149
      %v2151 = vpop.f32.mrb[0].mxu0
      %v2152 = vpop.f32.mrb[0].mxu0
      %v2153 = vadd.f32 %v1896, %v2152
      %v2154 = vpop.f32.mrb[0].mxu0
      %2155 = vmatprep.mubr.bf16.mxu0 %v1460
      %2156 = vmatmul.mubr.bf16.gmra.mrb[0].mxu0 %v1459
      %v2157 = vpop.f32.mrb[0].mxu0
      %v2158 = vadd.f32 %v1901, %v2157
      %v2159 = vpop.f32.mrb[0].mxu0
      %v2160 = vpop.f32.mrb[0].mxu0
      %v2161 = vadd.f32 %v1904, %v2160
      %v2162 = vpop.f32.mrb[0].mxu0
      %2163 = vmatprep.mubr.bf16.mxu0 %v1463
      %2164 = vmatmul.mubr.bf16.gmra.mrb[0].mxu0 %v1462
      %v2165 = vpop.f32.mrb[0].mxu0
      %v2166 = vadd.f32 %v1909, %v2165
      %v2167 = vpop.f32.mrb[0].mxu0
      %v2168 = vpop.f32.mrb[0].mxu0
      %v2169 = vadd.f32 %v1912, %v2168
      %v2170 = vpop.f32.mrb[0].mxu0
      %2171 = vmatprep.mubr.bf16.mxu0 %v1466
      %2172 = vmatmul.mubr.bf16.gmra.mrb[0].mxu0 %v1465
      %v2173 = vpop.f32.mrb[0].mxu0
      %v2174 = vadd.f32 %v1917, %v2173
      %v2175 = vpop.f32.mrb[0].mxu0
      %v2176 = vpop.f32.mrb[0].mxu0
      %v2177 = vadd.f32 %v1920, %v2176
      %v2178 = vpop.f32.mrb[0].mxu0
      %2179 = vmatprep.mubr.bf16.mxu0 %v1469
      %2180 = vmatmul.mubr.bf16.gmra.mrb[0].mxu0 %v1468
      %v2181 = vpop.f32.mrb[0].mxu0
      %v2182 = vadd.f32 %v1925, %v2181
      %v2183 = vpop.f32.mrb[0].mxu0
      %v2184 = vpop.f32.mrb[0].mxu0
      %v2185 = vadd.f32 %v1928, %v2184
      %v2186 = vpop.f32.mrb[0].mxu0
      %2187 = vmatprep.mubr.bf16.mxu0 %v1472
      %2188 = vmatmul.mubr.bf16.gmra.mrb[0].mxu0 %v1471
      %v2189 = vpop.f32.mrb[0].mxu0
      %v2190 = vadd.f32 %v1933, %v2189
      %v2191 = vpop.f32.mrb[0].mxu0
      %v2192 = vpop.f32.mrb[0].mxu0
      %v2193 = vadd.f32 %v1936, %v2192
      %v2194 = vpop.f32.mrb[0].mxu0
      %2195 = vmatprep.mubr.bf16.mxu0 %v1475
      %2196 = vmatmul.mubr.bf16.gmra.mrb[0].mxu0 %v1474
      %v2197 = vpop.f32.mrb[0].mxu0
      %v2198 = vadd.f32 %v1941, %v2197
      %v2199 = vpop.f32.mrb[0].mxu0
      %v2200 = vpop.f32.mrb[0].mxu0
      %v2201 = vadd.f32 %v1944, %v2200
      %v2202 = vpop.f32.mrb[0].mxu0
      %2203 = vdwg.mxu0
      %2204 = vmatprep.subr.bf16.mxu0 0
      %2205 = vmatpush1.bf16.msra.mxu0 %v2059
      %2206 = vmatprep.subr.bf16.mxu0 0
      %2207 = vmatpush1.bf16.msra.mxu0 %v2060
      %2208 = vmatprep.subr.bf16.mxu0 0
      %2209 = vmatpush1.bf16.msra.mxu0 %v2061
      %2210 = vmatprep.subr.bf16.mxu0 0
      %2211 = vmatpush1.bf16.msra.mxu0 %v2062
      %2212 = vmatprep.subr.bf16.mxu0 0
      %2213 = vmatpush1.bf16.msra.mxu0 %v2063
      %2214 = vmatprep.subr.bf16.mxu0 0
      %2215 = vmatpush1.bf16.msra.mxu0 %v2064
      %2216 = vmatprep.subr.bf16.mxu0 0
      %2217 = vmatpush1.bf16.msra.mxu0 %v2065
      %2218 = vmatprep.subr.bf16.mxu0 0
      %2219 = vmatpush1.bf16.msra.mxu0 %v2066
      %2220 = vmatprep.subr.bf16.mxu0 0
      %2221 = vmatpush1.bf16.msra.mxu0 0
      %2222 = vmatprep.subr.bf16.mxu0 0
      %2223 = vmatpush1.bf16.msra.mxu0 0
      %2224 = vmatprep.subr.bf16.mxu0 0
      %2225 = vmatpush1.bf16.msra.mxu0 0
      %2226 = vmatprep.subr.bf16.mxu0 0
      %2227 = vmatpush1.bf16.msra.mxu0 0
      %2228 = vmatprep.subr.bf16.mxu0 0
      %2229 = vmatpush1.bf16.msra.mxu0 0
      %2230 = vmatprep.subr.bf16.mxu0 0
      %2231 = vmatpush1.bf16.msra.mxu0 0
      %2232 = vmatprep.subr.bf16.mxu0 0
      %2233 = vmatpush1.bf16.msra.mxu0 0
      %2234 = vmatprep.subr.bf16.mxu0 0
      %2235 = vmatpush1.bf16.msra.mxu0 0
      %2236 = vmatprep.mubr.bf16.mxu0 0
      %2237 = vmatmul.mubr.bf16.gmra.mrb[0].mxu0 %v1449
      %v2238 = vpop.f32.mrb[0].mxu0
      %v2239 = vadd.f32 %v2126, %v2238
      %v2240 = vpop.f32.mrb[0].mxu0
      %v2241 = vpop.f32.mrb[0].mxu0
      %v2242 = vadd.f32 %v2129, %v2241
      %v2243 = vpop.f32.mrb[0].mxu0
      %2244 = vmatprep.mubr.bf16.mxu0 0
      %2245 = vmatmul.mubr.bf16.gmra.mrb[0].mxu0 %v1452
      %v2246 = vpop.f32.mrb[0].mxu0
      %v2247 = vadd.f32 %v2134, %v2246
      %v2248 = vpop.f32.mrb[0].mxu0
      %v2249 = vpop.f32.mrb[0].mxu0
      %v2250 = vadd.f32 %v2137, %v2249
      %v2251 = vpop.f32.mrb[0].mxu0
      %2252 = vmatprep.mubr.bf16.mxu0 0
      %2253 = vmatmul.mubr.bf16.gmra.mrb[0].mxu0 %v1455
      %v2254 = vpop.f32.mrb[0].mxu0
      %v2255 = vadd.f32 %v2142, %v2254
      %v2256 = vpop.f32.mrb[0].mxu0
      %v2257 = vpop.f32.mrb[0].mxu0
      %v2258 = vadd.f32 %v2145, %v2257
      %v2259 = vpop.f32.mrb[0].mxu0
      %2260 = vmatprep.mubr.bf16.mxu0 0
      %2261 = vmatmul.mubr.bf16.gmra.mrb[0].mxu0 %v1458
      %v2262 = vpop.f32.mrb[0].mxu0
      %v2263 = vadd.f32 %v2150, %v2262
      %v2264 = vpop.f32.mrb[0].mxu0
      %v2265 = vpop.f32.mrb[0].mxu0
      %v2266 = vadd.f32 %v2153, %v2265
      %v2267 = vpop.f32.mrb[0].mxu0
      %2268 = vmatprep.mubr.bf16.mxu0 0
      %2269 = vmatmul.mubr.bf16.gmra.mrb[0].mxu0 %v1461
      %v2270 = vpop.f32.mrb[0].mxu0
      %v2271 = vadd.f32 %v2158, %v2270
      %v2272 = vpop.f32.mrb[0].mxu0
      %v2273 = vpop.f32.mrb[0].mxu0
      %v2274 = vadd.f32 %v2161, %v2273
      %v2275 = vpop.f32.mrb[0].mxu0
      %2276 = vmatprep.mubr.bf16.mxu0 0
      %2277 = vmatmul.mubr.bf16.gmra.mrb[0].mxu0 %v1464
      %v2278 = vpop.f32.mrb[0].mxu0
      %v2279 = vadd.f32 %v2166, %v2278
      %v2280 = vpop.f32.mrb[0].mxu0
      %v2281 = vpop.f32.mrb[0].mxu0
      %v2282 = vadd.f32 %v2169, %v2281
      %v2283 = vpop.f32.mrb[0].mxu0
      %2284 = vmatprep.mubr.bf16.mxu0 0
      %2285 = vmatmul.mubr.bf16.gmra.mrb[0].mxu0 %v1467
      %v2286 = vpop.f32.mrb[0].mxu0
      %v2287 = vadd.f32 %v2174, %v2286
      %v2288 = vpop.f32.mrb[0].mxu0
      %v2289 = vpop.f32.mrb[0].mxu0
      %v2290 = vadd.f32 %v2177, %v2289
      %v2291 = vpop.f32.mrb[0].mxu0
      %2292 = vmatprep.mubr.bf16.mxu0 0
      %2293 = vmatmul.mubr.bf16.gmra.mrb[0].mxu0 %v1470
      %v2294 = vpop.f32.mrb[0].mxu0
      %v2295 = vadd.f32 %v2182, %v2294
      %v2296 = vpop.f32.mrb[0].mxu0
      %v2297 = vpop.f32.mrb[0].mxu0
      %v2298 = vadd.f32 %v2185, %v2297
      %v2299 = vpop.f32.mrb[0].mxu0
      %2300 = vmatprep.mubr.bf16.mxu0 0
      %2301 = vmatmul.mubr.bf16.gmra.mrb[0].mxu0 %v1473
      %v2302 = vpop.f32.mrb[0].mxu0
      %v2303 = vadd.f32 %v2190, %v2302
      %v2304 = vpop.f32.mrb[0].mxu0
      %v2305 = vpop.f32.mrb[0].mxu0
      %v2306 = vadd.f32 %v2193, %v2305
      %v2307 = vpop.f32.mrb[0].mxu0
      %2308 = vmatprep.mubr.bf16.mxu0 0
      %2309 = vmatmul.mubr.bf16.gmra.mrb[0].mxu0 %v1476
      %v2310 = vpop.f32.mrb[0].mxu0
      %v2311 = vadd.f32 %v2198, %v2310
      %v2312 = vpop.f32.mrb[0].mxu0
      %v2313 = vpop.f32.mrb[0].mxu0
      %v2314 = vadd.f32 %v2201, %v2313
      %v2315 = vpop.f32.mrb[0].mxu0
      %2316 = vdwg.mxu0
      %v2317 = vld [vmem:[#allocation2 + $0x30] sm:$0xff]
      %v2318 = vld [vmem:[#allocation2 + $0x38] sm:$0xff]
      %v2319 = vld [vmem:[#allocation2 + $0x40] sm:$0xff]
      %v2320 = vld [vmem:[#allocation2 + $0x48] sm:$0xff]
      %v2321 = vld [vmem:[#allocation2 + $0x50] sm:$0xff]
      %v2322 = vld [vmem:[#allocation2 + $0x58] sm:$0xff]
      %v2323 = vld [vmem:[#allocation2 + $0x60] sm:$0xff]
      %v2324 = vld [vmem:[#allocation2 + $0x68] sm:$0xff]
      %v2325 = vld [vmem:[#allocation2 + $0x70] sm:$0xff]
      %v2326 = vld [vmem:[#allocation2 + $0x78] sm:$0xff]
      %v2327 = vld [vmem:[#allocation2 + $0x80] sm:$0xff]
      %v2328 = vld [vmem:[#allocation2 + $0x88] sm:$0xff]
      %v2329 = vld [vmem:[#allocation2 + $0x90] sm:$0xff]
      %v2330 = vld [vmem:[#allocation2 + $0x98] sm:$0xff]
      %v2331 = vld [vmem:[#allocation2 + $0xa0] sm:$0xff]
      %v2332 = vld [vmem:[#allocation2 + $0xa8] sm:$0xff]
      %v2333 = vld [vmem:[#allocation2 + $0xb0] sm:$0xff]
      %v2334 = vld [vmem:[#allocation2 + $0xb8] sm:$0xff]
      %v2335 = vld [vmem:[#allocation2 + $0xc0] sm:$0xff]
      %v2336 = vld [vmem:[#allocation2 + $0xc8] sm:$0xff]
      %v2337 = vld [vmem:[#allocation2 + $0xd0] sm:$0xff]
      %v2338 = vld [vmem:[#allocation2 + $0xd8] sm:$0xff]
      %v2339 = vld [vmem:[#allocation2 + $0xe0] sm:$0xff]
      %v2340 = vld [vmem:[#allocation2 + $0xe8] sm:$0xff]
      %v2341 = vld [vmem:[#allocation2 + $0xf0] sm:$0xff]
      %v2342 = vld [vmem:[#allocation2 + $0xf8] sm:$0xff]
      %v2343 = vld [vmem:[#allocation2 + $0x100] sm:$0xff]
      %v2344 = vld [vmem:[#allocation2 + $0x108] sm:$0xff]
      %v2345 = vld [vmem:[#allocation2 + $0x110] sm:$0xff]
      %v2346 = vld [vmem:[#allocation2 + $0x118] sm:$0xff]
      %s2347 = scalar_lea.vmem %s3, 384
      %v2348 = vld [vmem:[%s2347] sm:$0xf]
      %v2349 = vld [vmem:[%s2347 + $0x4] sm:$0xf]
      %v2350 = vld [vmem:[%s2347 + $0x8] sm:$0xf]
      %v2351 = vld [vmem:[%s2347 + $0xc] sm:$0xf]
      %v2352 = vld [vmem:[%s2347 + $0x10] sm:$0xf]
      %v2353 = vld [vmem:[%s2347 + $0x14] sm:$0xf]
      %v2354 = vld [vmem:[%s2347 + $0x18] sm:$0xf]
      %v2355 = vld [vmem:[%s2347 + $0x1c] sm:$0xf]
      %v2356 = vld [vmem:[%s2347 + $0x20] sm:$0xf]
      %v2357 = vld [vmem:[%s2347 + $0x24] sm:$0xf]
      %v2358 = vld [vmem:[%s2347 + $0x28] sm:$0xf]
      %v2359 = vld [vmem:[%s2347 + $0x2c] sm:$0xf]
      %v2360 = vld [vmem:[%s2347 + $0x30] sm:$0xf]
      %v2361 = vld [vmem:[%s2347 + $0x34] sm:$0xf]
      %v2362 = vld [vmem:[%s2347 + $0x38] sm:$0xf]
      %v2363 = vld [vmem:[%s2347 + $0x3c] sm:$0xf]
      %v2364 = vld [vmem:[%s2347 + $0x40] sm:$0xf]
      %v2365 = vld [vmem:[%s2347 + $0x44] sm:$0xf]
      %v2366 = vld [vmem:[%s2347 + $0x48] sm:$0xf]
      %v2367 = vld [vmem:[%s2347 + $0x4c] sm:$0xf]
      %v2368 = vld [vmem:[%s2347 + $0x50] sm:$0xf]
      %v2369 = vld [vmem:[%s2347 + $0x54] sm:$0xf]
      %v2370 = vld [vmem:[%s2347 + $0x58] sm:$0xf]
      %v2371 = vld [vmem:[%s2347 + $0x5c] sm:$0xf]
      %v2372 = vld [vmem:[%s2347 + $0x60] sm:$0xf]
      %v2373 = vld [vmem:[%s2347 + $0x64] sm:$0xf]
      %v2374 = vld [vmem:[%s2347 + $0x68] sm:$0xf]
      %v2375 = vld [vmem:[%s2347 + $0x6c] sm:$0xf]
      %v2376 = vld [vmem:[%s2347 + $0x70] sm:$0xf]
      %v2377 = vld [vmem:[%s2347 + $0x74] sm:$0xf]
      %v2378 = vld [vmem:[%s2347 + $0x78] sm:$0xf]
      %v2379 = vld [vmem:[%s2347 + $0x7c] sm:$0xf]
      %v2380 = vld [vmem:[%s2347 + $0x80] sm:$0xf]
      %v2381 = vld [vmem:[%s2347 + $0x84] sm:$0xf]
      %v2382 = vld [vmem:[%s2347 + $0x88] sm:$0xf]
      %v2383 = vld [vmem:[%s2347 + $0x8c] sm:$0xf]
      %v2384 = vld [vmem:[%s2347 + $0x90] sm:$0xf]
      %v2385 = vld [vmem:[%s2347 + $0x94] sm:$0xf]
      %v2386 = vld [vmem:[%s2347 + $0x98] sm:$0xf]
      %v2387 = vld [vmem:[%s2347 + $0x9c] sm:$0xf]
      %v2388 = vld [vmem:[%s2347 + $0xa0] sm:$0xf]
      %v2389 = vld [vmem:[%s2347 + $0xa4] sm:$0xf]
      %v2390 = vld [vmem:[%s2347 + $0xa8] sm:$0xf]
      %v2391 = vld [vmem:[%s2347 + $0xac] sm:$0xf]
      %v2392 = vld [vmem:[%s2347 + $0xb0] sm:$0xf]
      %v2393 = vld [vmem:[%s2347 + $0xb4] sm:$0xf]
      %v2394 = vld [vmem:[%s2347 + $0xb8] sm:$0xf]
      %v2395 = vld [vmem:[%s2347 + $0xbc] sm:$0xf]
      %v2444 = vunpack.c.l.b16 %v2348
      %v2445 = vunpack.c.l.b16 %v2349
      %v2446 = vunpack.c.l.b16 %v2350
      %v2447 = vunpack.c.l.b16 %v2351
      %v2448 = vunpack.c.l.b16 %v2352
      %v2449 = vunpack.c.l.b16 %v2353
      %v2450 = vunpack.c.l.b16 %v2354
      %v2451 = vunpack.c.l.b16 %v2355
      %v2452 = vunpack.c.l.b16 %v2356
      %v2453 = vunpack.c.l.b16 %v2357
      %v2454 = vunpack.c.l.b16 %v2358
      %v2455 = vunpack.c.l.b16 %v2359
      %v2456 = vunpack.c.l.b16 %v2360
      %v2457 = vunpack.c.l.b16 %v2361
      %v2458 = vunpack.c.l.b16 %v2362
      %v2459 = vunpack.c.l.b16 %v2363
      %v2460 = vunpack.c.l.b16 %v2364
      %v2461 = vunpack.c.l.b16 %v2365
      %v2462 = vunpack.c.l.b16 %v2366
      %v2463 = vunpack.c.l.b16 %v2367
      %v2464 = vunpack.c.l.b16 %v2368
      %v2465 = vunpack.c.l.b16 %v2369
      %v2466 = vunpack.c.l.b16 %v2370
      %v2467 = vunpack.c.l.b16 %v2371
      %v2468 = vunpack.c.l.b16 %v2372
      %v2469 = vunpack.c.l.b16 %v2373
      %v2470 = vunpack.c.l.b16 %v2374
      %v2471 = vunpack.c.l.b16 %v2375
      %v2472 = vunpack.c.l.b16 %v2376
      %v2473 = vunpack.c.l.b16 %v2377
      %v2474 = vunpack.c.l.b16 %v2378
      %v2475 = vunpack.c.l.b16 %v2379
      %v2476 = vunpack.c.l.b16 %v2380
      %v2477 = vunpack.c.l.b16 %v2381
      %v2478 = vunpack.c.l.b16 %v2382
      %v2479 = vunpack.c.l.b16 %v2383
      %v2480 = vunpack.c.l.b16 %v2384
      %v2481 = vunpack.c.l.b16 %v2385
      %v2482 = vunpack.c.l.b16 %v2386
      %v2483 = vunpack.c.l.b16 %v2387
      %v2484 = vunpack.c.l.b16 %v2388
      %v2485 = vunpack.c.l.b16 %v2389
      %v2486 = vunpack.c.l.b16 %v2390
      %v2487 = vunpack.c.l.b16 %v2391
      %v2488 = vunpack.c.l.b16 %v2392
      %v2489 = vunpack.c.l.b16 %v2393
      %v2490 = vunpack.c.l.b16 %v2394
      %v2491 = vunpack.c.l.b16 %v2395
      %v2492 = vpack.c.b16 %v2445, %v2444
      %v2493 = vpack.c.b16 %v2447, %v2446
      %v2494 = vpack.c.b16 %v2449, %v2448
      %v2495 = vpack.c.b16 %v2451, %v2450
      %v2496 = vpack.c.b16 %v2453, %v2452
      %v2497 = vpack.c.b16 %v2455, %v2454
      %v2498 = vpack.c.b16 %v2457, %v2456
      %v2499 = vpack.c.b16 %v2459, %v2458
      %v2500 = vpack.c.b16 %v2461, %v2460
      %v2501 = vpack.c.b16 %v2463, %v2462
      %v2502 = vpack.c.b16 %v2465, %v2464
      %v2503 = vpack.c.b16 %v2467, %v2466
      %v2504 = vpack.c.b16 %v2469, %v2468
      %v2505 = vpack.c.b16 %v2471, %v2470
      %v2506 = vpack.c.b16 %v2473, %v2472
      %v2507 = vpack.c.b16 %v2475, %v2474
      %v2508 = vpack.c.b16 %v2477, %v2476
      %v2509 = vpack.c.b16 %v2479, %v2478
      %v2510 = vpack.c.b16 %v2481, %v2480
      %v2511 = vpack.c.b16 %v2483, %v2482
      %v2512 = vpack.c.b16 %v2485, %v2484
      %v2513 = vpack.c.b16 %v2487, %v2486
      %v2514 = vpack.c.b16 %v2489, %v2488
      %v2515 = vpack.c.b16 %v2491, %v2490
      %2540 = vmatprep.subr.bf16.mxu0 0
      %2541 = vmatpush1.bf16.msra.mxu0 %v2492
      %2542 = vmatprep.subr.bf16.mxu0 0
      %2543 = vmatpush1.bf16.msra.mxu0 %v2493
      %2544 = vmatprep.subr.bf16.mxu0 0
      %2545 = vmatpush1.bf16.msra.mxu0 %v2494
      %2546 = vmatprep.subr.bf16.mxu0 0
      %2547 = vmatpush1.bf16.msra.mxu0 %v2495
      %2548 = vmatprep.subr.bf16.mxu0 0
      %2549 = vmatpush1.bf16.msra.mxu0 %v2496
      %2550 = vmatprep.subr.bf16.mxu0 0
      %2551 = vmatpush1.bf16.msra.mxu0 %v2497
      %2552 = vmatprep.subr.bf16.mxu0 0
      %2553 = vmatpush1.bf16.msra.mxu0 %v2498
      %2554 = vmatprep.subr.bf16.mxu0 0
      %2555 = vmatpush1.bf16.msra.mxu0 %v2499
      %2556 = vmatprep.subr.bf16.mxu0 0
      %2557 = vmatpush1.bf16.msra.mxu0 %v2500
      %2558 = vmatprep.subr.bf16.mxu0 0
      %2559 = vmatpush1.bf16.msra.mxu0 %v2501
      %2560 = vmatprep.subr.bf16.mxu0 0
      %2561 = vmatpush1.bf16.msra.mxu0 %v2502
      %2562 = vmatprep.subr.bf16.mxu0 0
      %2563 = vmatpush1.bf16.msra.mxu0 %v2503
      %2564 = vmatprep.subr.bf16.mxu0 0
      %2565 = vmatpush1.bf16.msra.mxu0 %v2504
      %2566 = vmatprep.subr.bf16.mxu0 0
      %2567 = vmatpush1.bf16.msra.mxu0 %v2505
      %2568 = vmatprep.subr.bf16.mxu0 0
      %2569 = vmatpush1.bf16.msra.mxu0 %v2506
      %2570 = vmatprep.subr.bf16.mxu0 0
      %2571 = vmatpush1.bf16.msra.mxu0 %v2507
      %2572 = vmatprep.mubr.bf16.mxu0 %v2318
      %2573 = vmatmul.mubr.bf16.gmra.mrb[0].mxu0 %v2317
      %v2574 = vpop.f32.mrb[0].mxu0
      %v2575 = vadd.f32 0.0, %v2574
      %v2576 = vpop.f32.mrb[0].mxu0
      %v2577 = vpop.f32.mrb[0].mxu0
      %v2578 = vadd.f32 0.0, %v2577
      %v2579 = vpop.f32.mrb[0].mxu0
      %2580 = vmatprep.mubr.bf16.mxu0 %v2321
      %2581 = vmatmul.mubr.bf16.gmra.mrb[0].mxu0 %v2320
      %v2582 = vpop.f32.mrb[0].mxu0
      %v2583 = vadd.f32 0.0, %v2582
      %v2584 = vpop.f32.mrb[0].mxu0
      %v2585 = vpop.f32.mrb[0].mxu0
      %v2586 = vadd.f32 0.0, %v2585
      %v2587 = vpop.f32.mrb[0].mxu0
      %2588 = vmatprep.mubr.bf16.mxu0 %v2324
      %2589 = vmatmul.mubr.bf16.gmra.mrb[0].mxu0 %v2323
      %v2590 = vpop.f32.mrb[0].mxu0
      %v2591 = vadd.f32 0.0, %v2590
      %v2592 = vpop.f32.mrb[0].mxu0
      %v2593 = vpop.f32.mrb[0].mxu0
      %v2594 = vadd.f32 0.0, %v2593
      %v2595 = vpop.f32.mrb[0].mxu0
      %2596 = vmatprep.mubr.bf16.mxu0 %v2327
      %2597 = vmatmul.mubr.bf16.gmra.mrb[0].mxu0 %v2326
      %v2598 = vpop.f32.mrb[0].mxu0
      %v2599 = vadd.f32 0.0, %v2598
      %v2600 = vpop.f32.mrb[0].mxu0
      %v2601 = vpop.f32.mrb[0].mxu0
      %v2602 = vadd.f32 0.0, %v2601
      %v2603 = vpop.f32.mrb[0].mxu0
      %2604 = vmatprep.mubr.bf16.mxu0 %v2330
      %2605 = vmatmul.mubr.bf16.gmra.mrb[0].mxu0 %v2329
      %v2606 = vpop.f32.mrb[0].mxu0
      %v2607 = vadd.f32 0.0, %v2606
      %v2608 = vpop.f32.mrb[0].mxu0
      %v2609 = vpop.f32.mrb[0].mxu0
      %v2610 = vadd.f32 0.0, %v2609
      %v2611 = vpop.f32.mrb[0].mxu0
      %2612 = vmatprep.mubr.bf16.mxu0 %v2333
      %2613 = vmatmul.mubr.bf16.gmra.mrb[0].mxu0 %v2332
      %v2614 = vpop.f32.mrb[0].mxu0
      %v2615 = vadd.f32 0.0, %v2614
      %v2616 = vpop.f32.mrb[0].mxu0
      %v2617 = vpop.f32.mrb[0].mxu0
      %v2618 = vadd.f32 0.0, %v2617
      %v2619 = vpop.f32.mrb[0].mxu0
      %2620 = vmatprep.mubr.bf16.mxu0 %v2336
      %2621 = vmatmul.mubr.bf16.gmra.mrb[0].mxu0 %v2335
      %v2622 = vpop.f32.mrb[0].mxu0
      %v2623 = vadd.f32 0.0, %v2622
      %v2624 = vpop.f32.mrb[0].mxu0
      %v2625 = vpop.f32.mrb[0].mxu0
      %v2626 = vadd.f32 0.0, %v2625
      %v2627 = vpop.f32.mrb[0].mxu0
      %2628 = vmatprep.mubr.bf16.mxu0 %v2339
      %2629 = vmatmul.mubr.bf16.gmra.mrb[0].mxu0 %v2338
      %v2630 = vpop.f32.mrb[0].mxu0
      %v2631 = vadd.f32 0.0, %v2630
      %v2632 = vpop.f32.mrb[0].mxu0
      %v2633 = vpop.f32.mrb[0].mxu0
      %v2634 = vadd.f32 0.0, %v2633
      %v2635 = vpop.f32.mrb[0].mxu0
      %2636 = vmatprep.mubr.bf16.mxu0 %v2342
      %2637 = vmatmul.mubr.bf16.gmra.mrb[0].mxu0 %v2341
      %v2638 = vpop.f32.mrb[0].mxu0
      %v2639 = vadd.f32 0.0, %v2638
      %v2640 = vpop.f32.mrb[0].mxu0
      %v2641 = vpop.f32.mrb[0].mxu0
      %v2642 = vadd.f32 0.0, %v2641
      %v2643 = vpop.f32.mrb[0].mxu0
      %2644 = vmatprep.mubr.bf16.mxu0 %v2345
      %2645 = vmatmul.mubr.bf16.gmra.mrb[0].mxu0 %v2344
      %v2646 = vpop.f32.mrb[0].mxu0
      %v2647 = vadd.f32 0.0, %v2646
      %v2648 = vpop.f32.mrb[0].mxu0
      %v2649 = vpop.f32.mrb[0].mxu0
      %v2650 = vadd.f32 0.0, %v2649
      %v2651 = vpop.f32.mrb[0].mxu0
      %2652 = vdwg.mxu0
      %2653 = vmatprep.subr.bf16.mxu0 0
      %2654 = vmatpush1.bf16.msra.mxu0 %v2508
      %2655 = vmatprep.subr.bf16.mxu0 0
      %2656 = vmatpush1.bf16.msra.mxu0 %v2509
      %2657 = vmatprep.subr.bf16.mxu0 0
      %2658 = vmatpush1.bf16.msra.mxu0 %v2510
      %2659 = vmatprep.subr.bf16.mxu0 0
      %2660 = vmatpush1.bf16.msra.mxu0 %v2511
      %2661 = vmatprep.subr.bf16.mxu0 0
      %2662 = vmatpush1.bf16.msra.mxu0 %v2512
      %2663 = vmatprep.subr.bf16.mxu0 0
      %2664 = vmatpush1.bf16.msra.mxu0 %v2513
      %2665 = vmatprep.subr.bf16.mxu0 0
      %2666 = vmatpush1.bf16.msra.mxu0 %v2514
      %2667 = vmatprep.subr.bf16.mxu0 0
      %2668 = vmatpush1.bf16.msra.mxu0 %v2515
      %2669 = vmatprep.subr.bf16.mxu0 0
      %2670 = vmatpush1.bf16.msra.mxu0 0
      %2671 = vmatprep.subr.bf16.mxu0 0
      %2672 = vmatpush1.bf16.msra.mxu0 0
      %2673 = vmatprep.subr.bf16.mxu0 0
      %2674 = vmatpush1.bf16.msra.mxu0 0
      %2675 = vmatprep.subr.bf16.mxu0 0
      %2676 = vmatpush1.bf16.msra.mxu0 0
      %2677 = vmatprep.subr.bf16.mxu0 0
      %2678 = vmatpush1.bf16.msra.mxu0 0
      %2679 = vmatprep.subr.bf16.mxu0 0
      %2680 = vmatpush1.bf16.msra.mxu0 0
      %2681 = vmatprep.subr.bf16.mxu0 0
      %2682 = vmatpush1.bf16.msra.mxu0 0
      %2683 = vmatprep.subr.bf16.mxu0 0
      %2684 = vmatpush1.bf16.msra.mxu0 0
      %2685 = vmatprep.mubr.bf16.mxu0 0
      %2686 = vmatmul.mubr.bf16.gmra.mrb[0].mxu0 %v2319
      %v2687 = vpop.f32.mrb[0].mxu0
      %v2688 = vadd.f32 %v2575, %v2687
      %v2689 = vpop.f32.mrb[0].mxu0
      %v2690 = vpop.f32.mrb[0].mxu0
      %v2691 = vadd.f32 %v2578, %v2690
      %v2692 = vpop.f32.mrb[0].mxu0
      %2693 = vmatprep.mubr.bf16.mxu0 0
      %2694 = vmatmul.mubr.bf16.gmra.mrb[0].mxu0 %v2322
      %v2695 = vpop.f32.mrb[0].mxu0
      %v2696 = vadd.f32 %v2583, %v2695
      %v2697 = vpop.f32.mrb[0].mxu0
      %v2698 = vpop.f32.mrb[0].mxu0
      %v2699 = vadd.f32 %v2586, %v2698
      %v2700 = vpop.f32.mrb[0].mxu0
      %2701 = vmatprep.mubr.bf16.mxu0 0
      %2702 = vmatmul.mubr.bf16.gmra.mrb[0].mxu0 %v2325
      %v2703 = vpop.f32.mrb[0].mxu0
      %v2704 = vadd.f32 %v2591, %v2703
      %v2705 = vpop.f32.mrb[0].mxu0
      %v2706 = vpop.f32.mrb[0].mxu0
      %v2707 = vadd.f32 %v2594, %v2706
      %v2708 = vpop.f32.mrb[0].mxu0
      %2709 = vmatprep.mubr.bf16.mxu0 0
      %2710 = vmatmul.mubr.bf16.gmra.mrb[0].mxu0 %v2328
      %v2711 = vpop.f32.mrb[0].mxu0
      %v2712 = vadd.f32 %v2599, %v2711
      %v2713 = vpop.f32.mrb[0].mxu0
      %v2714 = vpop.f32.mrb[0].mxu0
      %v2715 = vadd.f32 %v2602, %v2714
      %v2716 = vpop.f32.mrb[0].mxu0
      %2717 = vmatprep.mubr.bf16.mxu0 0
      %2718 = vmatmul.mubr.bf16.gmra.mrb[0].mxu0 %v2331
      %v2719 = vpop.f32.mrb[0].mxu0
      %v2720 = vadd.f32 %v2607, %v2719
      %v2721 = vpop.f32.mrb[0].mxu0
      %v2722 = vpop.f32.mrb[0].mxu0
      %v2723 = vadd.f32 %v2610, %v2722
      %v2724 = vpop.f32.mrb[0].mxu0
      %2725 = vmatprep.mubr.bf16.mxu0 0
      %2726 = vmatmul.mubr.bf16.gmra.mrb[0].mxu0 %v2334
      %v2727 = vpop.f32.mrb[0].mxu0
      %v2728 = vadd.f32 %v2615, %v2727
      %v2729 = vpop.f32.mrb[0].mxu0
      %v2730 = vpop.f32.mrb[0].mxu0
      %v2731 = vadd.f32 %v2618, %v2730
      %v2732 = vpop.f32.mrb[0].mxu0
      %2733 = vmatprep.mubr.bf16.mxu0 0
      %2734 = vmatmul.mubr.bf16.gmra.mrb[0].mxu0 %v2337
      %v2735 = vpop.f32.mrb[0].mxu0
      %v2736 = vadd.f32 %v2623, %v2735
      %v2737 = vpop.f32.mrb[0].mxu0
      %v2738 = vpop.f32.mrb[0].mxu0
      %v2739 = vadd.f32 %v2626, %v2738
      %v2740 = vpop.f32.mrb[0].mxu0
      %2741 = vmatprep.mubr.bf16.mxu0 0
      %2742 = vmatmul.mubr.bf16.gmra.mrb[0].mxu0 %v2340
      %v2743 = vpop.f32.mrb[0].mxu0
      %v2744 = vadd.f32 %v2631, %v2743
      %v2745 = vpop.f32.mrb[0].mxu0
      %v2746 = vpop.f32.mrb[0].mxu0
      %v2747 = vadd.f32 %v2634, %v2746
      %v2748 = vpop.f32.mrb[0].mxu0
      %2749 = vmatprep.mubr.bf16.mxu0 0
      %2750 = vmatmul.mubr.bf16.gmra.mrb[0].mxu0 %v2343
      %v2751 = vpop.f32.mrb[0].mxu0
      %v2752 = vadd.f32 %v2639, %v2751
      %v2753 = vpop.f32.mrb[0].mxu0
      %v2754 = vpop.f32.mrb[0].mxu0
      %v2755 = vadd.f32 %v2642, %v2754
      %v2756 = vpop.f32.mrb[0].mxu0
      %2757 = vmatprep.mubr.bf16.mxu0 0
      %2758 = vmatmul.mubr.bf16.gmra.mrb[0].mxu0 %v2346
      %v2759 = vpop.f32.mrb[0].mxu0
      %v2760 = vadd.f32 %v2647, %v2759
      %v2761 = vpop.f32.mrb[0].mxu0
      %v2762 = vpop.f32.mrb[0].mxu0
      %v2763 = vadd.f32 %v2650, %v2762
      %v2764 = vpop.f32.mrb[0].mxu0
      %2765 = vdwg.mxu0
      %v2766 = vadd.f32 %v2239, %v2688
      %v2767 = vadd.f32 %v2242, %v2691
      %v2768 = vadd.f32 %v2247, %v2696
      %v2769 = vadd.f32 %v2250, %v2699
      %v2770 = vadd.f32 %v2255, %v2704
      %v2771 = vadd.f32 %v2258, %v2707
      %v2772 = vadd.f32 %v2263, %v2712
      %v2773 = vadd.f32 %v2266, %v2715
      %v2774 = vadd.f32 %v2271, %v2720
      %v2775 = vadd.f32 %v2274, %v2723
      %v2776 = vadd.f32 %v2279, %v2728
      %v2777 = vadd.f32 %v2282, %v2731
      %v2778 = vadd.f32 %v2287, %v2736
      %v2779 = vadd.f32 %v2290, %v2739
      %v2780 = vadd.f32 %v2295, %v2744
      %v2781 = vadd.f32 %v2298, %v2747
      %v2782 = vadd.f32 %v2303, %v2752
      %v2783 = vadd.f32 %v2306, %v2755
      %v2784 = vadd.f32 %v2311, %v2760
      %v2785 = vadd.f32 %v2314, %v2763
      %v2786 = vld [vmem:[%s4] sm:$0x1]
      %v2788 = vlaneseq
      %v2789 = vshrl.u32 %v2788, 7
      %v2790 = vsub.s32 0, %v2789
      %v2791 = vrot.slane %v2786, %v2790
      %v2793 = vadd.f32 %v2766, %v2791
      %v2794 = vadd.f32 %v2767, %v2791
      %v2795 = vadd.f32 %v2768, %v2791
      %v2796 = vadd.f32 %v2769, %v2791
      %v2797 = vadd.f32 %v2770, %v2791
      %v2798 = vadd.f32 %v2771, %v2791
      %v2799 = vadd.f32 %v2772, %v2791
      %v2800 = vadd.f32 %v2773, %v2791
      %v2801 = vadd.f32 %v2774, %v2791
      %v2802 = vadd.f32 %v2775, %v2791
      %v2803 = vadd.f32 %v2776, %v2791
      %v2804 = vadd.f32 %v2777, %v2791
      %v2805 = vadd.f32 %v2778, %v2791
      %v2806 = vadd.f32 %v2779, %v2791
      %v2807 = vadd.f32 %v2780, %v2791
      %v2808 = vadd.f32 %v2781, %v2791
      %v2809 = vadd.f32 %v2782, %v2791
      %v2810 = vadd.f32 %v2783, %v2791
      %v2811 = vadd.f32 %v2784, %v2791
      %v2812 = vadd.f32 %v2785, %v2791
      %v2813 = vmax.f32 %v2793, 0.0
      %v2814 = vmax.f32 %v2794, 0.0
      %v2815 = vmax.f32 %v2795, 0.0
      %v2816 = vmax.f32 %v2796, 0.0
      %v2817 = vmax.f32 %v2797, 0.0
      %v2818 = vmax.f32 %v2798, 0.0
      %v2819 = vmax.f32 %v2799, 0.0
      %v2820 = vmax.f32 %v2800, 0.0
      %v2821 = vmax.f32 %v2801, 0.0
      %v2822 = vmax.f32 %v2802, 0.0
      %v2823 = vmax.f32 %v2803, 0.0
      %v2824 = vmax.f32 %v2804, 0.0
      %v2825 = vmax.f32 %v2805, 0.0
      %v2826 = vmax.f32 %v2806, 0.0
      %v2827 = vmax.f32 %v2807, 0.0
      %v2828 = vmax.f32 %v2808, 0.0
      %v2829 = vmax.f32 %v2809, 0.0
      %v2830 = vmax.f32 %v2810, 0.0
      %v2831 = vmax.f32 %v2811, 0.0
      %v2832 = vmax.f32 %v2812, 0.0
      %v2833 = vpack.c.bf16 %v2814, %v2813
      %v2834 = vpack.c.bf16 %v2816, %v2815
      %v2835 = vpack.c.bf16 %v2818, %v2817
      %v2836 = vpack.c.bf16 %v2820, %v2819
      %v2837 = vpack.c.bf16 %v2822, %v2821
      %v2838 = vpack.c.bf16 %v2824, %v2823
      %v2839 = vpack.c.bf16 %v2826, %v2825
      %v2840 = vpack.c.bf16 %v2828, %v2827
      %v2841 = vpack.c.bf16 %v2830, %v2829
      %v2842 = vpack.c.bf16 %v2832, %v2831
      %2843 = vst [vmem:[#allocation3 + $0x8] sm:$0xff] %v2833
      %2844 = vst [vmem:[#allocation3 + $0x20] sm:$0xff] %v2834
      %2845 = vst [vmem:[#allocation3 + $0x38] sm:$0xff] %v2835
      %2846 = vst [vmem:[#allocation3 + $0x50] sm:$0xff] %v2836
      %2847 = vst [vmem:[#allocation3 + $0x68] sm:$0xff] %v2837
      %2848 = vst [vmem:[#allocation3 + $0x80] sm:$0xff] %v2838
      %2849 = vst [vmem:[#allocation3 + $0x98] sm:$0xff] %v2839
      %2850 = vst [vmem:[#allocation3 + $0xb0] sm:$0xff] %v2840
      %2851 = vst [vmem:[#allocation3 + $0xc8] sm:$0xff] %v2841
      %2852 = vst [vmem:[#allocation3 + $0xe0] sm:$0xff] %v2842
      %v2854 = vshrl.u32 %v2833, 16
      %v2856 = vrot.slane %v2854, 7
      %v2857 = vshll.u32 %v2833, 16
      %v2859 = vor.u32 %v2856, %v2857
      %v2861 = vshrl.u32 %v2834, 16
      %v2863 = vrot.slane %v2861, 7
      %v2864 = vshll.u32 %v2834, 16
      %v2866 = vor.u32 %v2863, %v2864
      %v2867 = vsel %vm929, %v2856, %v2866
      %v2869 = vshrl.u32 %v2835, 16
      %v2871 = vrot.slane %v2869, 7
      %v2872 = vshll.u32 %v2835, 16
      %v2874 = vor.u32 %v2871, %v2872
      %v2875 = vsel %vm929, %v2863, %v2874
      %v2877 = vshrl.u32 %v2836, 16
      %v2879 = vrot.slane %v2877, 7
      %v2880 = vshll.u32 %v2836, 16
      %v2882 = vor.u32 %v2879, %v2880
      %v2883 = vsel %vm929, %v2871, %v2882
      %v2885 = vshrl.u32 %v2837, 16
      %v2887 = vrot.slane %v2885, 7
      %v2888 = vshll.u32 %v2837, 16
      %v2890 = vor.u32 %v2887, %v2888
      %v2891 = vsel %vm929, %v2879, %v2890
      %v2893 = vshrl.u32 %v2838, 16
      %v2895 = vrot.slane %v2893, 7
      %v2896 = vshll.u32 %v2838, 16
      %v2898 = vor.u32 %v2895, %v2896
      %v2899 = vsel %vm929, %v2887, %v2898
      %v2901 = vshrl.u32 %v2839, 16
      %v2903 = vrot.slane %v2901, 7
      %v2904 = vshll.u32 %v2839, 16
      %v2906 = vor.u32 %v2903, %v2904
      %v2907 = vsel %vm929, %v2895, %v2906
      %v2909 = vshrl.u32 %v2840, 16
      %v2911 = vrot.slane %v2909, 7
      %v2912 = vshll.u32 %v2840, 16
      %v2914 = vor.u32 %v2911, %v2912
      %v2915 = vsel %vm929, %v2903, %v2914
      %v2917 = vshrl.u32 %v2841, 16
      %v2919 = vrot.slane %v2917, 7
      %v2920 = vshll.u32 %v2841, 16
      %v2922 = vor.u32 %v2919, %v2920
      %v2923 = vsel %vm929, %v2911, %v2922
      %v2925 = vshrl.u32 %v2842, 16
      %v2927 = vrot.slane %v2925, 7
      %v2928 = vshll.u32 %v2842, 16
      %v2930 = vor.u32 %v2927, %v2928
      %v2931 = vsel %vm929, %v2919, %v2930
      %v2942 = vsel %vm1038, 0, %v2859
      %v2943 = vsel %vm1172, %v2942, 0
      %v2944 = vsel %vm1173, %v2867, 0
      %v2945 = vsel %vm1174, %v2875, 0
      %v2946 = vsel %vm1175, %v2883, 0
      %v2947 = vsel %vm1176, %v2891, 0
      %v2948 = vsel %vm1177, %v2899, 0
      %v2949 = vsel %vm1178, %v2907, 0
      %v2950 = vsel %vm1179, %v2915, 0
      %v2951 = vsel %vm1180, %v2923, 0
      %v2952 = vsel %vm1181, %v2931, 0
      %2953 = vst [vmem:[#allocation3] sm:$0xff] %v2943
      %2954 = vst [vmem:[#allocation3 + $0x18] sm:$0xff] %v2944
      %2955 = vst [vmem:[#allocation3 + $0x30] sm:$0xff] %v2945
      %2956 = vst [vmem:[#allocation3 + $0x48] sm:$0xff] %v2946
      %2957 = vst [vmem:[#allocation3 + $0x60] sm:$0xff] %v2947
      %2958 = vst [vmem:[#allocation3 + $0x78] sm:$0xff] %v2948
      %2959 = vst [vmem:[#allocation3 + $0x90] sm:$0xff] %v2949
      %2960 = vst [vmem:[#allocation3 + $0xa8] sm:$0xff] %v2950
      %2961 = vst [vmem:[#allocation3 + $0xc0] sm:$0xff] %v2951
      %2962 = vst [vmem:[#allocation3 + $0xd8] sm:$0xff] %v2952
      %v2963 = vrot.slane %v2857, 1
      %v2964 = vor.u32 %v2854, %v2963
      %v2965 = vrot.slane %v2864, 1
      %v2966 = vsel %vm1208, %v2964, %v2965
      %v2967 = vor.u32 %v2861, %v2965
      %v2968 = vrot.slane %v2872, 1
      %v2969 = vsel %vm1208, %v2967, %v2968
      %v2970 = vor.u32 %v2869, %v2968
      %v2971 = vrot.slane %v2880, 1
      %v2972 = vsel %vm1208, %v2970, %v2971
      %v2973 = vor.u32 %v2877, %v2971
      %v2974 = vrot.slane %v2888, 1
      %v2975 = vsel %vm1208, %v2973, %v2974
      %v2976 = vor.u32 %v2885, %v2974
      %v2977 = vrot.slane %v2896, 1
      %v2978 = vsel %vm1208, %v2976, %v2977
      %v2979 = vor.u32 %v2893, %v2977
      %v2980 = vrot.slane %v2904, 1
      %v2981 = vsel %vm1208, %v2979, %v2980
      %v2982 = vor.u32 %v2901, %v2980
      %v2983 = vrot.slane %v2912, 1
      %v2984 = vsel %vm1208, %v2982, %v2983
      %v2985 = vor.u32 %v2909, %v2983
      %v2986 = vrot.slane %v2920, 1
      %v2987 = vsel %vm1208, %v2985, %v2986
      %v2988 = vor.u32 %v2917, %v2986
      %v2989 = vrot.slane %v2928, 1
      %v2990 = vsel %vm1208, %v2988, %v2989
      %v2991 = vor.u32 %v2925, %v2989
      %v3002 = vsel %vm1257, %v2991, 0
      %v3003 = vsel %vm1391, %v2966, 0
      %v3004 = vsel %vm1392, %v2969, 0
      %v3005 = vsel %vm1393, %v2972, 0
      %v3006 = vsel %vm1394, %v2975, 0
      %v3007 = vsel %vm1395, %v2978, 0
      %v3008 = vsel %vm1396, %v2981, 0
      %v3009 = vsel %vm1397, %v2984, 0
      %v3010 = vsel %vm1398, %v2987, 0
      %v3011 = vsel %vm1399, %v2990, 0
      %v3012 = vsel %vm1400, %v3002, 0
      %3013 = vst [vmem:[#allocation3 + $0x10] sm:$0xff] %v3003
      %3014 = vst [vmem:[#allocation3 + $0x28] sm:$0xff] %v3004
      %3015 = vst [vmem:[#allocation3 + $0x40] sm:$0xff] %v3005
      %3016 = vst [vmem:[#allocation3 + $0x58] sm:$0xff] %v3006
      %3017 = vst [vmem:[#allocation3 + $0x70] sm:$0xff] %v3007
      %3018 = vst [vmem:[#allocation3 + $0x88] sm:$0xff] %v3008
      %3019 = vst [vmem:[#allocation3 + $0xa0] sm:$0xff] %v3009
      %3020 = vst [vmem:[#allocation3 + $0xb8] sm:$0xff] %v3010
      %3021 = vst [vmem:[#allocation3 + $0xd0] sm:$0xff] %v3011
      %3022 = vst [vmem:[#allocation3 + $0xe8] sm:$0xff] %v3012
      // Predicated region
      $region57: #{basic_block_forward.1} parent=47 // pred_check
        %p3023 = pneg %p1427
      $region58: #{basic_block_forward.1} parent=47 // pred_check_branch
        %3025 = sbr.rel (%p3023) target = $region60
      $region59: #{basic_block_forward.1} parent=47 // pred_region
        %3026 = vst [vmem:[#allocation3] sm:$0xff] 0
        %3027 = vst [vmem:[#allocation3 + $0x8] sm:$0xff] 0
        %3028 = vst [vmem:[#allocation3 + $0x10] sm:$0xff] 0
      $region60: #{basic_block_forward.1} parent=47 // pred_fallthru
        _
      // Predicated region
      $region61: #{basic_block_forward.1} parent=47 // pred_check
        %p3029 = pneg %p1437
      $region62: #{basic_block_forward.1} parent=47 // pred_check_branch
        %3031 = sbr.rel (%p3029) target = $region64
      $region63: #{basic_block_forward.1} parent=47 // pred_region
        %3032 = vst [vmem:[#allocation3 + $0xd8] sm:$0xff] 0
        %3033 = vst [vmem:[#allocation3 + $0xe0] sm:$0xff] 0
        %3034 = vst [vmem:[#allocation3 + $0xe8] sm:$0xff] 0
      $region64: #{basic_block_forward.1} parent=47 // pred_fallthru
        _
      %v3035 = vld [vmem:[#allocation3] sm:$0xff]
      %v3036 = vld [vmem:[#allocation3 + $0x8] sm:$0xff]
      %v3037 = vld [vmem:[#allocation3 + $0x10] sm:$0xff]
      %v3038 = vld [vmem:[#allocation3 + $0x18] sm:$0xff]
      %v3039 = vld [vmem:[#allocation3 + $0x20] sm:$0xff]
      %v3040 = vld [vmem:[#allocation3 + $0x28] sm:$0xff]
      %v3041 = vld [vmem:[#allocation3 + $0x30] sm:$0xff]
      %v3042 = vld [vmem:[#allocation3 + $0x38] sm:$0xff]
      %v3043 = vld [vmem:[#allocation3 + $0x40] sm:$0xff]
      %v3044 = vld [vmem:[#allocation3 + $0x48] sm:$0xff]
      %v3045 = vld [vmem:[#allocation3 + $0x50] sm:$0xff]
      %v3046 = vld [vmem:[#allocation3 + $0x58] sm:$0xff]
      %v3047 = vld [vmem:[#allocation3 + $0x60] sm:$0xff]
      %v3048 = vld [vmem:[#allocation3 + $0x68] sm:$0xff]
      %v3049 = vld [vmem:[#allocation3 + $0x70] sm:$0xff]
      %v3050 = vld [vmem:[#allocation3 + $0x78] sm:$0xff]
      %v3051 = vld [vmem:[#allocation3 + $0x80] sm:$0xff]
      %v3052 = vld [vmem:[#allocation3 + $0x88] sm:$0xff]
      %v3053 = vld [vmem:[#allocation3 + $0x90] sm:$0xff]
      %v3054 = vld [vmem:[#allocation3 + $0x98] sm:$0xff]
      %v3055 = vld [vmem:[#allocation3 + $0xa0] sm:$0xff]
      %v3056 = vld [vmem:[#allocation3 + $0xa8] sm:$0xff]
      %v3057 = vld [vmem:[#allocation3 + $0xb0] sm:$0xff]
      %v3058 = vld [vmem:[#allocation3 + $0xb8] sm:$0xff]
      %v3059 = vld [vmem:[%s5] sm:$0xf]
      %v3060 = vld [vmem:[%s5 + $0x4] sm:$0xf]
      %v3061 = vld [vmem:[%s5 + $0x8] sm:$0xf]
      %v3062 = vld [vmem:[%s5 + $0xc] sm:$0xf]
      %v3063 = vld [vmem:[%s5 + $0x10] sm:$0xf]
      %v3064 = vld [vmem:[%s5 + $0x14] sm:$0xf]
      %v3065 = vld [vmem:[%s5 + $0x18] sm:$0xf]
      %v3066 = vld [vmem:[%s5 + $0x1c] sm:$0xf]
      %v3067 = vld [vmem:[%s5 + $0x20] sm:$0xf]
      %v3068 = vld [vmem:[%s5 + $0x24] sm:$0xf]
      %v3069 = vld [vmem:[%s5 + $0x28] sm:$0xf]
      %v3070 = vld [vmem:[%s5 + $0x2c] sm:$0xf]
      %v3071 = vld [vmem:[%s5 + $0x30] sm:$0xf]
      %v3072 = vld [vmem:[%s5 + $0x34] sm:$0xf]
      %v3073 = vld [vmem:[%s5 + $0x38] sm:$0xf]
      %v3074 = vld [vmem:[%s5 + $0x3c] sm:$0xf]
      %v3075 = vld [vmem:[%s5 + $0x40] sm:$0xf]
      %v3076 = vld [vmem:[%s5 + $0x44] sm:$0xf]
      %v3077 = vld [vmem:[%s5 + $0x48] sm:$0xf]
      %v3078 = vld [vmem:[%s5 + $0x4c] sm:$0xf]
      %v3079 = vld [vmem:[%s5 + $0x50] sm:$0xf]
      %v3080 = vld [vmem:[%s5 + $0x54] sm:$0xf]
      %v3081 = vld [vmem:[%s5 + $0x58] sm:$0xf]
      %v3082 = vld [vmem:[%s5 + $0x5c] sm:$0xf]
      %v3083 = vld [vmem:[%s5 + $0x60] sm:$0xf]
      %v3084 = vld [vmem:[%s5 + $0x64] sm:$0xf]
      %v3085 = vld [vmem:[%s5 + $0x68] sm:$0xf]
      %v3086 = vld [vmem:[%s5 + $0x6c] sm:$0xf]
      %v3087 = vld [vmem:[%s5 + $0x70] sm:$0xf]
      %v3088 = vld [vmem:[%s5 + $0x74] sm:$0xf]
      %v3089 = vld [vmem:[%s5 + $0x78] sm:$0xf]
      %v3090 = vld [vmem:[%s5 + $0x7c] sm:$0xf]
      %v3091 = vld [vmem:[%s5 + $0x80] sm:$0xf]
      %v3092 = vld [vmem:[%s5 + $0x84] sm:$0xf]
      %v3093 = vld [vmem:[%s5 + $0x88] sm:$0xf]
      %v3094 = vld [vmem:[%s5 + $0x8c] sm:$0xf]
      %v3095 = vld [vmem:[%s5 + $0x90] sm:$0xf]
      %v3096 = vld [vmem:[%s5 + $0x94] sm:$0xf]
      %v3097 = vld [vmem:[%s5 + $0x98] sm:$0xf]
      %v3098 = vld [vmem:[%s5 + $0x9c] sm:$0xf]
      %v3099 = vld [vmem:[%s5 + $0xa0] sm:$0xf]
      %v3100 = vld [vmem:[%s5 + $0xa4] sm:$0xf]
      %v3101 = vld [vmem:[%s5 + $0xa8] sm:$0xf]
      %v3102 = vld [vmem:[%s5 + $0xac] sm:$0xf]
      %v3103 = vld [vmem:[%s5 + $0xb0] sm:$0xf]
      %v3104 = vld [vmem:[%s5 + $0xb4] sm:$0xf]
      %v3105 = vld [vmem:[%s5 + $0xb8] sm:$0xf]
      %v3106 = vld [vmem:[%s5 + $0xbc] sm:$0xf]
      %v3107 = vld [vmem:[#allocation3 + $0xc0] sm:$0xff]
      %v3108 = vld [vmem:[#allocation3 + $0xc8] sm:$0xff]
      %v3109 = vld [vmem:[#allocation3 + $0xd0] sm:$0xff]
      %s3110 = scalar_lea.vmem %s5, 192
      %v3111 = vld [vmem:[%s3110] sm:$0xf]
      %v3112 = vld [vmem:[%s3110 + $0x4] sm:$0xf]
      %v3113 = vld [vmem:[%s3110 + $0x8] sm:$0xf]
      %v3114 = vld [vmem:[%s3110 + $0xc] sm:$0xf]
      %v3115 = vld [vmem:[%s3110 + $0x10] sm:$0xf]
      %v3116 = vld [vmem:[%s3110 + $0x14] sm:$0xf]
      %v3117 = vld [vmem:[%s3110 + $0x18] sm:$0xf]
      %v3118 = vld [vmem:[%s3110 + $0x1c] sm:$0xf]
      %v3119 = vld [vmem:[%s3110 + $0x20] sm:$0xf]
      %v3120 = vld [vmem:[%s3110 + $0x24] sm:$0xf]
      %v3121 = vld [vmem:[%s3110 + $0x28] sm:$0xf]
      %v3122 = vld [vmem:[%s3110 + $0x2c] sm:$0xf]
      %v3123 = vld [vmem:[%s3110 + $0x30] sm:$0xf]
      %v3124 = vld [vmem:[%s3110 + $0x34] sm:$0xf]
      %v3125 = vld [vmem:[%s3110 + $0x38] sm:$0xf]
      %v3126 = vld [vmem:[%s3110 + $0x3c] sm:$0xf]
      %v3127 = vld [vmem:[%s3110 + $0x40] sm:$0xf]
      %v3128 = vld [vmem:[%s3110 + $0x44] sm:$0xf]
      %v3129 = vld [vmem:[%s3110 + $0x48] sm:$0xf]
      %v3130 = vld [vmem:[%s3110 + $0x4c] sm:$0xf]
      %v3131 = vld [vmem:[%s3110 + $0x50] sm:$0xf]
      %v3132 = vld [vmem:[%s3110 + $0x54] sm:$0xf]
      %v3133 = vld [vmem:[%s3110 + $0x58] sm:$0xf]
      %v3134 = vld [vmem:[%s3110 + $0x5c] sm:$0xf]
      %v3135 = vld [vmem:[%s3110 + $0x60] sm:$0xf]
      %v3136 = vld [vmem:[%s3110 + $0x64] sm:$0xf]
      %v3137 = vld [vmem:[%s3110 + $0x68] sm:$0xf]
      %v3138 = vld [vmem:[%s3110 + $0x6c] sm:$0xf]
      %v3139 = vld [vmem:[%s3110 + $0x70] sm:$0xf]
      %v3140 = vld [vmem:[%s3110 + $0x74] sm:$0xf]
      %v3141 = vld [vmem:[%s3110 + $0x78] sm:$0xf]
      %v3142 = vld [vmem:[%s3110 + $0x7c] sm:$0xf]
      %v3143 = vld [vmem:[%s3110 + $0x80] sm:$0xf]
      %v3144 = vld [vmem:[%s3110 + $0x84] sm:$0xf]
      %v3145 = vld [vmem:[%s3110 + $0x88] sm:$0xf]
      %v3146 = vld [vmem:[%s3110 + $0x8c] sm:$0xf]
      %v3147 = vld [vmem:[%s3110 + $0x90] sm:$0xf]
      %v3148 = vld [vmem:[%s3110 + $0x94] sm:$0xf]
      %v3149 = vld [vmem:[%s3110 + $0x98] sm:$0xf]
      %v3150 = vld [vmem:[%s3110 + $0x9c] sm:$0xf]
      %v3151 = vld [vmem:[%s3110 + $0xa0] sm:$0xf]
      %v3152 = vld [vmem:[%s3110 + $0xa4] sm:$0xf]
      %v3153 = vld [vmem:[%s3110 + $0xa8] sm:$0xf]
      %v3154 = vld [vmem:[%s3110 + $0xac] sm:$0xf]
      %v3155 = vld [vmem:[%s3110 + $0xb0] sm:$0xf]
      %v3156 = vld [vmem:[%s3110 + $0xb4] sm:$0xf]
      %v3157 = vld [vmem:[%s3110 + $0xb8] sm:$0xf]
      %v3158 = vld [vmem:[%s3110 + $0xbc] sm:$0xf]
      %v3207 = vunpack.c.l.b16 %v3111
      %v3208 = vunpack.c.l.b16 %v3112
      %v3209 = vunpack.c.l.b16 %v3113
      %v3210 = vunpack.c.l.b16 %v3114
      %v3211 = vunpack.c.l.b16 %v3115
      %v3212 = vunpack.c.l.b16 %v3116
      %v3213 = vunpack.c.l.b16 %v3117
      %v3214 = vunpack.c.l.b16 %v3118
      %v3215 = vunpack.c.l.b16 %v3119
      %v3216 = vunpack.c.l.b16 %v3120
      %v3217 = vunpack.c.l.b16 %v3121
      %v3218 = vunpack.c.l.b16 %v3122
      %v3219 = vunpack.c.l.b16 %v3123
      %v3220 = vunpack.c.l.b16 %v3124
      %v3221 = vunpack.c.l.b16 %v3125
      %v3222 = vunpack.c.l.b16 %v3126
      %v3223 = vunpack.c.l.b16 %v3127
      %v3224 = vunpack.c.l.b16 %v3128
      %v3225 = vunpack.c.l.b16 %v3129
      %v3226 = vunpack.c.l.b16 %v3130
      %v3227 = vunpack.c.l.b16 %v3131
      %v3228 = vunpack.c.l.b16 %v3132
      %v3229 = vunpack.c.l.b16 %v3133
      %v3230 = vunpack.c.l.b16 %v3134
      %v3231 = vunpack.c.l.b16 %v3135
      %v3232 = vunpack.c.l.b16 %v3136
      %v3233 = vunpack.c.l.b16 %v3137
      %v3234 = vunpack.c.l.b16 %v3138
      %v3235 = vunpack.c.l.b16 %v3139
      %v3236 = vunpack.c.l.b16 %v3140
      %v3237 = vunpack.c.l.b16 %v3141
      %v3238 = vunpack.c.l.b16 %v3142
      %v3239 = vunpack.c.l.b16 %v3143
      %v3240 = vunpack.c.l.b16 %v3144
      %v3241 = vunpack.c.l.b16 %v3145
      %v3242 = vunpack.c.l.b16 %v3146
      %v3243 = vunpack.c.l.b16 %v3147
      %v3244 = vunpack.c.l.b16 %v3148
      %v3245 = vunpack.c.l.b16 %v3149
      %v3246 = vunpack.c.l.b16 %v3150
      %v3247 = vunpack.c.l.b16 %v3151
      %v3248 = vunpack.c.l.b16 %v3152
      %v3249 = vunpack.c.l.b16 %v3153
      %v3250 = vunpack.c.l.b16 %v3154
      %v3251 = vunpack.c.l.b16 %v3155
      %v3252 = vunpack.c.l.b16 %v3156
      %v3253 = vunpack.c.l.b16 %v3157
      %v3254 = vunpack.c.l.b16 %v3158
      %v3255 = vpack.c.b16 %v3208, %v3207
      %v3256 = vpack.c.b16 %v3210, %v3209
      %v3257 = vpack.c.b16 %v3212, %v3211
      %v3258 = vpack.c.b16 %v3214, %v3213
      %v3259 = vpack.c.b16 %v3216, %v3215
      %v3260 = vpack.c.b16 %v3218, %v3217
      %v3261 = vpack.c.b16 %v3220, %v3219
      %v3262 = vpack.c.b16 %v3222, %v3221
      %v3263 = vpack.c.b16 %v3224, %v3223
      %v3264 = vpack.c.b16 %v3226, %v3225
      %v3265 = vpack.c.b16 %v3228, %v3227
      %v3266 = vpack.c.b16 %v3230, %v3229
      %v3267 = vpack.c.b16 %v3232, %v3231
      %v3268 = vpack.c.b16 %v3234, %v3233
      %v3269 = vpack.c.b16 %v3236, %v3235
      %v3270 = vpack.c.b16 %v3238, %v3237
      %v3271 = vpack.c.b16 %v3240, %v3239
      %v3272 = vpack.c.b16 %v3242, %v3241
      %v3273 = vpack.c.b16 %v3244, %v3243
      %v3274 = vpack.c.b16 %v3246, %v3245
      %v3275 = vpack.c.b16 %v3248, %v3247
      %v3276 = vpack.c.b16 %v3250, %v3249
      %v3277 = vpack.c.b16 %v3252, %v3251
      %v3278 = vpack.c.b16 %v3254, %v3253
      %3303 = vmatprep.subr.bf16.mxu0 0
      %3304 = vmatpush1.bf16.msra.mxu0 %v3255
      %3305 = vmatprep.subr.bf16.mxu0 0
      %3306 = vmatpush1.bf16.msra.mxu0 %v3256
      %3307 = vmatprep.subr.bf16.mxu0 0
      %3308 = vmatpush1.bf16.msra.mxu0 %v3257
      %3309 = vmatprep.subr.bf16.mxu0 0
      %3310 = vmatpush1.bf16.msra.mxu0 %v3258
      %3311 = vmatprep.subr.bf16.mxu0 0
      %3312 = vmatpush1.bf16.msra.mxu0 %v3259
      %3313 = vmatprep.subr.bf16.mxu0 0
      %3314 = vmatpush1.bf16.msra.mxu0 %v3260
      %3315 = vmatprep.subr.bf16.mxu0 0
      %3316 = vmatpush1.bf16.msra.mxu0 %v3261
      %3317 = vmatprep.subr.bf16.mxu0 0
      %3318 = vmatpush1.bf16.msra.mxu0 %v3262
      %3319 = vmatprep.subr.bf16.mxu0 0
      %3320 = vmatpush1.bf16.msra.mxu0 %v3263
      %3321 = vmatprep.subr.bf16.mxu0 0
      %3322 = vmatpush1.bf16.msra.mxu0 %v3264
      %3323 = vmatprep.subr.bf16.mxu0 0
      %3324 = vmatpush1.bf16.msra.mxu0 %v3265
      %3325 = vmatprep.subr.bf16.mxu0 0
      %3326 = vmatpush1.bf16.msra.mxu0 %v3266
      %3327 = vmatprep.subr.bf16.mxu0 0
      %3328 = vmatpush1.bf16.msra.mxu0 %v3267
      %3329 = vmatprep.subr.bf16.mxu0 0
      %3330 = vmatpush1.bf16.msra.mxu0 %v3268
      %3331 = vmatprep.subr.bf16.mxu0 0
      %3332 = vmatpush1.bf16.msra.mxu0 %v3269
      %3333 = vmatprep.subr.bf16.mxu0 0
      %3334 = vmatpush1.bf16.msra.mxu0 %v3270
      %3335 = vmatprep.mubr.bf16.mxu0 %v3039
      %3336 = vmatmul.mubr.bf16.gmra.mrb[0].mxu0 %v3038
      %v3337 = vpop.f32.mrb[0].mxu0
      %v3338 = vadd.f32 0.0, %v3337
      %v3339 = vpop.f32.mrb[0].mxu0
      %v3340 = vpop.f32.mrb[0].mxu0
      %v3341 = vadd.f32 0.0, %v3340
      %v3342 = vpop.f32.mrb[0].mxu0
      %3343 = vmatprep.mubr.bf16.mxu0 %v3042
      %3344 = vmatmul.mubr.bf16.gmra.mrb[0].mxu0 %v3041
      %v3345 = vpop.f32.mrb[0].mxu0
      %v3346 = vadd.f32 0.0, %v3345
      %v3347 = vpop.f32.mrb[0].mxu0
      %v3348 = vpop.f32.mrb[0].mxu0
      %v3349 = vadd.f32 0.0, %v3348
      %v3350 = vpop.f32.mrb[0].mxu0
      %3351 = vmatprep.mubr.bf16.mxu0 %v3045
      %3352 = vmatmul.mubr.bf16.gmra.mrb[0].mxu0 %v3044
      %v3353 = vpop.f32.mrb[0].mxu0
      %v3354 = vadd.f32 0.0, %v3353
      %v3355 = vpop.f32.mrb[0].mxu0
      %v3356 = vpop.f32.mrb[0].mxu0
      %v3357 = vadd.f32 0.0, %v3356
      %v3358 = vpop.f32.mrb[0].mxu0
      %3359 = vmatprep.mubr.bf16.mxu0 %v3048
      %3360 = vmatmul.mubr.bf16.gmra.mrb[0].mxu0 %v3047
      %v3361 = vpop.f32.mrb[0].mxu0
      %v3362 = vadd.f32 0.0, %v3361
      %v3363 = vpop.f32.mrb[0].mxu0
      %v3364 = vpop.f32.mrb[0].mxu0
      %v3365 = vadd.f32 0.0, %v3364
      %v3366 = vpop.f32.mrb[0].mxu0
      %3367 = vmatprep.mubr.bf16.mxu0 %v3051
      %3368 = vmatmul.mubr.bf16.gmra.mrb[0].mxu0 %v3050
      %v3369 = vpop.f32.mrb[0].mxu0
      %v3370 = vadd.f32 0.0, %v3369
      %v3371 = vpop.f32.mrb[0].mxu0
      %v3372 = vpop.f32.mrb[0].mxu0
      %v3373 = vadd.f32 0.0, %v3372
      %v3374 = vpop.f32.mrb[0].mxu0
      %3375 = vmatprep.mubr.bf16.mxu0 %v3054
      %3376 = vmatmul.mubr.bf16.gmra.mrb[0].mxu0 %v3053
      %v3377 = vpop.f32.mrb[0].mxu0
      %v3378 = vadd.f32 0.0, %v3377
      %v3379 = vpop.f32.mrb[0].mxu0
      %v3380 = vpop.f32.mrb[0].mxu0
      %v3381 = vadd.f32 0.0, %v3380
      %v3382 = vpop.f32.mrb[0].mxu0
      %3383 = vmatprep.mubr.bf16.mxu0 %v3057
      %3384 = vmatmul.mubr.bf16.gmra.mrb[0].mxu0 %v3056
      %v3385 = vpop.f32.mrb[0].mxu0
      %v3386 = vadd.f32 0.0, %v3385
      %v3387 = vpop.f32.mrb[0].mxu0
      %v3388 = vpop.f32.mrb[0].mxu0
      %v3389 = vadd.f32 0.0, %v3388
      %v3390 = vpop.f32.mrb[0].mxu0
      %3391 = vmatprep.mubr.bf16.mxu0 %v3108
      %3392 = vmatmul.mubr.bf16.gmra.mrb[0].mxu0 %v3107
      %v3393 = vpop.f32.mrb[0].mxu0
      %v3394 = vadd.f32 0.0, %v3393
      %v3395 = vpop.f32.mrb[0].mxu0
      %v3396 = vpop.f32.mrb[0].mxu0
      %v3397 = vadd.f32 0.0, %v3396
      %v3398 = vpop.f32.mrb[0].mxu0
      %3399 = vdwg.mxu0
      %3400 = vmatprep.subr.bf16.mxu0 0
      %3401 = vmatpush1.bf16.msra.mxu0 %v3271
      %3402 = vmatprep.subr.bf16.mxu0 0
      %3403 = vmatpush1.bf16.msra.mxu0 %v3272
      %3404 = vmatprep.subr.bf16.mxu0 0
      %3405 = vmatpush1.bf16.msra.mxu0 %v3273
      %3406 = vmatprep.subr.bf16.mxu0 0
      %3407 = vmatpush1.bf16.msra.mxu0 %v3274
      %3408 = vmatprep.subr.bf16.mxu0 0
      %3409 = vmatpush1.bf16.msra.mxu0 %v3275
      %3410 = vmatprep.subr.bf16.mxu0 0
      %3411 = vmatpush1.bf16.msra.mxu0 %v3276
      %3412 = vmatprep.subr.bf16.mxu0 0
      %3413 = vmatpush1.bf16.msra.mxu0 %v3277
      %3414 = vmatprep.subr.bf16.mxu0 0
      %3415 = vmatpush1.bf16.msra.mxu0 %v3278
      %3416 = vmatprep.subr.bf16.mxu0 0
      %3417 = vmatpush1.bf16.msra.mxu0 0
      %3418 = vmatprep.subr.bf16.mxu0 0
      %3419 = vmatpush1.bf16.msra.mxu0 0
      %3420 = vmatprep.subr.bf16.mxu0 0
      %3421 = vmatpush1.bf16.msra.mxu0 0
      %3422 = vmatprep.subr.bf16.mxu0 0
      %3423 = vmatpush1.bf16.msra.mxu0 0
      %3424 = vmatprep.subr.bf16.mxu0 0
      %3425 = vmatpush1.bf16.msra.mxu0 0
      %3426 = vmatprep.subr.bf16.mxu0 0
      %3427 = vmatpush1.bf16.msra.mxu0 0
      %3428 = vmatprep.subr.bf16.mxu0 0
      %3429 = vmatpush1.bf16.msra.mxu0 0
      %3430 = vmatprep.subr.bf16.mxu0 0
      %3431 = vmatpush1.bf16.msra.mxu0 0
      %3432 = vmatprep.mubr.bf16.mxu0 0
      %3433 = vmatmul.mubr.bf16.gmra.mrb[0].mxu0 %v3040
      %v3434 = vpop.f32.mrb[0].mxu0
      %v3435 = vadd.f32 %v3338, %v3434
      %v3436 = vpop.f32.mrb[0].mxu0
      %v3437 = vpop.f32.mrb[0].mxu0
      %v3438 = vadd.f32 %v3341, %v3437
      %v3439 = vpop.f32.mrb[0].mxu0
      %3440 = vmatprep.mubr.bf16.mxu0 0
      %3441 = vmatmul.mubr.bf16.gmra.mrb[0].mxu0 %v3043
      %v3442 = vpop.f32.mrb[0].mxu0
      %v3443 = vadd.f32 %v3346, %v3442
      %v3444 = vpop.f32.mrb[0].mxu0
      %v3445 = vpop.f32.mrb[0].mxu0
      %v3446 = vadd.f32 %v3349, %v3445
      %v3447 = vpop.f32.mrb[0].mxu0
      %3448 = vmatprep.mubr.bf16.mxu0 0
      %3449 = vmatmul.mubr.bf16.gmra.mrb[0].mxu0 %v3046
      %v3450 = vpop.f32.mrb[0].mxu0
      %v3451 = vadd.f32 %v3354, %v3450
      %v3452 = vpop.f32.mrb[0].mxu0
      %v3453 = vpop.f32.mrb[0].mxu0
      %v3454 = vadd.f32 %v3357, %v3453
      %v3455 = vpop.f32.mrb[0].mxu0
      %3456 = vmatprep.mubr.bf16.mxu0 0
      %3457 = vmatmul.mubr.bf16.gmra.mrb[0].mxu0 %v3049
      %v3458 = vpop.f32.mrb[0].mxu0
      %v3459 = vadd.f32 %v3362, %v3458
      %v3460 = vpop.f32.mrb[0].mxu0
      %v3461 = vpop.f32.mrb[0].mxu0
      %v3462 = vadd.f32 %v3365, %v3461
      %v3463 = vpop.f32.mrb[0].mxu0
      %3464 = vmatprep.mubr.bf16.mxu0 0
      %3465 = vmatmul.mubr.bf16.gmra.mrb[0].mxu0 %v3052
      %v3466 = vpop.f32.mrb[0].mxu0
      %v3467 = vadd.f32 %v3370, %v3466
      %v3468 = vpop.f32.mrb[0].mxu0
      %v3469 = vpop.f32.mrb[0].mxu0
      %v3470 = vadd.f32 %v3373, %v3469
      %v3471 = vpop.f32.mrb[0].mxu0
      %3472 = vmatprep.mubr.bf16.mxu0 0
      %3473 = vmatmul.mubr.bf16.gmra.mrb[0].mxu0 %v3055
      %v3474 = vpop.f32.mrb[0].mxu0
      %v3475 = vadd.f32 %v3378, %v3474
      %v3476 = vpop.f32.mrb[0].mxu0
      %v3477 = vpop.f32.mrb[0].mxu0
      %v3478 = vadd.f32 %v3381, %v3477
      %v3479 = vpop.f32.mrb[0].mxu0
      %3480 = vmatprep.mubr.bf16.mxu0 0
      %3481 = vmatmul.mubr.bf16.gmra.mrb[0].mxu0 %v3058
      %v3482 = vpop.f32.mrb[0].mxu0
      %v3483 = vadd.f32 %v3386, %v3482
      %v3484 = vpop.f32.mrb[0].mxu0
      %v3485 = vpop.f32.mrb[0].mxu0
      %v3486 = vadd.f32 %v3389, %v3485
      %v3487 = vpop.f32.mrb[0].mxu0
      %3488 = vmatprep.mubr.bf16.mxu0 0
      %3489 = vmatmul.mubr.bf16.gmra.mrb[0].mxu0 %v3109
      %v3490 = vpop.f32.mrb[0].mxu0
      %v3491 = vadd.f32 %v3394, %v3490
      %v3492 = vpop.f32.mrb[0].mxu0
      %v3493 = vpop.f32.mrb[0].mxu0
      %v3494 = vadd.f32 %v3397, %v3493
      %v3495 = vpop.f32.mrb[0].mxu0
      %3496 = vdwg.mxu0
      %v3545 = vunpack.c.l.b16 %v3059
      %v3546 = vunpack.c.l.b16 %v3060
      %v3547 = vunpack.c.l.b16 %v3061
      %v3548 = vunpack.c.l.b16 %v3062
      %v3549 = vunpack.c.l.b16 %v3063
      %v3550 = vunpack.c.l.b16 %v3064
      %v3551 = vunpack.c.l.b16 %v3065
      %v3552 = vunpack.c.l.b16 %v3066
      %v3553 = vunpack.c.l.b16 %v3067
      %v3554 = vunpack.c.l.b16 %v3068
      %v3555 = vunpack.c.l.b16 %v3069
      %v3556 = vunpack.c.l.b16 %v3070
      %v3557 = vunpack.c.l.b16 %v3071
      %v3558 = vunpack.c.l.b16 %v3072
      %v3559 = vunpack.c.l.b16 %v3073
      %v3560 = vunpack.c.l.b16 %v3074
      %v3561 = vunpack.c.l.b16 %v3075
      %v3562 = vunpack.c.l.b16 %v3076
      %v3563 = vunpack.c.l.b16 %v3077
      %v3564 = vunpack.c.l.b16 %v3078
      %v3565 = vunpack.c.l.b16 %v3079
      %v3566 = vunpack.c.l.b16 %v3080
      %v3567 = vunpack.c.l.b16 %v3081
      %v3568 = vunpack.c.l.b16 %v3082
      %v3569 = vunpack.c.l.b16 %v3083
      %v3570 = vunpack.c.l.b16 %v3084
      %v3571 = vunpack.c.l.b16 %v3085
      %v3572 = vunpack.c.l.b16 %v3086
      %v3573 = vunpack.c.l.b16 %v3087
      %v3574 = vunpack.c.l.b16 %v3088
      %v3575 = vunpack.c.l.b16 %v3089
      %v3576 = vunpack.c.l.b16 %v3090
      %v3577 = vunpack.c.l.b16 %v3091
      %v3578 = vunpack.c.l.b16 %v3092
      %v3579 = vunpack.c.l.b16 %v3093
      %v3580 = vunpack.c.l.b16 %v3094
      %v3581 = vunpack.c.l.b16 %v3095
      %v3582 = vunpack.c.l.b16 %v3096
      %v3583 = vunpack.c.l.b16 %v3097
      %v3584 = vunpack.c.l.b16 %v3098
      %v3585 = vunpack.c.l.b16 %v3099
      %v3586 = vunpack.c.l.b16 %v3100
      %v3587 = vunpack.c.l.b16 %v3101
      %v3588 = vunpack.c.l.b16 %v3102
      %v3589 = vunpack.c.l.b16 %v3103
      %v3590 = vunpack.c.l.b16 %v3104
      %v3591 = vunpack.c.l.b16 %v3105
      %v3592 = vunpack.c.l.b16 %v3106
      %v3593 = vpack.c.b16 %v3546, %v3545
      %v3594 = vpack.c.b16 %v3548, %v3547
      %v3595 = vpack.c.b16 %v3550, %v3549
      %v3596 = vpack.c.b16 %v3552, %v3551
      %v3597 = vpack.c.b16 %v3554, %v3553
      %v3598 = vpack.c.b16 %v3556, %v3555
      %v3599 = vpack.c.b16 %v3558, %v3557
      %v3600 = vpack.c.b16 %v3560, %v3559
      %v3601 = vpack.c.b16 %v3562, %v3561
      %v3602 = vpack.c.b16 %v3564, %v3563
      %v3603 = vpack.c.b16 %v3566, %v3565
      %v3604 = vpack.c.b16 %v3568, %v3567
      %v3605 = vpack.c.b16 %v3570, %v3569
      %v3606 = vpack.c.b16 %v3572, %v3571
      %v3607 = vpack.c.b16 %v3574, %v3573
      %v3608 = vpack.c.b16 %v3576, %v3575
      %v3609 = vpack.c.b16 %v3578, %v3577
      %v3610 = vpack.c.b16 %v3580, %v3579
      %v3611 = vpack.c.b16 %v3582, %v3581
      %v3612 = vpack.c.b16 %v3584, %v3583
      %v3613 = vpack.c.b16 %v3586, %v3585
      %v3614 = vpack.c.b16 %v3588, %v3587
      %v3615 = vpack.c.b16 %v3590, %v3589
      %v3616 = vpack.c.b16 %v3592, %v3591
      %3641 = vmatprep.subr.bf16.mxu0 0
      %3642 = vmatpush1.bf16.msra.mxu0 %v3593
      %3643 = vmatprep.subr.bf16.mxu0 0
      %3644 = vmatpush1.bf16.msra.mxu0 %v3594
      %3645 = vmatprep.subr.bf16.mxu0 0
      %3646 = vmatpush1.bf16.msra.mxu0 %v3595
      %3647 = vmatprep.subr.bf16.mxu0 0
      %3648 = vmatpush1.bf16.msra.mxu0 %v3596
      %3649 = vmatprep.subr.bf16.mxu0 0
      %3650 = vmatpush1.bf16.msra.mxu0 %v3597
      %3651 = vmatprep.subr.bf16.mxu0 0
      %3652 = vmatpush1.bf16.msra.mxu0 %v3598
      %3653 = vmatprep.subr.bf16.mxu0 0
      %3654 = vmatpush1.bf16.msra.mxu0 %v3599
      %3655 = vmatprep.subr.bf16.mxu0 0
      %3656 = vmatpush1.bf16.msra.mxu0 %v3600
      %3657 = vmatprep.subr.bf16.mxu0 0
      %3658 = vmatpush1.bf16.msra.mxu0 %v3601
      %3659 = vmatprep.subr.bf16.mxu0 0
      %3660 = vmatpush1.bf16.msra.mxu0 %v3602
      %3661 = vmatprep.subr.bf16.mxu0 0
      %3662 = vmatpush1.bf16.msra.mxu0 %v3603
      %3663 = vmatprep.subr.bf16.mxu0 0
      %3664 = vmatpush1.bf16.msra.mxu0 %v3604
      %3665 = vmatprep.subr.bf16.mxu0 0
      %3666 = vmatpush1.bf16.msra.mxu0 %v3605
      %3667 = vmatprep.subr.bf16.mxu0 0
      %3668 = vmatpush1.bf16.msra.mxu0 %v3606
      %3669 = vmatprep.subr.bf16.mxu0 0
      %3670 = vmatpush1.bf16.msra.mxu0 %v3607
      %3671 = vmatprep.subr.bf16.mxu0 0
      %3672 = vmatpush1.bf16.msra.mxu0 %v3608
      %3673 = vmatprep.mubr.bf16.mxu0 %v3036
      %3674 = vmatmul.mubr.bf16.gmra.mrb[0].mxu0 %v3035
      %v3675 = vpop.f32.mrb[0].mxu0
      %v3676 = vadd.f32 %v3435, %v3675
      %v3677 = vpop.f32.mrb[0].mxu0
      %v3678 = vpop.f32.mrb[0].mxu0
      %v3679 = vadd.f32 %v3438, %v3678
      %v3680 = vpop.f32.mrb[0].mxu0
      %3681 = vmatprep.mubr.bf16.mxu0 %v3039
      %3682 = vmatmul.mubr.bf16.gmra.mrb[0].mxu0 %v3038
      %v3683 = vpop.f32.mrb[0].mxu0
      %v3684 = vadd.f32 %v3443, %v3683
      %v3685 = vpop.f32.mrb[0].mxu0
      %v3686 = vpop.f32.mrb[0].mxu0
      %v3687 = vadd.f32 %v3446, %v3686
      %v3688 = vpop.f32.mrb[0].mxu0
      %3689 = vmatprep.mubr.bf16.mxu0 %v3042
      %3690 = vmatmul.mubr.bf16.gmra.mrb[0].mxu0 %v3041
      %v3691 = vpop.f32.mrb[0].mxu0
      %v3692 = vadd.f32 %v3451, %v3691
      %v3693 = vpop.f32.mrb[0].mxu0
      %v3694 = vpop.f32.mrb[0].mxu0
      %v3695 = vadd.f32 %v3454, %v3694
      %v3696 = vpop.f32.mrb[0].mxu0
      %3697 = vmatprep.mubr.bf16.mxu0 %v3045
      %3698 = vmatmul.mubr.bf16.gmra.mrb[0].mxu0 %v3044
      %v3699 = vpop.f32.mrb[0].mxu0
      %v3700 = vadd.f32 %v3459, %v3699
      %v3701 = vpop.f32.mrb[0].mxu0
      %v3702 = vpop.f32.mrb[0].mxu0
      %v3703 = vadd.f32 %v3462, %v3702
      %v3704 = vpop.f32.mrb[0].mxu0
      %3705 = vmatprep.mubr.bf16.mxu0 %v3048
      %3706 = vmatmul.mubr.bf16.gmra.mrb[0].mxu0 %v3047
      %v3707 = vpop.f32.mrb[0].mxu0
      %v3708 = vadd.f32 %v3467, %v3707
      %v3709 = vpop.f32.mrb[0].mxu0
      %v3710 = vpop.f32.mrb[0].mxu0
      %v3711 = vadd.f32 %v3470, %v3710
      %v3712 = vpop.f32.mrb[0].mxu0
      %3713 = vmatprep.mubr.bf16.mxu0 %v3051
      %3714 = vmatmul.mubr.bf16.gmra.mrb[0].mxu0 %v3050
      %v3715 = vpop.f32.mrb[0].mxu0
      %v3716 = vadd.f32 %v3475, %v3715
      %v3717 = vpop.f32.mrb[0].mxu0
      %v3718 = vpop.f32.mrb[0].mxu0
      %v3719 = vadd.f32 %v3478, %v3718
      %v3720 = vpop.f32.mrb[0].mxu0
      %3721 = vmatprep.mubr.bf16.mxu0 %v3054
      %3722 = vmatmul.mubr.bf16.gmra.mrb[0].mxu0 %v3053
      %v3723 = vpop.f32.mrb[0].mxu0
      %v3724 = vadd.f32 %v3483, %v3723
      %v3725 = vpop.f32.mrb[0].mxu0
      %v3726 = vpop.f32.mrb[0].mxu0
      %v3727 = vadd.f32 %v3486, %v3726
      %v3728 = vpop.f32.mrb[0].mxu0
      %3729 = vmatprep.mubr.bf16.mxu0 %v3057
      %3730 = vmatmul.mubr.bf16.gmra.mrb[0].mxu0 %v3056
      %v3731 = vpop.f32.mrb[0].mxu0
      %v3732 = vadd.f32 %v3491, %v3731
      %v3733 = vpop.f32.mrb[0].mxu0
      %v3734 = vpop.f32.mrb[0].mxu0
      %v3735 = vadd.f32 %v3494, %v3734
      %v3736 = vpop.f32.mrb[0].mxu0
      %3737 = vdwg.mxu0
      %3738 = vmatprep.subr.bf16.mxu0 0
      %3739 = vmatpush1.bf16.msra.mxu0 %v3609
      %3740 = vmatprep.subr.bf16.mxu0 0
      %3741 = vmatpush1.bf16.msra.mxu0 %v3610
      %3742 = vmatprep.subr.bf16.mxu0 0
      %3743 = vmatpush1.bf16.msra.mxu0 %v3611
      %3744 = vmatprep.subr.bf16.mxu0 0
      %3745 = vmatpush1.bf16.msra.mxu0 %v3612
      %3746 = vmatprep.subr.bf16.mxu0 0
      %3747 = vmatpush1.bf16.msra.mxu0 %v3613
      %3748 = vmatprep.subr.bf16.mxu0 0
      %3749 = vmatpush1.bf16.msra.mxu0 %v3614
      %3750 = vmatprep.subr.bf16.mxu0 0
      %3751 = vmatpush1.bf16.msra.mxu0 %v3615
      %3752 = vmatprep.subr.bf16.mxu0 0
      %3753 = vmatpush1.bf16.msra.mxu0 %v3616
      %3754 = vmatprep.subr.bf16.mxu0 0
      %3755 = vmatpush1.bf16.msra.mxu0 0
      %3756 = vmatprep.subr.bf16.mxu0 0
      %3757 = vmatpush1.bf16.msra.mxu0 0
      %3758 = vmatprep.subr.bf16.mxu0 0
      %3759 = vmatpush1.bf16.msra.mxu0 0
      %3760 = vmatprep.subr.bf16.mxu0 0
      %3761 = vmatpush1.bf16.msra.mxu0 0
      %3762 = vmatprep.subr.bf16.mxu0 0
      %3763 = vmatpush1.bf16.msra.mxu0 0
      %3764 = vmatprep.subr.bf16.mxu0 0
      %3765 = vmatpush1.bf16.msra.mxu0 0
      %3766 = vmatprep.subr.bf16.mxu0 0
      %3767 = vmatpush1.bf16.msra.mxu0 0
      %3768 = vmatprep.subr.bf16.mxu0 0
      %3769 = vmatpush1.bf16.msra.mxu0 0
      %3770 = vmatprep.mubr.bf16.mxu0 0
      %3771 = vmatmul.mubr.bf16.gmra.mrb[0].mxu0 %v3037
      %v3772 = vpop.f32.mrb[0].mxu0
      %v3773 = vadd.f32 %v3676, %v3772
      %v3774 = vpop.f32.mrb[0].mxu0
      %v3775 = vpop.f32.mrb[0].mxu0
      %v3776 = vadd.f32 %v3679, %v3775
      %v3777 = vpop.f32.mrb[0].mxu0
      %3778 = vmatprep.mubr.bf16.mxu0 0
      %3779 = vmatmul.mubr.bf16.gmra.mrb[0].mxu0 %v3040
      %v3780 = vpop.f32.mrb[0].mxu0
      %v3781 = vadd.f32 %v3684, %v3780
      %v3782 = vpop.f32.mrb[0].mxu0
      %v3783 = vpop.f32.mrb[0].mxu0
      %v3784 = vadd.f32 %v3687, %v3783
      %v3785 = vpop.f32.mrb[0].mxu0
      %3786 = vmatprep.mubr.bf16.mxu0 0
      %3787 = vmatmul.mubr.bf16.gmra.mrb[0].mxu0 %v3043
      %v3788 = vpop.f32.mrb[0].mxu0
      %v3789 = vadd.f32 %v3692, %v3788
      %v3790 = vpop.f32.mrb[0].mxu0
      %v3791 = vpop.f32.mrb[0].mxu0
      %v3792 = vadd.f32 %v3695, %v3791
      %v3793 = vpop.f32.mrb[0].mxu0
      %3794 = vmatprep.mubr.bf16.mxu0 0
      %3795 = vmatmul.mubr.bf16.gmra.mrb[0].mxu0 %v3046
      %v3796 = vpop.f32.mrb[0].mxu0
      %v3797 = vadd.f32 %v3700, %v3796
      %v3798 = vpop.f32.mrb[0].mxu0
      %v3799 = vpop.f32.mrb[0].mxu0
      %v3800 = vadd.f32 %v3703, %v3799
      %v3801 = vpop.f32.mrb[0].mxu0
      %3802 = vmatprep.mubr.bf16.mxu0 0
      %3803 = vmatmul.mubr.bf16.gmra.mrb[0].mxu0 %v3049
      %v3804 = vpop.f32.mrb[0].mxu0
      %v3805 = vadd.f32 %v3708, %v3804
      %v3806 = vpop.f32.mrb[0].mxu0
      %v3807 = vpop.f32.mrb[0].mxu0
      %v3808 = vadd.f32 %v3711, %v3807
      %v3809 = vpop.f32.mrb[0].mxu0
      %3810 = vmatprep.mubr.bf16.mxu0 0
      %3811 = vmatmul.mubr.bf16.gmra.mrb[0].mxu0 %v3052
      %v3812 = vpop.f32.mrb[0].mxu0
      %v3813 = vadd.f32 %v3716, %v3812
      %v3814 = vpop.f32.mrb[0].mxu0
      %v3815 = vpop.f32.mrb[0].mxu0
      %v3816 = vadd.f32 %v3719, %v3815
      %v3817 = vpop.f32.mrb[0].mxu0
      %3818 = vmatprep.mubr.bf16.mxu0 0
      %3819 = vmatmul.mubr.bf16.gmra.mrb[0].mxu0 %v3055
      %v3820 = vpop.f32.mrb[0].mxu0
      %v3821 = vadd.f32 %v3724, %v3820
      %v3822 = vpop.f32.mrb[0].mxu0
      %v3823 = vpop.f32.mrb[0].mxu0
      %v3824 = vadd.f32 %v3727, %v3823
      %v3825 = vpop.f32.mrb[0].mxu0
      %3826 = vmatprep.mubr.bf16.mxu0 0
      %3827 = vmatmul.mubr.bf16.gmra.mrb[0].mxu0 %v3058
      %v3828 = vpop.f32.mrb[0].mxu0
      %v3829 = vadd.f32 %v3732, %v3828
      %v3830 = vpop.f32.mrb[0].mxu0
      %v3831 = vpop.f32.mrb[0].mxu0
      %v3832 = vadd.f32 %v3735, %v3831
      %v3833 = vpop.f32.mrb[0].mxu0
      %3834 = vdwg.mxu0
      %v3835 = vld [vmem:[#allocation3 + $0x30] sm:$0xff]
      %v3836 = vld [vmem:[#allocation3 + $0x38] sm:$0xff]
      %v3837 = vld [vmem:[#allocation3 + $0x40] sm:$0xff]
      %v3838 = vld [vmem:[#allocation3 + $0x48] sm:$0xff]
      %v3839 = vld [vmem:[#allocation3 + $0x50] sm:$0xff]
      %v3840 = vld [vmem:[#allocation3 + $0x58] sm:$0xff]
      %v3841 = vld [vmem:[#allocation3 + $0x60] sm:$0xff]
      %v3842 = vld [vmem:[#allocation3 + $0x68] sm:$0xff]
      %v3843 = vld [vmem:[#allocation3 + $0x70] sm:$0xff]
      %v3844 = vld [vmem:[#allocation3 + $0x78] sm:$0xff]
      %v3845 = vld [vmem:[#allocation3 + $0x80] sm:$0xff]
      %v3846 = vld [vmem:[#allocation3 + $0x88] sm:$0xff]
      %v3847 = vld [vmem:[#allocation3 + $0x90] sm:$0xff]
      %v3848 = vld [vmem:[#allocation3 + $0x98] sm:$0xff]
      %v3849 = vld [vmem:[#allocation3 + $0xa0] sm:$0xff]
      %v3850 = vld [vmem:[#allocation3 + $0xa8] sm:$0xff]
      %v3851 = vld [vmem:[#allocation3 + $0xb0] sm:$0xff]
      %v3852 = vld [vmem:[#allocation3 + $0xb8] sm:$0xff]
      %v3853 = vld [vmem:[#allocation3 + $0xc0] sm:$0xff]
      %v3854 = vld [vmem:[#allocation3 + $0xc8] sm:$0xff]
      %v3855 = vld [vmem:[#allocation3 + $0xd0] sm:$0xff]
      %v3856 = vld [vmem:[#allocation3 + $0xd8] sm:$0xff]
      %v3857 = vld [vmem:[#allocation3 + $0xe0] sm:$0xff]
      %v3858 = vld [vmem:[#allocation3 + $0xe8] sm:$0xff]
      %s3859 = scalar_lea.vmem %s5, 384
      %v3860 = vld [vmem:[%s3859] sm:$0xf]
      %v3861 = vld [vmem:[%s3859 + $0x4] sm:$0xf]
      %v3862 = vld [vmem:[%s3859 + $0x8] sm:$0xf]
      %v3863 = vld [vmem:[%s3859 + $0xc] sm:$0xf]
      %v3864 = vld [vmem:[%s3859 + $0x10] sm:$0xf]
      %v3865 = vld [vmem:[%s3859 + $0x14] sm:$0xf]
      %v3866 = vld [vmem:[%s3859 + $0x18] sm:$0xf]
      %v3867 = vld [vmem:[%s3859 + $0x1c] sm:$0xf]
      %v3868 = vld [vmem:[%s3859 + $0x20] sm:$0xf]
      %v3869 = vld [vmem:[%s3859 + $0x24] sm:$0xf]
      %v3870 = vld [vmem:[%s3859 + $0x28] sm:$0xf]
      %v3871 = vld [vmem:[%s3859 + $0x2c] sm:$0xf]
      %v3872 = vld [vmem:[%s3859 + $0x30] sm:$0xf]
      %v3873 = vld [vmem:[%s3859 + $0x34] sm:$0xf]
      %v3874 = vld [vmem:[%s3859 + $0x38] sm:$0xf]
      %v3875 = vld [vmem:[%s3859 + $0x3c] sm:$0xf]
      %v3876 = vld [vmem:[%s3859 + $0x40] sm:$0xf]
      %v3877 = vld [vmem:[%s3859 + $0x44] sm:$0xf]
      %v3878 = vld [vmem:[%s3859 + $0x48] sm:$0xf]
      %v3879 = vld [vmem:[%s3859 + $0x4c] sm:$0xf]
      %v3880 = vld [vmem:[%s3859 + $0x50] sm:$0xf]
      %v3881 = vld [vmem:[%s3859 + $0x54] sm:$0xf]
      %v3882 = vld [vmem:[%s3859 + $0x58] sm:$0xf]
      %v3883 = vld [vmem:[%s3859 + $0x5c] sm:$0xf]
      %v3884 = vld [vmem:[%s3859 + $0x60] sm:$0xf]
      %v3885 = vld [vmem:[%s3859 + $0x64] sm:$0xf]
      %v3886 = vld [vmem:[%s3859 + $0x68] sm:$0xf]
      %v3887 = vld [vmem:[%s3859 + $0x6c] sm:$0xf]
      %v3888 = vld [vmem:[%s3859 + $0x70] sm:$0xf]
      %v3889 = vld [vmem:[%s3859 + $0x74] sm:$0xf]
      %v3890 = vld [vmem:[%s3859 + $0x78] sm:$0xf]
      %v3891 = vld [vmem:[%s3859 + $0x7c] sm:$0xf]
      %v3892 = vld [vmem:[%s3859 + $0x80] sm:$0xf]
      %v3893 = vld [vmem:[%s3859 + $0x84] sm:$0xf]
      %v3894 = vld [vmem:[%s3859 + $0x88] sm:$0xf]
      %v3895 = vld [vmem:[%s3859 + $0x8c] sm:$0xf]
      %v3896 = vld [vmem:[%s3859 + $0x90] sm:$0xf]
      %v3897 = vld [vmem:[%s3859 + $0x94] sm:$0xf]
      %v3898 = vld [vmem:[%s3859 + $0x98] sm:$0xf]
      %v3899 = vld [vmem:[%s3859 + $0x9c] sm:$0xf]
      %v3900 = vld [vmem:[%s3859 + $0xa0] sm:$0xf]
      %v3901 = vld [vmem:[%s3859 + $0xa4] sm:$0xf]
      %v3902 = vld [vmem:[%s3859 + $0xa8] sm:$0xf]
      %v3903 = vld [vmem:[%s3859 + $0xac] sm:$0xf]
      %v3904 = vld [vmem:[%s3859 + $0xb0] sm:$0xf]
      %v3905 = vld [vmem:[%s3859 + $0xb4] sm:$0xf]
      %v3906 = vld [vmem:[%s3859 + $0xb8] sm:$0xf]
      %v3907 = vld [vmem:[%s3859 + $0xbc] sm:$0xf]
      %v3956 = vunpack.c.l.b16 %v3860
      %v3957 = vunpack.c.l.b16 %v3861
      %v3958 = vunpack.c.l.b16 %v3862
      %v3959 = vunpack.c.l.b16 %v3863
      %v3960 = vunpack.c.l.b16 %v3864
      %v3961 = vunpack.c.l.b16 %v3865
      %v3962 = vunpack.c.l.b16 %v3866
      %v3963 = vunpack.c.l.b16 %v3867
      %v3964 = vunpack.c.l.b16 %v3868
      %v3965 = vunpack.c.l.b16 %v3869
      %v3966 = vunpack.c.l.b16 %v3870
      %v3967 = vunpack.c.l.b16 %v3871
      %v3968 = vunpack.c.l.b16 %v3872
      %v3969 = vunpack.c.l.b16 %v3873
      %v3970 = vunpack.c.l.b16 %v3874
      %v3971 = vunpack.c.l.b16 %v3875
      %v3972 = vunpack.c.l.b16 %v3876
      %v3973 = vunpack.c.l.b16 %v3877
      %v3974 = vunpack.c.l.b16 %v3878
      %v3975 = vunpack.c.l.b16 %v3879
      %v3976 = vunpack.c.l.b16 %v3880
      %v3977 = vunpack.c.l.b16 %v3881
      %v3978 = vunpack.c.l.b16 %v3882
      %v3979 = vunpack.c.l.b16 %v3883
      %v3980 = vunpack.c.l.b16 %v3884
      %v3981 = vunpack.c.l.b16 %v3885
      %v3982 = vunpack.c.l.b16 %v3886
      %v3983 = vunpack.c.l.b16 %v3887
      %v3984 = vunpack.c.l.b16 %v3888
      %v3985 = vunpack.c.l.b16 %v3889
      %v3986 = vunpack.c.l.b16 %v3890
      %v3987 = vunpack.c.l.b16 %v3891
      %v3988 = vunpack.c.l.b16 %v3892
      %v3989 = vunpack.c.l.b16 %v3893
      %v3990 = vunpack.c.l.b16 %v3894
      %v3991 = vunpack.c.l.b16 %v3895
      %v3992 = vunpack.c.l.b16 %v3896
      %v3993 = vunpack.c.l.b16 %v3897
      %v3994 = vunpack.c.l.b16 %v3898
      %v3995 = vunpack.c.l.b16 %v3899
      %v3996 = vunpack.c.l.b16 %v3900
      %v3997 = vunpack.c.l.b16 %v3901
      %v3998 = vunpack.c.l.b16 %v3902
      %v3999 = vunpack.c.l.b16 %v3903
      %v4000 = vunpack.c.l.b16 %v3904
      %v4001 = vunpack.c.l.b16 %v3905
      %v4002 = vunpack.c.l.b16 %v3906
      %v4003 = vunpack.c.l.b16 %v3907
      %v4004 = vpack.c.b16 %v3957, %v3956
      %v4005 = vpack.c.b16 %v3959, %v3958
      %v4006 = vpack.c.b16 %v3961, %v3960
      %v4007 = vpack.c.b16 %v3963, %v3962
      %v4008 = vpack.c.b16 %v3965, %v3964
      %v4009 = vpack.c.b16 %v3967, %v3966
      %v4010 = vpack.c.b16 %v3969, %v3968
      %v4011 = vpack.c.b16 %v3971, %v3970
      %v4012 = vpack.c.b16 %v3973, %v3972
      %v4013 = vpack.c.b16 %v3975, %v3974
      %v4014 = vpack.c.b16 %v3977, %v3976
      %v4015 = vpack.c.b16 %v3979, %v3978
      %v4016 = vpack.c.b16 %v3981, %v3980
      %v4017 = vpack.c.b16 %v3983, %v3982
      %v4018 = vpack.c.b16 %v3985, %v3984
      %v4019 = vpack.c.b16 %v3987, %v3986
      %v4020 = vpack.c.b16 %v3989, %v3988
      %v4021 = vpack.c.b16 %v3991, %v3990
      %v4022 = vpack.c.b16 %v3993, %v3992
      %v4023 = vpack.c.b16 %v3995, %v3994
      %v4024 = vpack.c.b16 %v3997, %v3996
      %v4025 = vpack.c.b16 %v3999, %v3998
      %v4026 = vpack.c.b16 %v4001, %v4000
      %v4027 = vpack.c.b16 %v4003, %v4002
      %4052 = vmatprep.subr.bf16.mxu0 0
      %4053 = vmatpush1.bf16.msra.mxu0 %v4004
      %4054 = vmatprep.subr.bf16.mxu0 0
      %4055 = vmatpush1.bf16.msra.mxu0 %v4005
      %4056 = vmatprep.subr.bf16.mxu0 0
      %4057 = vmatpush1.bf16.msra.mxu0 %v4006
      %4058 = vmatprep.subr.bf16.mxu0 0
      %4059 = vmatpush1.bf16.msra.mxu0 %v4007
      %4060 = vmatprep.subr.bf16.mxu0 0
      %4061 = vmatpush1.bf16.msra.mxu0 %v4008
      %4062 = vmatprep.subr.bf16.mxu0 0
      %4063 = vmatpush1.bf16.msra.mxu0 %v4009
      %4064 = vmatprep.subr.bf16.mxu0 0
      %4065 = vmatpush1.bf16.msra.mxu0 %v4010
      %4066 = vmatprep.subr.bf16.mxu0 0
      %4067 = vmatpush1.bf16.msra.mxu0 %v4011
      %4068 = vmatprep.subr.bf16.mxu0 0
      %4069 = vmatpush1.bf16.msra.mxu0 %v4012
      %4070 = vmatprep.subr.bf16.mxu0 0
      %4071 = vmatpush1.bf16.msra.mxu0 %v4013
      %4072 = vmatprep.subr.bf16.mxu0 0
      %4073 = vmatpush1.bf16.msra.mxu0 %v4014
      %4074 = vmatprep.subr.bf16.mxu0 0
      %4075 = vmatpush1.bf16.msra.mxu0 %v4015
      %4076 = vmatprep.subr.bf16.mxu0 0
      %4077 = vmatpush1.bf16.msra.mxu0 %v4016
      %4078 = vmatprep.subr.bf16.mxu0 0
      %4079 = vmatpush1.bf16.msra.mxu0 %v4017
      %4080 = vmatprep.subr.bf16.mxu0 0
      %4081 = vmatpush1.bf16.msra.mxu0 %v4018
      %4082 = vmatprep.subr.bf16.mxu0 0
      %4083 = vmatpush1.bf16.msra.mxu0 %v4019
      %4084 = vmatprep.mubr.bf16.mxu0 %v3836
      %4085 = vmatmul.mubr.bf16.gmra.mrb[0].mxu0 %v3835
      %v4086 = vpop.f32.mrb[0].mxu0
      %v4087 = vadd.f32 0.0, %v4086
      %v4088 = vpop.f32.mrb[0].mxu0
      %v4089 = vpop.f32.mrb[0].mxu0
      %v4090 = vadd.f32 0.0, %v4089
      %v4091 = vpop.f32.mrb[0].mxu0
      %4092 = vmatprep.mubr.bf16.mxu0 %v3839
      %4093 = vmatmul.mubr.bf16.gmra.mrb[0].mxu0 %v3838
      %v4094 = vpop.f32.mrb[0].mxu0
      %v4095 = vadd.f32 0.0, %v4094
      %v4096 = vpop.f32.mrb[0].mxu0
      %v4097 = vpop.f32.mrb[0].mxu0
      %v4098 = vadd.f32 0.0, %v4097
      %v4099 = vpop.f32.mrb[0].mxu0
      %4100 = vmatprep.mubr.bf16.mxu0 %v3842
      %4101 = vmatmul.mubr.bf16.gmra.mrb[0].mxu0 %v3841
      %v4102 = vpop.f32.mrb[0].mxu0
      %v4103 = vadd.f32 0.0, %v4102
      %v4104 = vpop.f32.mrb[0].mxu0
      %v4105 = vpop.f32.mrb[0].mxu0
      %v4106 = vadd.f32 0.0, %v4105
      %v4107 = vpop.f32.mrb[0].mxu0
      %4108 = vmatprep.mubr.bf16.mxu0 %v3845
      %4109 = vmatmul.mubr.bf16.gmra.mrb[0].mxu0 %v3844
      %v4110 = vpop.f32.mrb[0].mxu0
      %v4111 = vadd.f32 0.0, %v4110
      %v4112 = vpop.f32.mrb[0].mxu0
      %v4113 = vpop.f32.mrb[0].mxu0
      %v4114 = vadd.f32 0.0, %v4113
      %v4115 = vpop.f32.mrb[0].mxu0
      %4116 = vmatprep.mubr.bf16.mxu0 %v3848
      %4117 = vmatmul.mubr.bf16.gmra.mrb[0].mxu0 %v3847
      %v4118 = vpop.f32.mrb[0].mxu0
      %v4119 = vadd.f32 0.0, %v4118
      %v4120 = vpop.f32.mrb[0].mxu0
      %v4121 = vpop.f32.mrb[0].mxu0
      %v4122 = vadd.f32 0.0, %v4121
      %v4123 = vpop.f32.mrb[0].mxu0
      %4124 = vmatprep.mubr.bf16.mxu0 %v3851
      %4125 = vmatmul.mubr.bf16.gmra.mrb[0].mxu0 %v3850
      %v4126 = vpop.f32.mrb[0].mxu0
      %v4127 = vadd.f32 0.0, %v4126
      %v4128 = vpop.f32.mrb[0].mxu0
      %v4129 = vpop.f32.mrb[0].mxu0
      %v4130 = vadd.f32 0.0, %v4129
      %v4131 = vpop.f32.mrb[0].mxu0
      %4132 = vmatprep.mubr.bf16.mxu0 %v3854
      %4133 = vmatmul.mubr.bf16.gmra.mrb[0].mxu0 %v3853
      %v4134 = vpop.f32.mrb[0].mxu0
      %v4135 = vadd.f32 0.0, %v4134
      %v4136 = vpop.f32.mrb[0].mxu0
      %v4137 = vpop.f32.mrb[0].mxu0
      %v4138 = vadd.f32 0.0, %v4137
      %v4139 = vpop.f32.mrb[0].mxu0
      %4140 = vmatprep.mubr.bf16.mxu0 %v3857
      %4141 = vmatmul.mubr.bf16.gmra.mrb[0].mxu0 %v3856
      %v4142 = vpop.f32.mrb[0].mxu0
      %v4143 = vadd.f32 0.0, %v4142
      %v4144 = vpop.f32.mrb[0].mxu0
      %v4145 = vpop.f32.mrb[0].mxu0
      %v4146 = vadd.f32 0.0, %v4145
      %v4147 = vpop.f32.mrb[0].mxu0
      %4148 = vdwg.mxu0
      %4149 = vmatprep.subr.bf16.mxu0 0
      %4150 = vmatpush1.bf16.msra.mxu0 %v4020
      %4151 = vmatprep.subr.bf16.mxu0 0
      %4152 = vmatpush1.bf16.msra.mxu0 %v4021
      %4153 = vmatprep.subr.bf16.mxu0 0
      %4154 = vmatpush1.bf16.msra.mxu0 %v4022
      %4155 = vmatprep.subr.bf16.mxu0 0
      %4156 = vmatpush1.bf16.msra.mxu0 %v4023
      %4157 = vmatprep.subr.bf16.mxu0 0
      %4158 = vmatpush1.bf16.msra.mxu0 %v4024
      %4159 = vmatprep.subr.bf16.mxu0 0
      %4160 = vmatpush1.bf16.msra.mxu0 %v4025
      %4161 = vmatprep.subr.bf16.mxu0 0
      %4162 = vmatpush1.bf16.msra.mxu0 %v4026
      %4163 = vmatprep.subr.bf16.mxu0 0
      %4164 = vmatpush1.bf16.msra.mxu0 %v4027
      %4165 = vmatprep.subr.bf16.mxu0 0
      %4166 = vmatpush1.bf16.msra.mxu0 0
      %4167 = vmatprep.subr.bf16.mxu0 0
      %4168 = vmatpush1.bf16.msra.mxu0 0
      %4169 = vmatprep.subr.bf16.mxu0 0
      %4170 = vmatpush1.bf16.msra.mxu0 0
      %4171 = vmatprep.subr.bf16.mxu0 0
      %4172 = vmatpush1.bf16.msra.mxu0 0
      %4173 = vmatprep.subr.bf16.mxu0 0
      %4174 = vmatpush1.bf16.msra.mxu0 0
      %4175 = vmatprep.subr.bf16.mxu0 0
      %4176 = vmatpush1.bf16.msra.mxu0 0
      %4177 = vmatprep.subr.bf16.mxu0 0
      %4178 = vmatpush1.bf16.msra.mxu0 0
      %4179 = vmatprep.subr.bf16.mxu0 0
      %4180 = vmatpush1.bf16.msra.mxu0 0
      %4181 = vmatprep.mubr.bf16.mxu0 0
      %4182 = vmatmul.mubr.bf16.gmra.mrb[0].mxu0 %v3837
      %v4183 = vpop.f32.mrb[0].mxu0
      %v4184 = vadd.f32 %v4087, %v4183
      %v4185 = vpop.f32.mrb[0].mxu0
      %v4186 = vpop.f32.mrb[0].mxu0
      %v4187 = vadd.f32 %v4090, %v4186
      %v4188 = vpop.f32.mrb[0].mxu0
      %4189 = vmatprep.mubr.bf16.mxu0 0
      %4190 = vmatmul.mubr.bf16.gmra.mrb[0].mxu0 %v3840
      %v4191 = vpop.f32.mrb[0].mxu0
      %v4192 = vadd.f32 %v4095, %v4191
      %v4193 = vpop.f32.mrb[0].mxu0
      %v4194 = vpop.f32.mrb[0].mxu0
      %v4195 = vadd.f32 %v4098, %v4194
      %v4196 = vpop.f32.mrb[0].mxu0
      %4197 = vmatprep.mubr.bf16.mxu0 0
      %4198 = vmatmul.mubr.bf16.gmra.mrb[0].mxu0 %v3843
      %v4199 = vpop.f32.mrb[0].mxu0
      %v4200 = vadd.f32 %v4103, %v4199
      %v4201 = vpop.f32.mrb[0].mxu0
      %v4202 = vpop.f32.mrb[0].mxu0
      %v4203 = vadd.f32 %v4106, %v4202
      %v4204 = vpop.f32.mrb[0].mxu0
      %4205 = vmatprep.mubr.bf16.mxu0 0
      %4206 = vmatmul.mubr.bf16.gmra.mrb[0].mxu0 %v3846
      %v4207 = vpop.f32.mrb[0].mxu0
      %v4208 = vadd.f32 %v4111, %v4207
      %v4209 = vpop.f32.mrb[0].mxu0
      %v4210 = vpop.f32.mrb[0].mxu0
      %v4211 = vadd.f32 %v4114, %v4210
      %v4212 = vpop.f32.mrb[0].mxu0
      %4213 = vmatprep.mubr.bf16.mxu0 0
      %4214 = vmatmul.mubr.bf16.gmra.mrb[0].mxu0 %v3849
      %v4215 = vpop.f32.mrb[0].mxu0
      %v4216 = vadd.f32 %v4119, %v4215
      %v4217 = vpop.f32.mrb[0].mxu0
      %v4218 = vpop.f32.mrb[0].mxu0
      %v4219 = vadd.f32 %v4122, %v4218
      %v4220 = vpop.f32.mrb[0].mxu0
      %4221 = vmatprep.mubr.bf16.mxu0 0
      %4222 = vmatmul.mubr.bf16.gmra.mrb[0].mxu0 %v3852
      %v4223 = vpop.f32.mrb[0].mxu0
      %v4224 = vadd.f32 %v4127, %v4223
      %v4225 = vpop.f32.mrb[0].mxu0
      %v4226 = vpop.f32.mrb[0].mxu0
      %v4227 = vadd.f32 %v4130, %v4226
      %v4228 = vpop.f32.mrb[0].mxu0
      %4229 = vmatprep.mubr.bf16.mxu0 0
      %4230 = vmatmul.mubr.bf16.gmra.mrb[0].mxu0 %v3855
      %v4231 = vpop.f32.mrb[0].mxu0
      %v4232 = vadd.f32 %v4135, %v4231
      %v4233 = vpop.f32.mrb[0].mxu0
      %v4234 = vpop.f32.mrb[0].mxu0
      %v4235 = vadd.f32 %v4138, %v4234
      %v4236 = vpop.f32.mrb[0].mxu0
      %4237 = vmatprep.mubr.bf16.mxu0 0
      %4238 = vmatmul.mubr.bf16.gmra.mrb[0].mxu0 %v3858
      %v4239 = vpop.f32.mrb[0].mxu0
      %v4240 = vadd.f32 %v4143, %v4239
      %v4241 = vpop.f32.mrb[0].mxu0
      %v4242 = vpop.f32.mrb[0].mxu0
      %v4243 = vadd.f32 %v4146, %v4242
      %v4244 = vpop.f32.mrb[0].mxu0
      %4245 = vdwg.mxu0
      %v4246 = vadd.f32 %v3773, %v4184
      %v4247 = vadd.f32 %v3776, %v4187
      %v4248 = vadd.f32 %v3781, %v4192
      %v4249 = vadd.f32 %v3784, %v4195
      %v4250 = vadd.f32 %v3789, %v4200
      %v4251 = vadd.f32 %v3792, %v4203
      %v4252 = vadd.f32 %v3797, %v4208
      %v4253 = vadd.f32 %v3800, %v4211
      %v4254 = vadd.f32 %v3805, %v4216
      %v4255 = vadd.f32 %v3808, %v4219
      %v4256 = vadd.f32 %v3813, %v4224
      %v4257 = vadd.f32 %v3816, %v4227
      %v4258 = vadd.f32 %v3821, %v4232
      %v4259 = vadd.f32 %v3824, %v4235
      %v4260 = vadd.f32 %v3829, %v4240
      %v4261 = vadd.f32 %v3832, %v4243
      %v4262 = vld [vmem:[%s6] sm:$0x1]
      %v4264 = vlaneseq
      %v4265 = vshrl.u32 %v4264, 7
      %v4266 = vsub.s32 0, %v4265
      %v4267 = vrot.slane %v4262, %v4266
      %v4269 = vadd.f32 %v4246, %v4267
      %v4270 = vadd.f32 %v4247, %v4267
      %v4271 = vadd.f32 %v4248, %v4267
      %v4272 = vadd.f32 %v4249, %v4267
      %v4273 = vadd.f32 %v4250, %v4267
      %v4274 = vadd.f32 %v4251, %v4267
      %v4275 = vadd.f32 %v4252, %v4267
      %v4276 = vadd.f32 %v4253, %v4267
      %v4277 = vadd.f32 %v4254, %v4267
      %v4278 = vadd.f32 %v4255, %v4267
      %v4279 = vadd.f32 %v4256, %v4267
      %v4280 = vadd.f32 %v4257, %v4267
      %v4281 = vadd.f32 %v4258, %v4267
      %v4282 = vadd.f32 %v4259, %v4267
      %v4283 = vadd.f32 %v4260, %v4267
      %v4284 = vadd.f32 %v4261, %v4267
      %v4285 = vld [vmem:[%s406] sm:$0xf]
      %v4286 = vld [vmem:[%s406 + $0x4] sm:$0xf]
      %v4287 = vld [vmem:[%s406 + $0x8] sm:$0xf]
      %v4288 = vld [vmem:[%s406 + $0xc] sm:$0xf]
      %v4289 = vld [vmem:[%s406 + $0x10] sm:$0xf]
      %v4290 = vld [vmem:[%s406 + $0x14] sm:$0xf]
      %v4291 = vld [vmem:[%s406 + $0x18] sm:$0xf]
      %v4292 = vld [vmem:[%s406 + $0x1c] sm:$0xf]
      %v4293 = vld [vmem:[%s406 + $0x20] sm:$0xf]
      %v4294 = vld [vmem:[%s406 + $0x24] sm:$0xf]
      %v4295 = vld [vmem:[%s406 + $0x28] sm:$0xf]
      %v4296 = vld [vmem:[%s406 + $0x2c] sm:$0xf]
      %v4297 = vld [vmem:[%s406 + $0x30] sm:$0xf]
      %v4298 = vld [vmem:[%s406 + $0x34] sm:$0xf]
      %v4299 = vld [vmem:[%s406 + $0x38] sm:$0xf]
      %v4300 = vld [vmem:[%s406 + $0x3c] sm:$0xf]
      %v4301 = vunpack.c.l.bf16 %v4285
      %v4302 = vunpack.c.l.bf16 %v4286
      %v4303 = vunpack.c.l.bf16 %v4287
      %v4304 = vunpack.c.l.bf16 %v4288
      %v4305 = vunpack.c.l.bf16 %v4289
      %v4306 = vunpack.c.l.bf16 %v4290
      %v4307 = vunpack.c.l.bf16 %v4291
      %v4308 = vunpack.c.l.bf16 %v4292
      %v4309 = vunpack.c.l.bf16 %v4293
      %v4310 = vunpack.c.l.bf16 %v4294
      %v4311 = vunpack.c.l.bf16 %v4295
      %v4312 = vunpack.c.l.bf16 %v4296
      %v4313 = vunpack.c.l.bf16 %v4297
      %v4314 = vunpack.c.l.bf16 %v4298
      %v4315 = vunpack.c.l.bf16 %v4299
      %v4316 = vunpack.c.l.bf16 %v4300
      %v4317 = vadd.f32 %v4269, %v4301
      %v4318 = vadd.f32 %v4270, %v4302
      %v4319 = vadd.f32 %v4271, %v4303
      %v4320 = vadd.f32 %v4272, %v4304
      %v4321 = vadd.f32 %v4273, %v4305
      %v4322 = vadd.f32 %v4274, %v4306
      %v4323 = vadd.f32 %v4275, %v4307
      %v4324 = vadd.f32 %v4276, %v4308
      %v4325 = vadd.f32 %v4277, %v4309
      %v4326 = vadd.f32 %v4278, %v4310
      %v4327 = vadd.f32 %v4279, %v4311
      %v4328 = vadd.f32 %v4280, %v4312
      %v4329 = vadd.f32 %v4281, %v4313
      %v4330 = vadd.f32 %v4282, %v4314
      %v4331 = vadd.f32 %v4283, %v4315
      %v4332 = vadd.f32 %v4284, %v4316
      %v4333 = vpack.c.bf16 %v4318, %v4317
      %v4334 = vpack.c.bf16 %v4320, %v4319
      %v4335 = vpack.c.bf16 %v4322, %v4321
      %v4336 = vpack.c.bf16 %v4324, %v4323
      %v4337 = vpack.c.bf16 %v4326, %v4325
      %v4338 = vpack.c.bf16 %v4328, %v4327
      %v4339 = vpack.c.bf16 %v4330, %v4329
      %v4340 = vpack.c.bf16 %v4332, %v4331
      %v4349 = vunpack.c.l.b16 %v4333
      %v4350 = vunpack.c.h.b16 %v4333
      %v4351 = vunpack.c.l.b16 %v4334
      %v4352 = vunpack.c.h.b16 %v4334
      %v4353 = vunpack.c.l.b16 %v4335
      %v4354 = vunpack.c.h.b16 %v4335
      %v4355 = vunpack.c.l.b16 %v4336
      %v4356 = vunpack.c.h.b16 %v4336
      %v4357 = vunpack.c.l.b16 %v4337
      %v4358 = vunpack.c.h.b16 %v4337
      %v4359 = vunpack.c.l.b16 %v4338
      %v4360 = vunpack.c.h.b16 %v4338
      %v4361 = vunpack.c.l.b16 %v4339
      %v4362 = vunpack.c.h.b16 %v4339
      %v4363 = vunpack.c.l.b16 %v4340
      %v4364 = vunpack.c.h.b16 %v4340
      %v4365 = vpack.c.b16 %v4349, %v4349
      %v4366 = vpack.c.b16 %v4350, %v4350
      %v4367 = vpack.c.b16 %v4351, %v4351
      %v4368 = vpack.c.b16 %v4352, %v4352
      %v4369 = vpack.c.b16 %v4353, %v4353
      %v4370 = vpack.c.b16 %v4354, %v4354
      %v4371 = vpack.c.b16 %v4355, %v4355
      %v4372 = vpack.c.b16 %v4356, %v4356
      %v4373 = vpack.c.b16 %v4357, %v4357
      %v4374 = vpack.c.b16 %v4358, %v4358
      %v4375 = vpack.c.b16 %v4359, %v4359
      %v4376 = vpack.c.b16 %v4360, %v4360
      %v4377 = vpack.c.b16 %v4361, %v4361
      %v4378 = vpack.c.b16 %v4362, %v4362
      %v4379 = vpack.c.b16 %v4363, %v4363
      %v4380 = vpack.c.b16 %v4364, %v4364
      %4397 = vst [vmem:[%s455] sm:$0xf] %v4365
      %4398 = vst [vmem:[%s455 + $0x4] sm:$0xf] %v4366
      %4399 = vst [vmem:[%s455 + $0x8] sm:$0xf] %v4367
      %4400 = vst [vmem:[%s455 + $0xc] sm:$0xf] %v4368
      %4401 = vst [vmem:[%s455 + $0x10] sm:$0xf] %v4369
      %4402 = vst [vmem:[%s455 + $0x14] sm:$0xf] %v4370
      %4403 = vst [vmem:[%s455 + $0x18] sm:$0xf] %v4371
      %4404 = vst [vmem:[%s455 + $0x1c] sm:$0xf] %v4372
      %4405 = vst [vmem:[%s455 + $0x20] sm:$0xf] %v4373
      %4406 = vst [vmem:[%s455 + $0x24] sm:$0xf] %v4374
      %4407 = vst [vmem:[%s455 + $0x28] sm:$0xf] %v4375
      %4408 = vst [vmem:[%s455 + $0x2c] sm:$0xf] %v4376
      %4409 = vst [vmem:[%s455 + $0x30] sm:$0xf] %v4377
      %4410 = vst [vmem:[%s455 + $0x34] sm:$0xf] %v4378
      %4411 = vst [vmem:[%s455 + $0x38] sm:$0xf] %v4379
      %4412 = vst [vmem:[%s455 + $0x3c] sm:$0xf] %v4380
      %s4413 = smul.u32 8, %s23
      %p4414 = scmp.lt.s32.totalorder %s22, 1
      %s4415 = scalar_select %p4414, %s22, 1
      %p4416 = scmp.lt.s32.totalorder %s4413, 15
      %s4417 = scalar_select %p4416, %s4413, 15
      %s4418 = smul.addr %s4417, 2
      %s4419 = smul.addr %s4415, 32
      %s4420 = sadd.s32 %s4418, %s4419
      %s4421 = smul.addr %s4420, 4
      %s4422 = scalar_lea.vmem %s7, %s4421
      // Predicated region
      $region65: #{basic_block_forward.1} parent=47 // pred_check
        %p4423 = pneg %p234
      $region66: #{basic_block_forward.1} parent=47 // pred_check_branch
        %4425 = sbr.rel (%p4423) target = $region68
      $region67: #{basic_block_forward.1} parent=47 // pred_region
        %s4426 = smul.u32 8, %s23
      $region68: #{basic_block_forward.1} parent=47 // pred_fallthru
        _
    $region48: #{basic_block_forward.1} parent=5 // pred_fallthru
      _
    %p4427 = scmp.le.s32.totalorder 2, %s13
    // Predicated region
    $region69: #{basic_block_forward.1} parent=5 // pred_check
      %p4428 = pneg %p4427
    $region70: #{basic_block_forward.1} parent=5 // pred_check_branch
      %4430 = sbr.rel (%p4428) target = $region72
    $region71: #{basic_block_forward.1} parent=5 // pred_region
      %s4431 = ssub.s32 %s13, 2
      // Predicated region
      $region73: #{basic_block_forward.1} parent=71 // pred_check
        %p4432 = pneg %p240
      $region74: #{basic_block_forward.1} parent=71 // pred_check_branch
        %4434 = sbr.rel (%p4432) target = $region76
      $region75: #{basic_block_forward.1} parent=71 // pred_region
        %s4435 = smul.u32 8, %s25
        %p4436 = scmp.lt.s32.totalorder %s24, 1
        %s4437 = scalar_select %p4436, %s24, 1
        %p4438 = scmp.lt.s32.totalorder %s4435, 15
        %s4439 = scalar_select %p4438, %s4435, 15
        %s4440 = smul.addr %s4439, 2
        %s4441 = smul.addr %s4437, 32
        %s4442 = sadd.s32 %s4440, %s4441
        %s4443 = smul.addr %s4442, 4
        %s4444 = scalar_lea.vmem %s7, %s4443
      $region76: #{basic_block_forward.1} parent=71 // pred_fallthru
        _
    $region72: #{basic_block_forward.1} parent=5 // pred_fallthru
      _
  $region6: #{basic_block_forward.1} parent=0 // loop_footer
    %s17 = sadd.s32 1, %s13
  $region7: #{basic_block_forward.1} parent=0 // loop_footer_branch
    %12 = sbr.rel target = $region3
  $region8: #{basic_block_forward.1} parent=0 // loop_exit
    _

</llo_original>
